<compile_context>
chip_gen: v7x
topology: tpu7x:2x2x1
jax: 0.10.0
libtpu: 0.0.40
codegen_flags: <defaults>
</compile_context>

<pallas_src>
import functools
import math

import jax
import jax.numpy as jnp
from jax import lax
from jax.experimental import pallas as pl
from jax.experimental.pallas import tpu as pltpu

EPS = 1e-5          # nn.LayerNorm default
NEG_INF = -1e30


def _round_up(a, m):
    return (a + m - 1) // m * m


# Static capability probe: single-buffered grid-invariant weight blocks.
try:
    pl.BlockSpec((8, 128), lambda b, t: (0, 0), pipeline_mode=pl.Buffered(1))
    _HAS_BUFFERED = True
except Exception:                       # older jax without pipeline_mode
    _HAS_BUFFERED = False


def _vmem_capacity_bytes():
    """Best-effort per-core VMEM capacity; conservative default if unknown."""
    try:
        info = pltpu.get_tpu_info()
        for name in ("vmem_capacity_bytes", "vmem_bytes", "vmem_capacity"):
            v = getattr(info, name, None)
            if v:
                return int(v)
    except Exception:
        pass
    return 64 * 1024 * 1024             # v7x per-TensorCore VMEM (smallest gen)


# ----------------------------------------------------------------------------
# Kernel factory
# ----------------------------------------------------------------------------
def _make_kernel(TS, E, H, Sm_valid, mlp_chunk, hidden):
    D = E // H
    scale = 1.0 / math.sqrt(D)
    bf16, f32 = jnp.bfloat16, jnp.float32
    inv_sqrt2 = 1.0 / math.sqrt(2.0)

    def layer_norm(v, w_ref, b_ref):
        mu = jnp.mean(v, axis=-1, keepdims=True)
        c = v - mu
        var = jnp.mean(c * c, axis=-1, keepdims=True)
        return c * lax.rsqrt(var + EPS) * w_ref[...] + b_ref[...]

    def gelu_erf(z):
        # Exact-erf GELU; erf via Abramowitz & Stegun 7.1.26 (|err| <= 1.5e-7).
        a1, a2, a3, a4, a5 = (0.254829592, -0.284496736, 1.421413741,
                              -1.453152027, 1.061405429)
        p = 0.3275911
        u = z * inv_sqrt2
        au = jnp.abs(u)
        t = 1.0 / (1.0 + p * au)
        poly = ((((a5 * t + a4) * t + a3) * t + a2) * t + a1) * t
        erf_abs = 1.0 - poly * jnp.exp(-au * au)
        erf = jnp.where(u >= 0.0, erf_abs, -erf_abs)
        return 0.5 * z * (1.0 + erf)

    def attention(q_in, kv_ref, wq_ref, bq_ref, wo_ref, bo_ref, attn_sc, *,
                  causal, q_off, kv_valid):
        # q_in: (TS, E) f32 (already layer-normed).
        # kv_ref: (1, Sk, 2E) bf16 block of pre-projected, post-bias K|V.
        Sk = kv_ref.shape[1]
        q = jnp.dot(q_in.astype(bf16), wq_ref[...],
                    preferred_element_type=f32) + bq_ref[...]
        q = q * scale

        # masks built once per attention call (not per head)
        mask = None
        if causal:
            row = lax.broadcasted_iota(jnp.int32, (TS, Sk), 0) + q_off
            col = lax.broadcasted_iota(jnp.int32, (TS, Sk), 1)
            mask = col <= row
        if kv_valid is not None and kv_valid < Sk:
            col = lax.broadcasted_iota(jnp.int32, (TS, Sk), 1)
            km = col < kv_valid
            mask = km if mask is None else jnp.logical_and(mask, km)

        dn_qk = (((1,), (1,)), ((), ()))            # 'qd,kd->qk'
        for h in range(H):
            lo, hi = h * D, (h + 1) * D
            qh = q[:, lo:hi].astype(bf16)           # (TS, D)
            kh = kv_ref[0, :, lo:hi]                # (Sk, D) bf16
            vh = kv_ref[0, :, E + lo:E + hi]        # (Sk, D) bf16
            s = lax.dot_general(qh, kh, dn_qk, preferred_element_type=f32)
            if mask is not None:
                s = jnp.where(mask, s, NEG_INF)
            m = jnp.max(s, axis=-1, keepdims=True)
            p = jnp.exp(s - m)
            denom = jnp.sum(p, axis=-1, keepdims=True)
            p = p * pl.reciprocal(denom, approx=True)
            o = jnp.dot(p.astype(bf16), vh, preferred_element_type=f32)
            attn_sc[:, lo:hi] = o.astype(bf16)      # head merge: lane write
        return (jnp.dot(attn_sc[...], wo_ref[...],
                        preferred_element_type=f32) + bo_ref[...])

    def kernel(x_ref, sakv_ref, cakv_ref,
               ln1_w, ln1_b, sa_wq, sa_bq, sa_wo, sa_bo,
               ln2_w, ln2_b, ca_wq, ca_bq, ca_wo, ca_bo,
               ln3_w, ln3_b, w1, b1, w2, b2,
               out_ref, attn_sc):
        x = x_ref[0]                                # (TS, E) f32
        q_off = pl.program_id(1) * TS

        # --- causal self-attention (pre-norm); K/V hoisted per batch ---------
        h = layer_norm(x, ln1_w, ln1_b)
        x = x + attention(h, sakv_ref, sa_wq, sa_bq, sa_wo, sa_bo, attn_sc,
                          causal=True, q_off=q_off, kv_valid=None)

        # --- cross-attention (pre-norm); K/V hoisted from `memory` -----------
        h = layer_norm(x, ln2_w, ln2_b)
        x = x + attention(h, cakv_ref, ca_wq, ca_bq, ca_wo, ca_bo, attn_sc,
                          causal=False, q_off=0, kv_valid=Sm_valid)

        # --- MLP (pre-norm) ---------------------------------------------------
        h = layer_norm(x, ln3_w, ln3_b).astype(bf16)
        if mlp_chunk == hidden:
            z = gelu_erf(jnp.dot(h, w1[...], preferred_element_type=f32)
                         + b1[...])
            y = jnp.dot(z.astype(bf16), w2[...], preferred_element_type=f32)
        else:
            # TODO(synk): convert to lax.fori_loop(unroll=True) + VMEM scratch
            # accumulator if the hidden dim ever requires many chunks.
            y = jnp.zeros((TS, E), f32)
            for c in range(hidden // mlp_chunk):
                lo, hi = c * mlp_chunk, (c + 1) * mlp_chunk
                z = gelu_erf(jnp.dot(h, w1[:, lo:hi],
                                     preferred_element_type=f32) + b1[:, lo:hi])
                y = y + jnp.dot(z.astype(bf16), w2[lo:hi, :],
                                preferred_element_type=f32)
        out_ref[0] = x + y + b2[...]

    return kernel


# ----------------------------------------------------------------------------
# Jitted implementation (weight prep + hoisted K/V + pallas_call)
# ----------------------------------------------------------------------------
def _ln_full(v, w, b):
    mu = jnp.mean(v, axis=-1, keepdims=True)
    var = jnp.mean((v - mu) ** 2, axis=-1, keepdims=True)
    return (v - mu) * lax.rsqrt(var + EPS) * w + b


@functools.partial(jax.jit, static_argnames=(
    "num_heads", "TS", "S_pad", "Sm_pad", "S_valid", "Sm_valid", "vmem_limit"))
def _decoder_block_impl(x, memory, params, *, num_heads, TS, S_pad, Sm_pad,
                        S_valid, Sm_valid, vmem_limit):
    f32, bf16 = jnp.float32, jnp.bfloat16
    B, _, E = x.shape
    H = num_heads

    (ln1_w, ln1_b, sa_inw, sa_inb, sa_ow, sa_ob,
     ln2_w, ln2_b, ca_inw, ca_inb, ca_ow, ca_ob,
     ln3_w, ln3_b, w1, b1, w2, b2) = params

    def vec2d(p):
        p = jnp.asarray(p, f32)
        return p.reshape(1, -1) if p.ndim == 1 else p

    def wT(p):          # pre-transposed bf16: kernel matmuls never transpose
        return jnp.asarray(p, f32).T.astype(bf16)

    ln1_w, ln1_b = vec2d(ln1_w), vec2d(ln1_b)
    ln2_w, ln2_b = vec2d(ln2_w), vec2d(ln2_b)
    ln3_w, ln3_b = vec2d(ln3_w), vec2d(ln3_b)

    sa_inw = jnp.asarray(sa_inw, f32)
    ca_inw = jnp.asarray(ca_inw, f32)
    sa_inb = vec2d(sa_inb)
    ca_inb = vec2d(ca_inb)

    sa_wq, sa_bq = sa_inw[0:E, :].T.astype(bf16), sa_inb[:, 0:E]
    ca_wq, ca_bq = ca_inw[0:E, :].T.astype(bf16), ca_inb[:, 0:E]
    sa_wkv, sa_bkv = sa_inw[E:3 * E, :].T.astype(bf16), sa_inb[:, E:3 * E]
    ca_wkv, ca_bkv = ca_inw[E:3 * E, :].T.astype(bf16), ca_inb[:, E:3 * E]

    sa_wo, sa_bo = wT(sa_ow), vec2d(sa_ob)
    ca_wo, ca_bo = wT(ca_ow), vec2d(ca_ob)
    w1_t, b1_2d = wT(w1), vec2d(b1)
    w2_t, b2_2d = wT(w2), vec2d(b2)
    hidden = w1_t.shape[-1]                         # 4E

    # ---- pad sequences ------------------------------------------------------
    x_p = jnp.asarray(x, f32)
    if S_pad != S_valid:
        x_p = jnp.pad(x_p, ((0, 0), (0, S_pad - S_valid), (0, 0)))
    mem_p = jnp.asarray(memory, f32)
    if Sm_pad != Sm_valid:
        mem_p = jnp.pad(mem_p, ((0, 0), (0, Sm_pad - Sm_valid), (0, 0)))

    # ---- hoisted per-batch K/V (computed ONCE, not once per query tile) -----
    h1 = _ln_full(x_p, ln1_w, ln1_b)
    sa_kv = (jnp.einsum("bse,ef->bsf", h1.astype(bf16), sa_wkv,
                        preferred_element_type=f32) + sa_bkv).astype(bf16)
    ca_kv = (jnp.einsum("bse,ef->bsf", mem_p.astype(bf16), ca_wkv,
                        preferred_element_type=f32) + ca_bkv).astype(bf16)

    # ---- MLP chunking only if the (TS, 4E) f32 intermediate is large --------
    if TS * hidden * 4 <= 8 * 1024 * 1024 or hidden % 2048 != 0:
        mlp_chunk = hidden
    else:
        mlp_chunk = 2048

    kparams = (ln1_w, ln1_b, sa_wq, sa_bq, sa_wo, sa_bo,
               ln2_w, ln2_b, ca_wq, ca_bq, ca_wo, ca_bo,
               ln3_w, ln3_b, w1_t, b1_2d, w2_t, b2_2d)

    kernel = _make_kernel(TS, E, H, Sm_valid, mlp_chunk, hidden)

    def param_spec(p):
        nd = p.ndim
        idx = lambda b, t, _n=nd: (0,) * _n          # grid-invariant
        if _HAS_BUFFERED:
            return pl.BlockSpec(p.shape, idx, pipeline_mode=pl.Buffered(1))
        return pl.BlockSpec(p.shape, idx)

    in_specs = [
        pl.BlockSpec((1, TS, E), lambda b, t: (b, t, 0)),          # x tile
        pl.BlockSpec((1, S_pad, 2 * E), lambda b, t: (b, 0, 0)),   # self K|V
        pl.BlockSpec((1, Sm_pad, 2 * E), lambda b, t: (b, 0, 0)),  # cross K|V
    ] + [param_spec(p) for p in kparams]

    out = pl.pallas_call(
        kernel,
        out_shape=jax.ShapeDtypeStruct((B, S_pad, E), f32),
        grid=(B, S_pad // TS),
        in_specs=in_specs,
        out_specs=pl.BlockSpec((1, TS, E), lambda b, t: (b, t, 0)),
        scratch_shapes=[pltpu.VMEM((TS, E), bf16)],
        compiler_params=pltpu.CompilerParams(
            dimension_semantics=("parallel", "parallel"),
            vmem_limit_bytes=vmem_limit),
    )(x_p, sa_kv, ca_kv, *kparams)
    return out[:, :S_valid, :]


# ----------------------------------------------------------------------------
# Public wrapper (generation-aware tiling / VMEM budget, then jitted impl)
# ----------------------------------------------------------------------------
def decoder_block(x, memory, params, num_heads):
    B, S, E = x.shape
    Bm, Sm, Em = memory.shape
    assert Bm == B and Em == E
    assert E % num_heads == 0, "embed_dim must be divisible by num_heads"
    # head_dim that is a multiple of 128 keeps all head slices lane aligned;
    # smaller head_dim is still correct but relayouts inside the kernel.

    vmem_cap = _vmem_capacity_bytes()
    if S <= 128:
        TS = _round_up(S, 16)
    elif vmem_cap >= 100 * 1024 * 1024:
        TS = 256            # v5e / v6e: 128 MiB VMEM -> bigger query tiles
    else:
        TS = 128            # v7x: 64 MiB per-TensorCore VMEM
    S_pad = _round_up(S, TS)
    Sm_pad = _round_up(Sm, 16)
    vmem_limit = min(int(vmem_cap * 0.65), 100 * 1024 * 1024)

    return _decoder_block_impl(
        x, memory, params, num_heads=num_heads, TS=TS, S_pad=S_pad,
        Sm_pad=Sm_pad, S_valid=S, Sm_valid=Sm, vmem_limit=vmem_limit)


# ----------------------------------------------------------------------------
# Pure-JAX f32 reference (same math, no Pallas) for the correctness check.
# ----------------------------------------------------------------------------
def reference(x, memory, params, num_heads):
    (ln1_w, ln1_b, sa_inw, sa_inb, sa_ow, sa_ob,
     ln2_w, ln2_b, ca_inw, ca_inb, ca_ow, ca_ob,
     ln3_w, ln3_b, w1, b1, w2, b2) = params
    E = x.shape[-1]
    H = num_heads
    D = E // H

    def ln(v, w, b):
        mu = v.mean(-1, keepdims=True)
        var = ((v - mu) ** 2).mean(-1, keepdims=True)
        return (v - mu) / jnp.sqrt(var + EPS) * w + b

    def mha(q_in, kv_in, inw, inb, ow, ob, causal):
        q = q_in @ inw[0:E].T + inb[:, 0:E]
        k = kv_in @ inw[E:2 * E].T + inb[:, E:2 * E]
        v = kv_in @ inw[2 * E:].T + inb[:, 2 * E:]
        Sq, Sk = q.shape[0], k.shape[0]
        qh = q.reshape(Sq, H, D).transpose(1, 0, 2) / math.sqrt(D)
        kh = k.reshape(Sk, H, D).transpose(1, 0, 2)
        vh = v.reshape(Sk, H, D).transpose(1, 0, 2)
        s = jnp.einsum("hqd,hkd->hqk", qh, kh)
        if causal:
            msk = jnp.tril(jnp.ones((Sq, Sk), bool))
            s = jnp.where(msk[None], s, NEG_INF)
        p = jax.nn.softmax(s, axis=-1)
        o = jnp.einsum("hqk,hkd->hqd", p, vh).transpose(1, 0, 2).reshape(Sq, E)
        return o @ ow.T + ob

    def one(xb, mb):
        xb = xb + mha(ln(xb, ln1_w, ln1_b), ln(xb, ln1_w, ln1_b),
                      sa_inw, sa_inb, sa_ow, sa_ob, True)
        xb = xb + mha(ln(xb, ln2_w, ln2_b), mb,
                      ca_inw, ca_inb, ca_ow, ca_ob, False)
        h = ln(xb, ln3_w, ln3_b)
        return xb + jax.nn.gelu(h @ w1.T + b1, approximate=False) @ w2.T + b2

    return jax.vmap(one)(x, memory)


# ----------------------------------------------------------------------------
if __name__ == "__main__":
    B, S, Sm, E, H = 2, 16, 12, 256, 2     # D = 128 per head (lane aligned)

    key = jax.random.PRNGKey(0)
    ks = jax.random.split(key, 24)

    def w(k, shape, scale=0.05):
        return (jax.random.normal(k, shape) * scale).astype(jnp.float32)

    def ln_pair(kw, kb):
        return ((1.0 + 0.1 * jax.random.normal(kw, (1, E))).astype(jnp.float32),
                (0.05 * jax.random.normal(kb, (1, E))).astype(jnp.float32))

    ln1 = ln_pair(ks[16], ks[17])
    ln2 = ln_pair(ks[18], ks[19])
    ln3 = ln_pair(ks[20], ks[21])

    params = (
        ln1[0], ln1[1],                                               # norm1
        w(ks[0], (3 * E, E)), w(ks[1], (1, 3 * E)),                   # self in_proj
        w(ks[2], (E, E)), w(ks[3], (1, E)),                           # self out_proj
        ln2[0], ln2[1],                                               # norm2
        w(ks[4], (3 * E, E)), w(ks[5], (1, 3 * E)),                   # cross in_proj
        w(ks[6], (E, E)), w(ks[7], (1, E)),                           # cross out_proj
        ln3[0], ln3[1],                                               # norm3
        w(ks[8], (4 * E, E)), w(ks[9], (1, 4 * E)),                   # mlp fc1
        w(ks[10], (E, 4 * E)), w(ks[11], (1, E)),                     # mlp fc2
    )

    def check(xa, ma, tag):
        out = jax.block_until_ready(decoder_block(xa, ma, params, H))
        ref = reference(xa, ma, params, H)
        assert out.shape == xa.shape
        max_err = float(jnp.max(jnp.abs(out - ref)))
        rel_err = float(jnp.linalg.norm(out - ref) / jnp.linalg.norm(ref))
        # bf16 matmul inputs (f32 accumulation) + approx reciprocal softmax
        # => looser tolerance than a pure-f32 comparison.
        assert max_err < 0.2 and rel_err < 0.03, \
            f"{tag}: max_err={max_err:.4e} rel_err={rel_err:.4e}"

    # small config: single query tile; cross-attn KV padded 12 -> 16 (masked)
    x = jax.random.normal(ks[12], (B, S, E), jnp.float32)
    memory = jax.random.normal(ks[13], (B, Sm, E), jnp.float32)
    check(x, memory, "single-tile")

    # longer config: exercises the query-tiled path on every TPU generation
    # (S=260 -> 2 tiles of 256 on v5e/v6e, 3 tiles of 128 on v7x)
    S2 = 260
    x2 = jax.random.normal(ks[14], (B, S2, E), jnp.float32)
    mem2 = jax.random.normal(ks[15], (B, Sm, E), jnp.float32)
    check(x2, mem2, "query-tiled")

    print("KERNEL_OK")
</pallas_src>

<mosaic_0001>
module attributes {stable_mosaic.version = 11 : i64} {
  func.func @kernel(%arg0: i32, %arg1: i32, %arg2: memref<1x16x256xf32, #tpu.memory_space<vmem>>, %arg3: memref<1x16x512xbf16, #tpu.memory_space<vmem>>, %arg4: memref<1x16x512xbf16, #tpu.memory_space<vmem>>, %arg5: memref<1x256xf32, #tpu.memory_space<vmem>>, %arg6: memref<1x256xf32, #tpu.memory_space<vmem>>, %arg7: memref<256x256xbf16, #tpu.memory_space<vmem>>, %arg8: memref<1x256xf32, #tpu.memory_space<vmem>>, %arg9: memref<256x256xbf16, #tpu.memory_space<vmem>>, %arg10: memref<1x256xf32, #tpu.memory_space<vmem>>, %arg11: memref<1x256xf32, #tpu.memory_space<vmem>>, %arg12: memref<1x256xf32, #tpu.memory_space<vmem>>, %arg13: memref<256x256xbf16, #tpu.memory_space<vmem>>, %arg14: memref<1x256xf32, #tpu.memory_space<vmem>>, %arg15: memref<256x256xbf16, #tpu.memory_space<vmem>>, %arg16: memref<1x256xf32, #tpu.memory_space<vmem>>, %arg17: memref<1x256xf32, #tpu.memory_space<vmem>>, %arg18: memref<1x256xf32, #tpu.memory_space<vmem>>, %arg19: memref<256x1024xbf16, #tpu.memory_space<vmem>>, %arg20: memref<1x1024xf32, #tpu.memory_space<vmem>>, %arg21: memref<1024x256xbf16, #tpu.memory_space<vmem>>, %arg22: memref<1x256xf32, #tpu.memory_space<vmem>>, %arg23: memref<1x16x256xf32, #tpu.memory_space<vmem>>, %arg24: memref<16x256xbf16, #tpu.memory_space<vmem>>) attributes {dimension_semantics = [#tpu.dimension_semantics<parallel>, #tpu.dimension_semantics<parallel>], iteration_bounds = array<i64: 2, 1>, scalar_prefetch = 0 : i64, scratch_operands = 1 : i64, tpu.core_type = #tpu.core_type<tc>, window_params = [{transform_indices = @transform_0, window_bounds = array<i64: 1, 16, 256>}, {transform_indices = @transform_1, window_bounds = array<i64: 1, 16, 512>}, {transform_indices = @transform_2, window_bounds = array<i64: 1, 16, 512>}, {pipeline_mode = #tpu.pipeline_mode<synchronous>, transform_indices = @transform_3, window_bounds = array<i64: 1, 256>}, {pipeline_mode = #tpu.pipeline_mode<synchronous>, transform_indices = @transform_4, window_bounds = array<i64: 1, 256>}, {pipeline_mode = #tpu.pipeline_mode<synchronous>, transform_indices = @transform_5, window_bounds = array<i64: 256, 256>}, {pipeline_mode = #tpu.pipeline_mode<synchronous>, transform_indices = @transform_6, window_bounds = array<i64: 1, 256>}, {pipeline_mode = #tpu.pipeline_mode<synchronous>, transform_indices = @transform_7, window_bounds = array<i64: 256, 256>}, {pipeline_mode = #tpu.pipeline_mode<synchronous>, transform_indices = @transform_8, window_bounds = array<i64: 1, 256>}, {pipeline_mode = #tpu.pipeline_mode<synchronous>, transform_indices = @transform_9, window_bounds = array<i64: 1, 256>}, {pipeline_mode = #tpu.pipeline_mode<synchronous>, transform_indices = @transform_10, window_bounds = array<i64: 1, 256>}, {pipeline_mode = #tpu.pipeline_mode<synchronous>, transform_indices = @transform_11, window_bounds = array<i64: 256, 256>}, {pipeline_mode = #tpu.pipeline_mode<synchronous>, transform_indices = @transform_12, window_bounds = array<i64: 1, 256>}, {pipeline_mode = #tpu.pipeline_mode<synchronous>, transform_indices = @transform_13, window_bounds = array<i64: 256, 256>}, {pipeline_mode = #tpu.pipeline_mode<synchronous>, transform_indices = @transform_14, window_bounds = array<i64: 1, 256>}, {pipeline_mode = #tpu.pipeline_mode<synchronous>, transform_indices = @transform_15, window_bounds = array<i64: 1, 256>}, {pipeline_mode = #tpu.pipeline_mode<synchronous>, transform_indices = @transform_16, window_bounds = array<i64: 1, 256>}, {pipeline_mode = #tpu.pipeline_mode<synchronous>, transform_indices = @transform_17, window_bounds = array<i64: 256, 1024>}, {pipeline_mode = #tpu.pipeline_mode<synchronous>, transform_indices = @transform_18, window_bounds = array<i64: 1, 1024>}, {pipeline_mode = #tpu.pipeline_mode<synchronous>, transform_indices = @transform_19, window_bounds = array<i64: 1024, 256>}, {pipeline_mode = #tpu.pipeline_mode<synchronous>, transform_indices = @transform_20, window_bounds = array<i64: 1, 256>}, {transform_indices = @transform_21, window_bounds = array<i64: 1, 16, 256>}]} {
    %c0 = arith.constant 0 : index
    %c0_0 = arith.constant 0 : index
    %c0_1 = arith.constant 0 : index
    %0 = vector.load %arg2[%c0, %c0_0, %c0_1] : memref<1x16x256xf32, #tpu.memory_space<vmem>>, vector<1x16x256xf32>
    %1 = vector.shape_cast %0 : vector<1x16x256xf32> to vector<16x256xf32>
    %c16_i32 = arith.constant 16 : i32
    %2 = arith.muli %arg1, %c16_i32 : i32
    %cst = arith.constant dense<0.000000e+00> : vector<16xf32>
    %3 = vector.multi_reduction <add>, %1, %cst [1] : vector<16x256xf32> to vector<16xf32>
    %4 = vector.shape_cast %3 : vector<16xf32> to vector<16x1xf32>
    %cst_2 = arith.constant 2.560000e+02 : f32
    %5 = vector.broadcast %cst_2 : f32 to vector<16x1xf32>
    %6 = arith.divf %4, %5 : vector<16x1xf32>
    %7 = vector.broadcast %6 : vector<16x1xf32> to vector<16x256xf32>
    %8 = arith.subf %1, %7 : vector<16x256xf32>
    %9 = arith.mulf %8, %8 : vector<16x256xf32>
    %cst_3 = arith.constant dense<0.000000e+00> : vector<16xf32>
    %10 = vector.multi_reduction <add>, %9, %cst_3 [1] : vector<16x256xf32> to vector<16xf32>
    %11 = vector.shape_cast %10 : vector<16xf32> to vector<16x1xf32>
    %cst_4 = arith.constant 2.560000e+02 : f32
    %12 = vector.broadcast %cst_4 : f32 to vector<16x1xf32>
    %13 = arith.divf %11, %12 : vector<16x1xf32>
    %cst_5 = arith.constant 9.99999974E-6 : f32
    %14 = vector.broadcast %cst_5 : f32 to vector<16x1xf32>
    %15 = arith.addf %13, %14 : vector<16x1xf32>
    %16 = math.rsqrt %15 : vector<16x1xf32>
    %17 = vector.broadcast %16 : vector<16x1xf32> to vector<16x256xf32>
    %18 = arith.mulf %8, %17 : vector<16x256xf32>
    %c0_6 = arith.constant 0 : index
    %c0_7 = arith.constant 0 : index
    %19 = vector.load %arg5[%c0_6, %c0_7] : memref<1x256xf32, #tpu.memory_space<vmem>>, vector<1x256xf32>
    %20 = vector.broadcast %19 : vector<1x256xf32> to vector<16x256xf32>
    %21 = arith.mulf %18, %20 : vector<16x256xf32>
    %c0_8 = arith.constant 0 : index
    %c0_9 = arith.constant 0 : index
    %22 = vector.load %arg6[%c0_8, %c0_9] : memref<1x256xf32, #tpu.memory_space<vmem>>, vector<1x256xf32>
    %23 = vector.broadcast %22 : vector<1x256xf32> to vector<16x256xf32>
    %24 = arith.addf %21, %23 : vector<16x256xf32>
    %25 = arith.truncf %24 : vector<16x256xf32> to vector<16x256xbf16>
    %c0_10 = arith.constant 0 : index
    %c0_11 = arith.constant 0 : index
    %26 = vector.load %arg7[%c0_10, %c0_11] : memref<256x256xbf16, #tpu.memory_space<vmem>>, vector<256x256xbf16>
    %cst_12 = arith.constant dense<0.000000e+00> : vector<16x256xf32>
    %27 = tpu.matmul %25, %26, %cst_12 {dimension_numbers = #tpu.dot_dimension_numbers<[1], [0], [0], [1], [0, 0, 1, 1], [], []>} : vector<16x256xbf16>, vector<256x256xbf16>, vector<16x256xf32> -> vector<16x256xf32>
    %c0_13 = arith.constant 0 : index
    %c0_14 = arith.constant 0 : index
    %28 = vector.load %arg8[%c0_13, %c0_14] : memref<1x256xf32, #tpu.memory_space<vmem>>, vector<1x256xf32>
    %29 = vector.broadcast %28 : vector<1x256xf32> to vector<16x256xf32>
    %30 = arith.addf %27, %29 : vector<16x256xf32>
    %cst_15 = arith.constant 0.0883883461 : f32
    %31 = vector.broadcast %cst_15 : f32 to vector<16x256xf32>
    %32 = arith.mulf %30, %31 : vector<16x256xf32>
    %33 = tpu.iota {dimensions = array<i32: 0>} : vector<16x16xi32>
    %34 = vector.broadcast %2 : i32 to vector<16x16xi32>
    %35 = arith.addi %33, %34 : vector<16x16xi32>
    %36 = tpu.iota {dimensions = array<i32: 1>} : vector<16x16xi32>
    %37 = arith.cmpi sle, %36, %35 : vector<16x16xi32>
    %38 = vector.extract_strided_slice %32 {offsets = [0, 0], sizes = [16, 128], strides = [1, 1]} : vector<16x256xf32> to vector<16x128xf32>
    %39 = arith.truncf %38 : vector<16x128xf32> to vector<16x128xbf16>
    %c0_16 = arith.constant 0 : index
    %c0_17 = arith.constant 0 : index
    %c0_18 = arith.constant 0 : index
    %40 = vector.load %arg3[%c0_16, %c0_17, %c0_18] : memref<1x16x512xbf16, #tpu.memory_space<vmem>>, vector<1x16x128xbf16>
    %41 = vector.shape_cast %40 : vector<1x16x128xbf16> to vector<16x128xbf16>
    %c0_19 = arith.constant 0 : index
    %c0_20 = arith.constant 0 : index
    %c256 = arith.constant 256 : index
    %42 = vector.load %arg3[%c0_19, %c0_20, %c256] : memref<1x16x512xbf16, #tpu.memory_space<vmem>>, vector<1x16x128xbf16>
    %43 = vector.shape_cast %42 : vector<1x16x128xbf16> to vector<16x128xbf16>
    %cst_21 = arith.constant dense<0.000000e+00> : vector<16x16xf32>
    %44 = tpu.matmul %39, %41, %cst_21 {dimension_numbers = #tpu.dot_dimension_numbers<[1], [1], [0], [0], [0, 0, 1, 0], [], []>} : vector<16x128xbf16>, vector<16x128xbf16>, vector<16x16xf32> -> vector<16x16xf32>
    %cst_22 = arith.constant -1.000000e+30 : f32
    %45 = vector.broadcast %cst_22 : f32 to vector<16x16xf32>
    %46 = arith.select %37, %44, %45 : vector<16x16xi1>, vector<16x16xf32>
    %cst_23 = arith.constant dense<0xFF800000> : vector<16xf32>
    %47 = vector.multi_reduction <maximumf>, %46, %cst_23 [1] : vector<16x16xf32> to vector<16xf32>
    %48 = vector.shape_cast %47 : vector<16xf32> to vector<16x1xf32>
    %49 = vector.broadcast %48 : vector<16x1xf32> to vector<16x16xf32>
    %50 = arith.subf %46, %49 : vector<16x16xf32>
    %51 = math.exp %50 : vector<16x16xf32>
    %cst_24 = arith.constant dense<0.000000e+00> : vector<16xf32>
    %52 = vector.multi_reduction <add>, %51, %cst_24 [1] : vector<16x16xf32> to vector<16xf32>
    %53 = vector.shape_cast %52 : vector<16xf32> to vector<16x1xf32>
    %54 = tpu.reciprocal %53 {approx = true} : vector<16x1xf32> -> vector<16x1xf32>
    %55 = vector.broadcast %54 : vector<16x1xf32> to vector<16x16xf32>
    %56 = arith.mulf %51, %55 : vector<16x16xf32>
    %57 = arith.truncf %56 : vector<16x16xf32> to vector<16x16xbf16>
    %cst_25 = arith.constant dense<0.000000e+00> : vector<16x128xf32>
    %58 = tpu.matmul %57, %43, %cst_25 {dimension_numbers = #tpu.dot_dimension_numbers<[1], [0], [0], [1], [0, 0, 1, 1], [], []>} : vector<16x16xbf16>, vector<16x128xbf16>, vector<16x128xf32> -> vector<16x128xf32>
    %59 = arith.truncf %58 : vector<16x128xf32> to vector<16x128xbf16>
    %c0_26 = arith.constant 0 : index
    %c0_27 = arith.constant 0 : index
    %60 = vector.load %arg24[%c0_26, %c0_27] : memref<16x256xbf16, #tpu.memory_space<vmem>>, vector<16x128xbf16>
    tpu.vector_store %arg24[%c0_26, %c0_27], %59 {strides = array<i32>} : memref<16x256xbf16, #tpu.memory_space<vmem>>, vector<16x128xbf16>,
    %61 = vector.extract_strided_slice %32 {offsets = [0, 128], sizes = [16, 128], strides = [1, 1]} : vector<16x256xf32> to vector<16x128xf32>
    %62 = arith.truncf %61 : vector<16x128xf32> to vector<16x128xbf16>
    %c0_28 = arith.constant 0 : index
    %c0_29 = arith.constant 0 : index
    %c128 = arith.constant 128 : index
    %63 = vector.load %arg3[%c0_28, %c0_29, %c128] : memref<1x16x512xbf16, #tpu.memory_space<vmem>>, vector<1x16x128xbf16>
    %64 = vector.shape_cast %63 : vector<1x16x128xbf16> to vector<16x128xbf16>
    %c0_30 = arith.constant 0 : index
    %c0_31 = arith.constant 0 : index
    %c384 = arith.constant 384 : index
    %65 = vector.load %arg3[%c0_30, %c0_31, %c384] : memref<1x16x512xbf16, #tpu.memory_space<vmem>>, vector<1x16x128xbf16>
    %66 = vector.shape_cast %65 : vector<1x16x128xbf16> to vector<16x128xbf16>
    %cst_32 = arith.constant dense<0.000000e+00> : vector<16x16xf32>
    %67 = tpu.matmul %62, %64, %cst_32 {dimension_numbers = #tpu.dot_dimension_numbers<[1], [1], [0], [0], [0, 0, 1, 0], [], []>} : vector<16x128xbf16>, vector<16x128xbf16>, vector<16x16xf32> -> vector<16x16xf32>
    %cst_33 = arith.constant -1.000000e+30 : f32
    %68 = vector.broadcast %cst_33 : f32 to vector<16x16xf32>
    %69 = arith.select %37, %67, %68 : vector<16x16xi1>, vector<16x16xf32>
    %cst_34 = arith.constant dense<0xFF800000> : vector<16xf32>
    %70 = vector.multi_reduction <maximumf>, %69, %cst_34 [1] : vector<16x16xf32> to vector<16xf32>
    %71 = vector.shape_cast %70 : vector<16xf32> to vector<16x1xf32>
    %72 = vector.broadcast %71 : vector<16x1xf32> to vector<16x16xf32>
    %73 = arith.subf %69, %72 : vector<16x16xf32>
    %74 = math.exp %73 : vector<16x16xf32>
    %cst_35 = arith.constant dense<0.000000e+00> : vector<16xf32>
    %75 = vector.multi_reduction <add>, %74, %cst_35 [1] : vector<16x16xf32> to vector<16xf32>
    %76 = vector.shape_cast %75 : vector<16xf32> to vector<16x1xf32>
    %77 = tpu.reciprocal %76 {approx = true} : vector<16x1xf32> -> vector<16x1xf32>
    %78 = vector.broadcast %77 : vector<16x1xf32> to vector<16x16xf32>
    %79 = arith.mulf %74, %78 : vector<16x16xf32>
    %80 = arith.truncf %79 : vector<16x16xf32> to vector<16x16xbf16>
    %cst_36 = arith.constant dense<0.000000e+00> : vector<16x128xf32>
    %81 = tpu.matmul %80, %66, %cst_36 {dimension_numbers = #tpu.dot_dimension_numbers<[1], [0], [0], [1], [0, 0, 1, 1], [], []>} : vector<16x16xbf16>, vector<16x128xbf16>, vector<16x128xf32> -> vector<16x128xf32>
    %82 = arith.truncf %81 : vector<16x128xf32> to vector<16x128xbf16>
    %c0_37 = arith.constant 0 : index
    %c128_38 = arith.constant 128 : index
    %83 = vector.load %arg24[%c0_37, %c128_38] : memref<16x256xbf16, #tpu.memory_space<vmem>>, vector<16x128xbf16>
    tpu.vector_store %arg24[%c0_37, %c128_38], %82 {strides = array<i32>} : memref<16x256xbf16, #tpu.memory_space<vmem>>, vector<16x128xbf16>,
    %c0_39 = arith.constant 0 : index
    %c0_40 = arith.constant 0 : index
    %84 = vector.load %arg24[%c0_39, %c0_40] : memref<16x256xbf16, #tpu.memory_space<vmem>>, vector<16x256xbf16>
    %c0_41 = arith.constant 0 : index
    %c0_42 = arith.constant 0 : index
    %85 = vector.load %arg9[%c0_41, %c0_42] : memref<256x256xbf16, #tpu.memory_space<vmem>>, vector<256x256xbf16>
    %cst_43 = arith.constant dense<0.000000e+00> : vector<16x256xf32>
    %86 = tpu.matmul %84, %85, %cst_43 {dimension_numbers = #tpu.dot_dimension_numbers<[1], [0], [0], [1], [0, 0, 1, 1], [], []>} : vector<16x256xbf16>, vector<256x256xbf16>, vector<16x256xf32> -> vector<16x256xf32>
    %c0_44 = arith.constant 0 : index
    %c0_45 = arith.constant 0 : index
    %87 = vector.load %arg10[%c0_44, %c0_45] : memref<1x256xf32, #tpu.memory_space<vmem>>, vector<1x256xf32>
    %88 = vector.broadcast %87 : vector<1x256xf32> to vector<16x256xf32>
    %89 = arith.addf %86, %88 : vector<16x256xf32>
    %90 = arith.addf %1, %89 : vector<16x256xf32>
    %cst_46 = arith.constant dense<0.000000e+00> : vector<16xf32>
    %91 = vector.multi_reduction <add>, %90, %cst_46 [1] : vector<16x256xf32> to vector<16xf32>
    %92 = vector.shape_cast %91 : vector<16xf32> to vector<16x1xf32>
    %cst_47 = arith.constant 2.560000e+02 : f32
    %93 = vector.broadcast %cst_47 : f32 to vector<16x1xf32>
    %94 = arith.divf %92, %93 : vector<16x1xf32>
    %95 = vector.broadcast %94 : vector<16x1xf32> to vector<16x256xf32>
    %96 = arith.subf %90, %95 : vector<16x256xf32>
    %97 = arith.mulf %96, %96 : vector<16x256xf32>
    %cst_48 = arith.constant dense<0.000000e+00> : vector<16xf32>
    %98 = vector.multi_reduction <add>, %97, %cst_48 [1] : vector<16x256xf32> to vector<16xf32>
    %99 = vector.shape_cast %98 : vector<16xf32> to vector<16x1xf32>
    %cst_49 = arith.constant 2.560000e+02 : f32
    %100 = vector.broadcast %cst_49 : f32 to vector<16x1xf32>
    %101 = arith.divf %99, %100 : vector<16x1xf32>
    %cst_50 = arith.constant 9.99999974E-6 : f32
    %102 = vector.broadcast %cst_50 : f32 to vector<16x1xf32>
    %103 = arith.addf %101, %102 : vector<16x1xf32>
    %104 = math.rsqrt %103 : vector<16x1xf32>
    %105 = vector.broadcast %104 : vector<16x1xf32> to vector<16x256xf32>
    %106 = arith.mulf %96, %105 : vector<16x256xf32>
    %c0_51 = arith.constant 0 : index
    %c0_52 = arith.constant 0 : index
    %107 = vector.load %arg11[%c0_51, %c0_52] : memref<1x256xf32, #tpu.memory_space<vmem>>, vector<1x256xf32>
    %108 = vector.broadcast %107 : vector<1x256xf32> to vector<16x256xf32>
    %109 = arith.mulf %106, %108 : vector<16x256xf32>
    %c0_53 = arith.constant 0 : index
    %c0_54 = arith.constant 0 : index
    %110 = vector.load %arg12[%c0_53, %c0_54] : memref<1x256xf32, #tpu.memory_space<vmem>>, vector<1x256xf32>
    %111 = vector.broadcast %110 : vector<1x256xf32> to vector<16x256xf32>
    %112 = arith.addf %109, %111 : vector<16x256xf32>
    %113 = arith.truncf %112 : vector<16x256xf32> to vector<16x256xbf16>
    %c0_55 = arith.constant 0 : index
    %c0_56 = arith.constant 0 : index
    %114 = vector.load %arg13[%c0_55, %c0_56] : memref<256x256xbf16, #tpu.memory_space<vmem>>, vector<256x256xbf16>
    %cst_57 = arith.constant dense<0.000000e+00> : vector<16x256xf32>
    %115 = tpu.matmul %113, %114, %cst_57 {dimension_numbers = #tpu.dot_dimension_numbers<[1], [0], [0], [1], [0, 0, 1, 1], [], []>} : vector<16x256xbf16>, vector<256x256xbf16>, vector<16x256xf32> -> vector<16x256xf32>
    %c0_58 = arith.constant 0 : index
    %c0_59 = arith.constant 0 : index
    %116 = vector.load %arg14[%c0_58, %c0_59] : memref<1x256xf32, #tpu.memory_space<vmem>>, vector<1x256xf32>
    %117 = vector.broadcast %116 : vector<1x256xf32> to vector<16x256xf32>
    %118 = arith.addf %115, %117 : vector<16x256xf32>
    %cst_60 = arith.constant 0.0883883461 : f32
    %119 = vector.broadcast %cst_60 : f32 to vector<16x256xf32>
    %120 = arith.mulf %118, %119 : vector<16x256xf32>
    %121 = tpu.iota {dimensions = array<i32: 1>} : vector<16x16xi32>
    %c12_i32 = arith.constant 12 : i32
    %122 = vector.broadcast %c12_i32 : i32 to vector<16x16xi32>
    %123 = arith.cmpi slt, %121, %122 : vector<16x16xi32>
    %124 = vector.extract_strided_slice %120 {offsets = [0, 0], sizes = [16, 128], strides = [1, 1]} : vector<16x256xf32> to vector<16x128xf32>
    %125 = arith.truncf %124 : vector<16x128xf32> to vector<16x128xbf16>
    %c0_61 = arith.constant 0 : index
    %c0_62 = arith.constant 0 : index
    %c0_63 = arith.constant 0 : index
    %126 = vector.load %arg4[%c0_61, %c0_62, %c0_63] : memref<1x16x512xbf16, #tpu.memory_space<vmem>>, vector<1x16x128xbf16>
    %127 = vector.shape_cast %126 : vector<1x16x128xbf16> to vector<16x128xbf16>
    %c0_64 = arith.constant 0 : index
    %c0_65 = arith.constant 0 : index
    %c256_66 = arith.constant 256 : index
    %128 = vector.load %arg4[%c0_64, %c0_65, %c256_66] : memref<1x16x512xbf16, #tpu.memory_space<vmem>>, vector<1x16x128xbf16>
    %129 = vector.shape_cast %128 : vector<1x16x128xbf16> to vector<16x128xbf16>
    %cst_67 = arith.constant dense<0.000000e+00> : vector<16x16xf32>
    %130 = tpu.matmul %125, %127, %cst_67 {dimension_numbers = #tpu.dot_dimension_numbers<[1], [1], [0], [0], [0, 0, 1, 0], [], []>} : vector<16x128xbf16>, vector<16x128xbf16>, vector<16x16xf32> -> vector<16x16xf32>
    %cst_68 = arith.constant -1.000000e+30 : f32
    %131 = vector.broadcast %cst_68 : f32 to vector<16x16xf32>
    %132 = arith.select %123, %130, %131 : vector<16x16xi1>, vector<16x16xf32>
    %cst_69 = arith.constant dense<0xFF800000> : vector<16xf32>
    %133 = vector.multi_reduction <maximumf>, %132, %cst_69 [1] : vector<16x16xf32> to vector<16xf32>
    %134 = vector.shape_cast %133 : vector<16xf32> to vector<16x1xf32>
    %135 = vector.broadcast %134 : vector<16x1xf32> to vector<16x16xf32>
    %136 = arith.subf %132, %135 : vector<16x16xf32>
    %137 = math.exp %136 : vector<16x16xf32>
    %cst_70 = arith.constant dense<0.000000e+00> : vector<16xf32>
    %138 = vector.multi_reduction <add>, %137, %cst_70 [1] : vector<16x16xf32> to vector<16xf32>
    %139 = vector.shape_cast %138 : vector<16xf32> to vector<16x1xf32>
    %140 = tpu.reciprocal %139 {approx = true} : vector<16x1xf32> -> vector<16x1xf32>
    %141 = vector.broadcast %140 : vector<16x1xf32> to vector<16x16xf32>
    %142 = arith.mulf %137, %141 : vector<16x16xf32>
    %143 = arith.truncf %142 : vector<16x16xf32> to vector<16x16xbf16>
    %cst_71 = arith.constant dense<0.000000e+00> : vector<16x128xf32>
    %144 = tpu.matmul %143, %129, %cst_71 {dimension_numbers = #tpu.dot_dimension_numbers<[1], [0], [0], [1], [0, 0, 1, 1], [], []>} : vector<16x16xbf16>, vector<16x128xbf16>, vector<16x128xf32> -> vector<16x128xf32>
    %145 = arith.truncf %144 : vector<16x128xf32> to vector<16x128xbf16>
    %c0_72 = arith.constant 0 : index
    %c0_73 = arith.constant 0 : index
    %146 = vector.load %arg24[%c0_72, %c0_73] : memref<16x256xbf16, #tpu.memory_space<vmem>>, vector<16x128xbf16>
    tpu.vector_store %arg24[%c0_72, %c0_73], %145 {strides = array<i32>} : memref<16x256xbf16, #tpu.memory_space<vmem>>, vector<16x128xbf16>,
    %147 = vector.extract_strided_slice %120 {offsets = [0, 128], sizes = [16, 128], strides = [1, 1]} : vector<16x256xf32> to vector<16x128xf32>
    %148 = arith.truncf %147 : vector<16x128xf32> to vector<16x128xbf16>
    %c0_74 = arith.constant 0 : index
    %c0_75 = arith.constant 0 : index
    %c128_76 = arith.constant 128 : index
    %149 = vector.load %arg4[%c0_74, %c0_75, %c128_76] : memref<1x16x512xbf16, #tpu.memory_space<vmem>>, vector<1x16x128xbf16>
    %150 = vector.shape_cast %149 : vector<1x16x128xbf16> to vector<16x128xbf16>
    %c0_77 = arith.constant 0 : index
    %c0_78 = arith.constant 0 : index
    %c384_79 = arith.constant 384 : index
    %151 = vector.load %arg4[%c0_77, %c0_78, %c384_79] : memref<1x16x512xbf16, #tpu.memory_space<vmem>>, vector<1x16x128xbf16>
    %152 = vector.shape_cast %151 : vector<1x16x128xbf16> to vector<16x128xbf16>
    %cst_80 = arith.constant dense<0.000000e+00> : vector<16x16xf32>
    %153 = tpu.matmul %148, %150, %cst_80 {dimension_numbers = #tpu.dot_dimension_numbers<[1], [1], [0], [0], [0, 0, 1, 0], [], []>} : vector<16x128xbf16>, vector<16x128xbf16>, vector<16x16xf32> -> vector<16x16xf32>
    %cst_81 = arith.constant -1.000000e+30 : f32
    %154 = vector.broadcast %cst_81 : f32 to vector<16x16xf32>
    %155 = arith.select %123, %153, %154 : vector<16x16xi1>, vector<16x16xf32>
    %cst_82 = arith.constant dense<0xFF800000> : vector<16xf32>
    %156 = vector.multi_reduction <maximumf>, %155, %cst_82 [1] : vector<16x16xf32> to vector<16xf32>
    %157 = vector.shape_cast %156 : vector<16xf32> to vector<16x1xf32>
    %158 = vector.broadcast %157 : vector<16x1xf32> to vector<16x16xf32>
    %159 = arith.subf %155, %158 : vector<16x16xf32>
    %160 = math.exp %159 : vector<16x16xf32>
    %cst_83 = arith.constant dense<0.000000e+00> : vector<16xf32>
    %161 = vector.multi_reduction <add>, %160, %cst_83 [1] : vector<16x16xf32> to vector<16xf32>
    %162 = vector.shape_cast %161 : vector<16xf32> to vector<16x1xf32>
    %163 = tpu.reciprocal %162 {approx = true} : vector<16x1xf32> -> vector<16x1xf32>
    %164 = vector.broadcast %163 : vector<16x1xf32> to vector<16x16xf32>
    %165 = arith.mulf %160, %164 : vector<16x16xf32>
    %166 = arith.truncf %165 : vector<16x16xf32> to vector<16x16xbf16>
    %cst_84 = arith.constant dense<0.000000e+00> : vector<16x128xf32>
    %167 = tpu.matmul %166, %152, %cst_84 {dimension_numbers = #tpu.dot_dimension_numbers<[1], [0], [0], [1], [0, 0, 1, 1], [], []>} : vector<16x16xbf16>, vector<16x128xbf16>, vector<16x128xf32> -> vector<16x128xf32>
    %168 = arith.truncf %167 : vector<16x128xf32> to vector<16x128xbf16>
    %c0_85 = arith.constant 0 : index
    %c128_86 = arith.constant 128 : index
    %169 = vector.load %arg24[%c0_85, %c128_86] : memref<16x256xbf16, #tpu.memory_space<vmem>>, vector<16x128xbf16>
    tpu.vector_store %arg24[%c0_85, %c128_86], %168 {strides = array<i32>} : memref<16x256xbf16, #tpu.memory_space<vmem>>, vector<16x128xbf16>,
    %c0_87 = arith.constant 0 : index
    %c0_88 = arith.constant 0 : index
    %170 = vector.load %arg24[%c0_87, %c0_88] : memref<16x256xbf16, #tpu.memory_space<vmem>>, vector<16x256xbf16>
    %c0_89 = arith.constant 0 : index
    %c0_90 = arith.constant 0 : index
    %171 = vector.load %arg15[%c0_89, %c0_90] : memref<256x256xbf16, #tpu.memory_space<vmem>>, vector<256x256xbf16>
    %cst_91 = arith.constant dense<0.000000e+00> : vector<16x256xf32>
    %172 = tpu.matmul %170, %171, %cst_91 {dimension_numbers = #tpu.dot_dimension_numbers<[1], [0], [0], [1], [0, 0, 1, 1], [], []>} : vector<16x256xbf16>, vector<256x256xbf16>, vector<16x256xf32> -> vector<16x256xf32>
    %c0_92 = arith.constant 0 : index
    %c0_93 = arith.constant 0 : index
    %173 = vector.load %arg16[%c0_92, %c0_93] : memref<1x256xf32, #tpu.memory_space<vmem>>, vector<1x256xf32>
    %174 = vector.broadcast %173 : vector<1x256xf32> to vector<16x256xf32>
    %175 = arith.addf %172, %174 : vector<16x256xf32>
    %176 = arith.addf %90, %175 : vector<16x256xf32>
    %cst_94 = arith.constant dense<0.000000e+00> : vector<16xf32>
    %177 = vector.multi_reduction <add>, %176, %cst_94 [1] : vector<16x256xf32> to vector<16xf32>
    %178 = vector.shape_cast %177 : vector<16xf32> to vector<16x1xf32>
    %cst_95 = arith.constant 2.560000e+02 : f32
    %179 = vector.broadcast %cst_95 : f32 to vector<16x1xf32>
    %180 = arith.divf %178, %179 : vector<16x1xf32>
    %181 = vector.broadcast %180 : vector<16x1xf32> to vector<16x256xf32>
    %182 = arith.subf %176, %181 : vector<16x256xf32>
    %183 = arith.mulf %182, %182 : vector<16x256xf32>
    %cst_96 = arith.constant dense<0.000000e+00> : vector<16xf32>
    %184 = vector.multi_reduction <add>, %183, %cst_96 [1] : vector<16x256xf32> to vector<16xf32>
    %185 = vector.shape_cast %184 : vector<16xf32> to vector<16x1xf32>
    %cst_97 = arith.constant 2.560000e+02 : f32
    %186 = vector.broadcast %cst_97 : f32 to vector<16x1xf32>
    %187 = arith.divf %185, %186 : vector<16x1xf32>
    %cst_98 = arith.constant 9.99999974E-6 : f32
    %188 = vector.broadcast %cst_98 : f32 to vector<16x1xf32>
    %189 = arith.addf %187, %188 : vector<16x1xf32>
    %190 = math.rsqrt %189 : vector<16x1xf32>
    %191 = vector.broadcast %190 : vector<16x1xf32> to vector<16x256xf32>
    %192 = arith.mulf %182, %191 : vector<16x256xf32>
    %c0_99 = arith.constant 0 : index
    %c0_100 = arith.constant 0 : index
    %193 = vector.load %arg17[%c0_99, %c0_100] : memref<1x256xf32, #tpu.memory_space<vmem>>, vector<1x256xf32>
    %194 = vector.broadcast %193 : vector<1x256xf32> to vector<16x256xf32>
    %195 = arith.mulf %192, %194 : vector<16x256xf32>
    %c0_101 = arith.constant 0 : index
    %c0_102 = arith.constant 0 : index
    %196 = vector.load %arg18[%c0_101, %c0_102] : memref<1x256xf32, #tpu.memory_space<vmem>>, vector<1x256xf32>
    %197 = vector.broadcast %196 : vector<1x256xf32> to vector<16x256xf32>
    %198 = arith.addf %195, %197 : vector<16x256xf32>
    %199 = arith.truncf %198 : vector<16x256xf32> to vector<16x256xbf16>
    %c0_103 = arith.constant 0 : index
    %c0_104 = arith.constant 0 : index
    %200 = vector.load %arg19[%c0_103, %c0_104] : memref<256x1024xbf16, #tpu.memory_space<vmem>>, vector<256x1024xbf16>
    %cst_105 = arith.constant dense<0.000000e+00> : vector<16x1024xf32>
    %201 = tpu.matmul %199, %200, %cst_105 {dimension_numbers = #tpu.dot_dimension_numbers<[1], [0], [0], [1], [0, 0, 1, 1], [], []>} : vector<16x256xbf16>, vector<256x1024xbf16>, vector<16x1024xf32> -> vector<16x1024xf32>
    %c0_106 = arith.constant 0 : index
    %c0_107 = arith.constant 0 : index
    %202 = vector.load %arg20[%c0_106, %c0_107] : memref<1x1024xf32, #tpu.memory_space<vmem>>, vector<1x1024xf32>
    %203 = vector.broadcast %202 : vector<1x1024xf32> to vector<16x1024xf32>
    %204 = arith.addf %201, %203 : vector<16x1024xf32>
    %cst_108 = arith.constant 0.707106769 : f32
    %205 = vector.broadcast %cst_108 : f32 to vector<16x1024xf32>
    %206 = arith.mulf %204, %205 : vector<16x1024xf32>
    %207 = math.absf %206 : vector<16x1024xf32>
    %cst_109 = arith.constant 0.327591091 : f32
    %208 = vector.broadcast %cst_109 : f32 to vector<16x1024xf32>
    %209 = arith.mulf %208, %207 : vector<16x1024xf32>
    %cst_110 = arith.constant 1.000000e+00 : f32
    %210 = vector.broadcast %cst_110 : f32 to vector<16x1024xf32>
    %211 = arith.addf %210, %209 : vector<16x1024xf32>
    %cst_111 = arith.constant 1.000000e+00 : f32
    %212 = vector.broadcast %cst_111 : f32 to vector<16x1024xf32>
    %213 = arith.divf %212, %211 : vector<16x1024xf32>
    %cst_112 = arith.constant 1.06140542 : f32
    %214 = vector.broadcast %cst_112 : f32 to vector<16x1024xf32>
    %215 = arith.mulf %214, %213 : vector<16x1024xf32>
    %cst_113 = arith.constant -1.45315206 : f32
    %216 = vector.broadcast %cst_113 : f32 to vector<16x1024xf32>
    %217 = arith.addf %215, %216 : vector<16x1024xf32>
    %218 = arith.mulf %217, %213 : vector<16x1024xf32>
    %cst_114 = arith.constant 1.42141378 : f32
    %219 = vector.broadcast %cst_114 : f32 to vector<16x1024xf32>
    %220 = arith.addf %218, %219 : vector<16x1024xf32>
    %221 = arith.mulf %220, %213 : vector<16x1024xf32>
    %cst_115 = arith.constant -0.284496725 : f32
    %222 = vector.broadcast %cst_115 : f32 to vector<16x1024xf32>
    %223 = arith.addf %221, %222 : vector<16x1024xf32>
    %224 = arith.mulf %223, %213 : vector<16x1024xf32>
    %cst_116 = arith.constant 0.254829586 : f32
    %225 = vector.broadcast %cst_116 : f32 to vector<16x1024xf32>
    %226 = arith.addf %224, %225 : vector<16x1024xf32>
    %227 = arith.mulf %226, %213 : vector<16x1024xf32>
    %cst_117 = arith.constant 0.000000e+00 : f32
    %228 = vector.broadcast %cst_117 : f32 to vector<16x1024xf32>
    %229 = arith.subf %228, %207 : vector<16x1024xf32>
    %230 = arith.mulf %229, %207 : vector<16x1024xf32>
    %231 = math.exp %230 : vector<16x1024xf32>
    %232 = arith.mulf %227, %231 : vector<16x1024xf32>
    %cst_118 = arith.constant 1.000000e+00 : f32
    %233 = vector.broadcast %cst_118 : f32 to vector<16x1024xf32>
    %234 = arith.subf %233, %232 : vector<16x1024xf32>
    %cst_119 = arith.constant 0.000000e+00 : f32
    %235 = vector.broadcast %cst_119 : f32 to vector<16x1024xf32>
    %236 = arith.cmpf oge, %206, %235 : vector<16x1024xf32>
    %cst_120 = arith.constant 0.000000e+00 : f32
    %237 = vector.broadcast %cst_120 : f32 to vector<16x1024xf32>
    %238 = arith.subf %237, %234 : vector<16x1024xf32>
    %239 = arith.select %236, %234, %238 : vector<16x1024xi1>, vector<16x1024xf32>
    %cst_121 = arith.constant 5.000000e-01 : f32
    %240 = vector.broadcast %cst_121 : f32 to vector<16x1024xf32>
    %241 = arith.mulf %240, %204 : vector<16x1024xf32>
    %cst_122 = arith.constant 1.000000e+00 : f32
    %242 = vector.broadcast %cst_122 : f32 to vector<16x1024xf32>
    %243 = arith.addf %242, %239 : vector<16x1024xf32>
    %244 = arith.mulf %241, %243 : vector<16x1024xf32>
    %245 = arith.truncf %244 : vector<16x1024xf32> to vector<16x1024xbf16>
    %c0_123 = arith.constant 0 : index
    %c0_124 = arith.constant 0 : index
    %246 = vector.load %arg21[%c0_123, %c0_124] : memref<1024x256xbf16, #tpu.memory_space<vmem>>, vector<1024x256xbf16>
    %cst_125 = arith.constant dense<0.000000e+00> : vector<16x256xf32>
    %247 = tpu.matmul %245, %246, %cst_125 {dimension_numbers = #tpu.dot_dimension_numbers<[1], [0], [0], [1], [0, 0, 1, 1], [], []>} : vector<16x1024xbf16>, vector<1024x256xbf16>, vector<16x256xf32> -> vector<16x256xf32>
    %248 = arith.addf %176, %247 : vector<16x256xf32>
    %c0_126 = arith.constant 0 : index
    %c0_127 = arith.constant 0 : index
    %249 = vector.load %arg22[%c0_126, %c0_127] : memref<1x256xf32, #tpu.memory_space<vmem>>, vector<1x256xf32>
    %250 = vector.broadcast %249 : vector<1x256xf32> to vector<16x256xf32>
    %251 = arith.addf %248, %250 : vector<16x256xf32>
    %c0_128 = arith.constant 0 : index
    %c0_129 = arith.constant 0 : index
    %c0_130 = arith.constant 0 : index
    %252 = vector.load %arg23[%c0_128, %c0_129, %c0_130] : memref<1x16x256xf32, #tpu.memory_space<vmem>>, vector<1x16x256xf32>
    %253 = vector.shape_cast %252 : vector<1x16x256xf32> to vector<16x256xf32>
    %254 = vector.shape_cast %251 : vector<16x256xf32> to vector<1x16x256xf32>
    tpu.vector_store %arg23[%c0_128, %c0_129, %c0_130], %254 {strides = array<i32>} : memref<1x16x256xf32, #tpu.memory_space<vmem>>, vector<1x16x256xf32>,
    return
  }
  func.func @transform_0(%arg0: i32, %arg1: i32) -> (i32, i32, i32) {
    %c0_i32 = arith.constant 0 : i32
    %c0_i32_0 = arith.constant 0 : i32
    return %arg0, %arg1, %c0_i32 : i32, i32, i32
  }
  func.func @transform_1(%arg0: i32, %arg1: i32) -> (i32, i32, i32) {
    %c0_i32 = arith.constant 0 : i32
    %c0_i32_0 = arith.constant 0 : i32
    %c0_i32_1 = arith.constant 0 : i32
    return %arg0, %c0_i32, %c0_i32_0 : i32, i32, i32
  }
  func.func @transform_2(%arg0: i32, %arg1: i32) -> (i32, i32, i32) {
    %c0_i32 = arith.constant 0 : i32
    %c0_i32_0 = arith.constant 0 : i32
    %c0_i32_1 = arith.constant 0 : i32
    return %arg0, %c0_i32, %c0_i32_0 : i32, i32, i32
  }
  func.func @transform_3(%arg0: i32, %arg1: i32) -> (i32, i32) {
    %c0_i32 = arith.constant 0 : i32
    %c0_i32_0 = arith.constant 0 : i32
    %c0_i32_1 = arith.constant 0 : i32
    return %c0_i32, %c0_i32_0 : i32, i32
  }
  func.func @transform_4(%arg0: i32, %arg1: i32) -> (i32, i32) {
    %c0_i32 = arith.constant 0 : i32
    %c0_i32_0 = arith.constant 0 : i32
    %c0_i32_1 = arith.constant 0 : i32
    return %c0_i32, %c0_i32_0 : i32, i32
  }
  func.func @transform_5(%arg0: i32, %arg1: i32) -> (i32, i32) {
    %c0_i32 = arith.constant 0 : i32
    %c0_i32_0 = arith.constant 0 : i32
    %c0_i32_1 = arith.constant 0 : i32
    return %c0_i32, %c0_i32_0 : i32, i32
  }
  func.func @transform_6(%arg0: i32, %arg1: i32) -> (i32, i32) {
    %c0_i32 = arith.constant 0 : i32
    %c0_i32_0 = arith.constant 0 : i32
    %c0_i32_1 = arith.constant 0 : i32
    return %c0_i32, %c0_i32_0 : i32, i32
  }
  func.func @transform_7(%arg0: i32, %arg1: i32) -> (i32, i32) {
    %c0_i32 = arith.constant 0 : i32
    %c0_i32_0 = arith.constant 0 : i32
    %c0_i32_1 = arith.constant 0 : i32
    return %c0_i32, %c0_i32_0 : i32, i32
  }
  func.func @transform_8(%arg0: i32, %arg1: i32) -> (i32, i32) {
    %c0_i32 = arith.constant 0 : i32
    %c0_i32_0 = arith.constant 0 : i32
    %c0_i32_1 = arith.constant 0 : i32
    return %c0_i32, %c0_i32_0 : i32, i32
  }
  func.func @transform_9(%arg0: i32, %arg1: i32) -> (i32, i32) {
    %c0_i32 = arith.constant 0 : i32
    %c0_i32_0 = arith.constant 0 : i32
    %c0_i32_1 = arith.constant 0 : i32
    return %c0_i32, %c0_i32_0 : i32, i32
  }
  func.func @transform_10(%arg0: i32, %arg1: i32) -> (i32, i32) {
    %c0_i32 = arith.constant 0 : i32
    %c0_i32_0 = arith.constant 0 : i32
    %c0_i32_1 = arith.constant 0 : i32
    return %c0_i32, %c0_i32_0 : i32, i32
  }
  func.func @transform_11(%arg0: i32, %arg1: i32) -> (i32, i32) {
    %c0_i32 = arith.constant 0 : i32
    %c0_i32_0 = arith.constant 0 : i32
    %c0_i32_1 = arith.constant 0 : i32
    return %c0_i32, %c0_i32_0 : i32, i32
  }
  func.func @transform_12(%arg0: i32, %arg1: i32) -> (i32, i32) {
    %c0_i32 = arith.constant 0 : i32
    %c0_i32_0 = arith.constant 0 : i32
    %c0_i32_1 = arith.constant 0 : i32
    return %c0_i32, %c0_i32_0 : i32, i32
  }
  func.func @transform_13(%arg0: i32, %arg1: i32) -> (i32, i32) {
    %c0_i32 = arith.constant 0 : i32
    %c0_i32_0 = arith.constant 0 : i32
    %c0_i32_1 = arith.constant 0 : i32
    return %c0_i32, %c0_i32_0 : i32, i32
  }
  func.func @transform_14(%arg0: i32, %arg1: i32) -> (i32, i32) {
    %c0_i32 = arith.constant 0 : i32
    %c0_i32_0 = arith.constant 0 : i32
    %c0_i32_1 = arith.constant 0 : i32
    return %c0_i32, %c0_i32_0 : i32, i32
  }
  func.func @transform_15(%arg0: i32, %arg1: i32) -> (i32, i32) {
    %c0_i32 = arith.constant 0 : i32
    %c0_i32_0 = arith.constant 0 : i32
    %c0_i32_1 = arith.constant 0 : i32
    return %c0_i32, %c0_i32_0 : i32, i32
  }
  func.func @transform_16(%arg0: i32, %arg1: i32) -> (i32, i32) {
    %c0_i32 = arith.constant 0 : i32
    %c0_i32_0 = arith.constant 0 : i32
    %c0_i32_1 = arith.constant 0 : i32
    return %c0_i32, %c0_i32_0 : i32, i32
  }
  func.func @transform_17(%arg0: i32, %arg1: i32) -> (i32, i32) {
    %c0_i32 = arith.constant 0 : i32
    %c0_i32_0 = arith.constant 0 : i32
    %c0_i32_1 = arith.constant 0 : i32
    return %c0_i32, %c0_i32_0 : i32, i32
  }
  func.func @transform_18(%arg0: i32, %arg1: i32) -> (i32, i32) {
    %c0_i32 = arith.constant 0 : i32
    %c0_i32_0 = arith.constant 0 : i32
    %c0_i32_1 = arith.constant 0 : i32
    return %c0_i32, %c0_i32_0 : i32, i32
  }
  func.func @transform_19(%arg0: i32, %arg1: i32) -> (i32, i32) {
    %c0_i32 = arith.constant 0 : i32
    %c0_i32_0 = arith.constant 0 : i32
    %c0_i32_1 = arith.constant 0 : i32
    return %c0_i32, %c0_i32_0 : i32, i32
  }
  func.func @transform_20(%arg0: i32, %arg1: i32) -> (i32, i32) {
    %c0_i32 = arith.constant 0 : i32
    %c0_i32_0 = arith.constant 0 : i32
    %c0_i32_1 = arith.constant 0 : i32
    return %c0_i32, %c0_i32_0 : i32, i32
  }
  func.func @transform_21(%arg0: i32, %arg1: i32) -> (i32, i32, i32) {
    %c0_i32 = arith.constant 0 : i32
    %c0_i32_0 = arith.constant 0 : i32
    return %arg0, %arg1, %c0_i32 : i32, i32, i32
  }
}

</mosaic_0001>

<llo_original>
// kernel: _decoder_block_impl.1
$region0: #{_decoder_block_impl.1}
  #allocation0 [shape = 'u32[]', space=smem, size = 0x4, offset = 0x4, fixed_abs, tag = 'smem constant byte address 0x4 - core index']
  #allocation1 [shape = 'u32[144,128]{1,0:T(1,128)}', space=vmem, size = 0x12000, scoped, tag = 'internal scratch']
  #allocation2 [shape = 'bf16[16,256]{1,0:T(16,128)(2,1)}', space=vmem, size = 0x2000, scoped, tag = 'scratch operand']
  %s0 = inlined_call_operand.vmem [shape: f32[2,16,256], index: 0, kind: input, shape index: {}]
  %s1 = inlined_call_operand.vmem [shape: bf16[2,16,512], index: 1, kind: input, shape index: {}]
  %s2 = inlined_call_operand.vmem [shape: bf16[2,16,512], index: 2, kind: input, shape index: {}]
  %s3 = inlined_call_operand.vmem [shape: f32[1,256], index: 3, kind: input, shape index: {}]
  %s4 = inlined_call_operand.vmem [shape: f32[1,256], index: 4, kind: input, shape index: {}]
  %s5 = inlined_call_operand.vmem [shape: bf16[256,256], index: 5, kind: input, shape index: {}]
  %s6 = inlined_call_operand.vmem [shape: f32[1,256], index: 6, kind: input, shape index: {}]
  %s7 = inlined_call_operand.vmem [shape: bf16[256,256], index: 7, kind: input, shape index: {}]
  %s8 = inlined_call_operand.vmem [shape: f32[1,256], index: 8, kind: input, shape index: {}]
  %s9 = inlined_call_operand.vmem [shape: f32[1,256], index: 9, kind: input, shape index: {}]
  %s10 = inlined_call_operand.vmem [shape: f32[1,256], index: 10, kind: input, shape index: {}]
  %s11 = inlined_call_operand.vmem [shape: bf16[256,256], index: 11, kind: input, shape index: {}]
  %s12 = inlined_call_operand.vmem [shape: f32[1,256], index: 12, kind: input, shape index: {}]
  %s13 = inlined_call_operand.vmem [shape: bf16[256,256], index: 13, kind: input, shape index: {}]
  %s14 = inlined_call_operand.vmem [shape: f32[1,256], index: 14, kind: input, shape index: {}]
  %s15 = inlined_call_operand.vmem [shape: f32[1,256], index: 15, kind: input, shape index: {}]
  %s16 = inlined_call_operand.vmem [shape: f32[1,256], index: 16, kind: input, shape index: {}]
  %s17 = inlined_call_operand.vmem [shape: bf16[256,1024], index: 17, kind: input, shape index: {}]
  %s18 = inlined_call_operand.vmem [shape: f32[1,1024], index: 18, kind: input, shape index: {}]
  %s19 = inlined_call_operand.vmem [shape: bf16[1024,256], index: 19, kind: input, shape index: {}]
  %s20 = inlined_call_operand.vmem [shape: f32[1,256], index: 20, kind: input, shape index: {}]
  %s21 = inlined_call_operand.hbm [shape: f32[2,16,256], index: 21, kind: output, shape index: {}]
  %s22 = sld [smem:[#allocation0]]
  $region117: #{_decoder_block_impl.1} parent=0
    _
  %s24 = ssub.s32 1, %s22
  %s25 = scalar_select 0, %s24, %s22
  $region1: #{_decoder_block_impl.1} parent=0
    #allocation3 [shape = 'u8[32768]{0}', space=vmem, size = 0x8000, scoped, tag = 'output window, operand 0']
    #allocation4 [shape = 's32[2]{0}', space=sflag, size = 0x8, scoped, tag = 'scoped memory for _decoder_block_impl.1']
    %26 = vsyncpa [#allocation4], 0
    %s27 = scalar_lea.sflag [#allocation4], 1
    %28 = vsyncpa %s27, 0
    loop: start=0, step=1, limit=4
    $region2: #{_decoder_block_impl.1} parent=1 // loop_pre_header
      _
    $region3: #{_decoder_block_impl.1} parent=1 // loop_header
      %s30 = sphi 0, %s34
      %p31 = scmp.ge.s32.totalorder %s30, 4
      %s37 = sphi 0, %s49
      %s38 = sphi 0, %s45
      %s39 = sphi 0, %s37
      %s40 = sphi 0, %s38
      %s41 = sphi 0, %s39
      %s42 = sphi 0, %s40
      %s54 = sphi 0, %s56
      %s57 = sphi 0, %s54
      %s58 = sphi 0, %s57
      %s74 = sphi 0, %s58
      %s80 = sphi 0, %s82
      %s83 = sphi 0, %s80
      %s84 = sphi 0, %s83
      %s100 = sphi 0, %s84
      %s106 = sphi 0, %s108
      %s109 = sphi 0, %s106
      %s110 = sphi 0, %s109
      %s126 = sphi 0, %s110
      %s130 = sphi 0, %s130
      %s132 = sphi 0, %s130
      %s133 = sphi 0, %s132
      %s147 = sphi 0, %s133
      %s151 = sphi 0, %s151
      %s153 = sphi 0, %s151
      %s154 = sphi 0, %s153
      %s168 = sphi 0, %s154
      %s172 = sphi 0, %s172
      %s174 = sphi 0, %s172
      %s175 = sphi 0, %s174
      %s189 = sphi 0, %s175
      %s193 = sphi 0, %s193
      %s195 = sphi 0, %s193
      %s196 = sphi 0, %s195
      %s210 = sphi 0, %s196
      %s214 = sphi 0, %s214
      %s216 = sphi 0, %s214
      %s217 = sphi 0, %s216
      %s231 = sphi 0, %s217
      %s235 = sphi 0, %s235
      %s237 = sphi 0, %s235
      %s238 = sphi 0, %s237
      %s252 = sphi 0, %s238
      %s256 = sphi 0, %s256
      %s258 = sphi 0, %s256
      %s259 = sphi 0, %s258
      %s273 = sphi 0, %s259
      %s277 = sphi 0, %s277
      %s279 = sphi 0, %s277
      %s280 = sphi 0, %s279
      %s294 = sphi 0, %s280
      %s298 = sphi 0, %s298
      %s300 = sphi 0, %s298
      %s301 = sphi 0, %s300
      %s315 = sphi 0, %s301
      %s319 = sphi 0, %s319
      %s321 = sphi 0, %s319
      %s322 = sphi 0, %s321
      %s336 = sphi 0, %s322
      %s340 = sphi 0, %s340
      %s342 = sphi 0, %s340
      %s343 = sphi 0, %s342
      %s357 = sphi 0, %s343
      %s361 = sphi 0, %s361
      %s363 = sphi 0, %s361
      %s364 = sphi 0, %s363
      %s378 = sphi 0, %s364
      %s382 = sphi 0, %s382
      %s384 = sphi 0, %s382
      %s385 = sphi 0, %s384
      %s399 = sphi 0, %s385
      %s403 = sphi 0, %s403
      %s405 = sphi 0, %s403
      %s406 = sphi 0, %s405
      %s420 = sphi 0, %s406
      %s424 = sphi 0, %s424
      %s426 = sphi 0, %s424
      %s427 = sphi 0, %s426
      %s441 = sphi 0, %s427
      %s445 = sphi 0, %s445
      %s447 = sphi 0, %s445
      %s448 = sphi 0, %s447
      %s462 = sphi 0, %s448
      %s466 = sphi 0, %s466
      %s468 = sphi 0, %s466
      %s469 = sphi 0, %s468
      %s483 = sphi 0, %s469
      %s487 = sphi 0, %s487
      %s489 = sphi 0, %s487
      %s490 = sphi 0, %s489
      %s504 = sphi 0, %s490
      %s512 = sphi 0, %s514
      %s515 = sphi 0, %s512
      %s516 = sphi 0, %s515
      %s532 = sphi 0, %s516
    $region4: #{_decoder_block_impl.1} parent=1 // loop_header_branch
      %33 = sbr.rel (%p31) target = $region8
    $region5: #{_decoder_block_impl.1} parent=1 // loop_body
      %s35 = ssub.s32 %s30, 1
      %s36 = ssub.s32 %s30, 2
      %s43 = sadd.s32 1, %s38
      %p44 = scmp.ge.s32.totalorder %s43, 1
      %s45 = scalar_select %p44, 0, %s43
      %s46 = sadd.s32 1, %s37
      %s47 = scalar_select %p44, %s46, %s37
      %p48 = scmp.ge.s32.totalorder %s47, 2
      %s49 = scalar_select %p48, 0, %s47
      %s50 = ssub.s32 %s37, %s49
      %s51 = ssub.s32 %s38, %s45
      %s52 = sor.u32 %s50, %s51
      %p53 = scmp.eq.s32.totalorder %s52, 0
      %s55 = sadd.s32 %s54, 1
      %s56 = scalar_select %p53, %s54, %s55
      %p59 = pneg %p53
      %p60 = scmp.eq.s32.totalorder %s30, 1
      %p61 = por %p59, %p60
      %p62 = scmp.ne.s32.totalorder %s54, %s57
      %p63 = scmp.eq.s32.totalorder %s30, 0
      %p64 = por %p62, %p63
      %p65 = scmp.ne.s32.totalorder %s54, %s57
      %p66 = scmp.eq.s32.totalorder %s35, 1
      %p67 = por %p65, %p66
      %p68 = scmp.ne.s32.totalorder %s57, %s58
      %p69 = scmp.eq.s32.totalorder %s35, 0
      %p70 = por %p68, %p69
      %p71 = scmp.ne.s32.totalorder %s57, %s58
      %p72 = scmp.eq.s32.totalorder %s36, 1
      %p73 = por %p71, %p72
      %p75 = scmp.ne.s32.totalorder %s58, %s74
      %p76 = scmp.eq.s32.totalorder %s36, 0
      %p77 = por %p75, %p76
      %s78 = ssub.s32 %s37, %s49
      %p79 = scmp.eq.s32.totalorder %s78, 0
      %s81 = sadd.s32 %s80, 1
      %s82 = scalar_select %p79, %s80, %s81
      %p85 = pneg %p79
      %p86 = scmp.eq.s32.totalorder %s30, 1
      %p87 = por %p85, %p86
      %p88 = scmp.ne.s32.totalorder %s80, %s83
      %p89 = scmp.eq.s32.totalorder %s30, 0
      %p90 = por %p88, %p89
      %p91 = scmp.ne.s32.totalorder %s80, %s83
      %p92 = scmp.eq.s32.totalorder %s35, 1
      %p93 = por %p91, %p92
      %p94 = scmp.ne.s32.totalorder %s83, %s84
      %p95 = scmp.eq.s32.totalorder %s35, 0
      %p96 = por %p94, %p95
      %p97 = scmp.ne.s32.totalorder %s83, %s84
      %p98 = scmp.eq.s32.totalorder %s36, 1
      %p99 = por %p97, %p98
      %p101 = scmp.ne.s32.totalorder %s84, %s100
      %p102 = scmp.eq.s32.totalorder %s36, 0
      %p103 = por %p101, %p102
      %s104 = ssub.s32 %s37, %s49
      %p105 = scmp.eq.s32.totalorder %s104, 0
      %s107 = sadd.s32 %s106, 1
      %s108 = scalar_select %p105, %s106, %s107
      %p111 = pneg %p105
      %p112 = scmp.eq.s32.totalorder %s30, 1
      %p113 = por %p111, %p112
      %p114 = scmp.ne.s32.totalorder %s106, %s109
      %p115 = scmp.eq.s32.totalorder %s30, 0
      %p116 = por %p114, %p115
      %p117 = scmp.ne.s32.totalorder %s106, %s109
      %p118 = scmp.eq.s32.totalorder %s35, 1
      %p119 = por %p117, %p118
      %p120 = scmp.ne.s32.totalorder %s109, %s110
      %p121 = scmp.eq.s32.totalorder %s35, 0
      %p122 = por %p120, %p121
      %p123 = scmp.ne.s32.totalorder %s109, %s110
      %p124 = scmp.eq.s32.totalorder %s36, 1
      %p125 = por %p123, %p124
      %p127 = scmp.ne.s32.totalorder %s110, %s126
      %p128 = scmp.eq.s32.totalorder %s36, 0
      %p129 = por %p127, %p128
      %s131 = sadd.s32 %s130, 1
      %p134 = scmp.eq.s32.totalorder %s30, 1
      %p135 = scmp.ne.s32.totalorder %s130, %s132
      %p136 = scmp.eq.s32.totalorder %s30, 0
      %p137 = por %p135, %p136
      %p138 = scmp.ne.s32.totalorder %s130, %s132
      %p139 = scmp.eq.s32.totalorder %s35, 1
      %p140 = por %p138, %p139
      %p141 = scmp.ne.s32.totalorder %s132, %s133
      %p142 = scmp.eq.s32.totalorder %s35, 0
      %p143 = por %p141, %p142
      %p144 = scmp.ne.s32.totalorder %s132, %s133
      %p145 = scmp.eq.s32.totalorder %s36, 1
      %p146 = por %p144, %p145
      %p148 = scmp.ne.s32.totalorder %s133, %s147
      %p149 = scmp.eq.s32.totalorder %s36, 0
      %p150 = por %p148, %p149
      %s152 = sadd.s32 %s151, 1
      %p155 = scmp.eq.s32.totalorder %s30, 1
      %p156 = scmp.ne.s32.totalorder %s151, %s153
      %p157 = scmp.eq.s32.totalorder %s30, 0
      %p158 = por %p156, %p157
      %p159 = scmp.ne.s32.totalorder %s151, %s153
      %p160 = scmp.eq.s32.totalorder %s35, 1
      %p161 = por %p159, %p160
      %p162 = scmp.ne.s32.totalorder %s153, %s154
      %p163 = scmp.eq.s32.totalorder %s35, 0
      %p164 = por %p162, %p163
      %p165 = scmp.ne.s32.totalorder %s153, %s154
      %p166 = scmp.eq.s32.totalorder %s36, 1
      %p167 = por %p165, %p166
      %p169 = scmp.ne.s32.totalorder %s154, %s168
      %p170 = scmp.eq.s32.totalorder %s36, 0
      %p171 = por %p169, %p170
      %s173 = sadd.s32 %s172, 1
      %p176 = scmp.eq.s32.totalorder %s30, 1
      %p177 = scmp.ne.s32.totalorder %s172, %s174
      %p178 = scmp.eq.s32.totalorder %s30, 0
      %p179 = por %p177, %p178
      %p180 = scmp.ne.s32.totalorder %s172, %s174
      %p181 = scmp.eq.s32.totalorder %s35, 1
      %p182 = por %p180, %p181
      %p183 = scmp.ne.s32.totalorder %s174, %s175
      %p184 = scmp.eq.s32.totalorder %s35, 0
      %p185 = por %p183, %p184
      %p186 = scmp.ne.s32.totalorder %s174, %s175
      %p187 = scmp.eq.s32.totalorder %s36, 1
      %p188 = por %p186, %p187
      %p190 = scmp.ne.s32.totalorder %s175, %s189
      %p191 = scmp.eq.s32.totalorder %s36, 0
      %p192 = por %p190, %p191
      %s194 = sadd.s32 %s193, 1
      %p197 = scmp.eq.s32.totalorder %s30, 1
      %p198 = scmp.ne.s32.totalorder %s193, %s195
      %p199 = scmp.eq.s32.totalorder %s30, 0
      %p200 = por %p198, %p199
      %p201 = scmp.ne.s32.totalorder %s193, %s195
      %p202 = scmp.eq.s32.totalorder %s35, 1
      %p203 = por %p201, %p202
      %p204 = scmp.ne.s32.totalorder %s195, %s196
      %p205 = scmp.eq.s32.totalorder %s35, 0
      %p206 = por %p204, %p205
      %p207 = scmp.ne.s32.totalorder %s195, %s196
      %p208 = scmp.eq.s32.totalorder %s36, 1
      %p209 = por %p207, %p208
      %p211 = scmp.ne.s32.totalorder %s196, %s210
      %p212 = scmp.eq.s32.totalorder %s36, 0
      %p213 = por %p211, %p212
      %s215 = sadd.s32 %s214, 1
      %p218 = scmp.eq.s32.totalorder %s30, 1
      %p219 = scmp.ne.s32.totalorder %s214, %s216
      %p220 = scmp.eq.s32.totalorder %s30, 0
      %p221 = por %p219, %p220
      %p222 = scmp.ne.s32.totalorder %s214, %s216
      %p223 = scmp.eq.s32.totalorder %s35, 1
      %p224 = por %p222, %p223
      %p225 = scmp.ne.s32.totalorder %s216, %s217
      %p226 = scmp.eq.s32.totalorder %s35, 0
      %p227 = por %p225, %p226
      %p228 = scmp.ne.s32.totalorder %s216, %s217
      %p229 = scmp.eq.s32.totalorder %s36, 1
      %p230 = por %p228, %p229
      %p232 = scmp.ne.s32.totalorder %s217, %s231
      %p233 = scmp.eq.s32.totalorder %s36, 0
      %p234 = por %p232, %p233
      %s236 = sadd.s32 %s235, 1
      %p239 = scmp.eq.s32.totalorder %s30, 1
      %p240 = scmp.ne.s32.totalorder %s235, %s237
      %p241 = scmp.eq.s32.totalorder %s30, 0
      %p242 = por %p240, %p241
      %p243 = scmp.ne.s32.totalorder %s235, %s237
      %p244 = scmp.eq.s32.totalorder %s35, 1
      %p245 = por %p243, %p244
      %p246 = scmp.ne.s32.totalorder %s237, %s238
      %p247 = scmp.eq.s32.totalorder %s35, 0
      %p248 = por %p246, %p247
      %p249 = scmp.ne.s32.totalorder %s237, %s238
      %p250 = scmp.eq.s32.totalorder %s36, 1
      %p251 = por %p249, %p250
      %p253 = scmp.ne.s32.totalorder %s238, %s252
      %p254 = scmp.eq.s32.totalorder %s36, 0
      %p255 = por %p253, %p254
      %s257 = sadd.s32 %s256, 1
      %p260 = scmp.eq.s32.totalorder %s30, 1
      %p261 = scmp.ne.s32.totalorder %s256, %s258
      %p262 = scmp.eq.s32.totalorder %s30, 0
      %p263 = por %p261, %p262
      %p264 = scmp.ne.s32.totalorder %s256, %s258
      %p265 = scmp.eq.s32.totalorder %s35, 1
      %p266 = por %p264, %p265
      %p267 = scmp.ne.s32.totalorder %s258, %s259
      %p268 = scmp.eq.s32.totalorder %s35, 0
      %p269 = por %p267, %p268
      %p270 = scmp.ne.s32.totalorder %s258, %s259
      %p271 = scmp.eq.s32.totalorder %s36, 1
      %p272 = por %p270, %p271
      %p274 = scmp.ne.s32.totalorder %s259, %s273
      %p275 = scmp.eq.s32.totalorder %s36, 0
      %p276 = por %p274, %p275
      %s278 = sadd.s32 %s277, 1
      %p281 = scmp.eq.s32.totalorder %s30, 1
      %p282 = scmp.ne.s32.totalorder %s277, %s279
      %p283 = scmp.eq.s32.totalorder %s30, 0
      %p284 = por %p282, %p283
      %p285 = scmp.ne.s32.totalorder %s277, %s279
      %p286 = scmp.eq.s32.totalorder %s35, 1
      %p287 = por %p285, %p286
      %p288 = scmp.ne.s32.totalorder %s279, %s280
      %p289 = scmp.eq.s32.totalorder %s35, 0
      %p290 = por %p288, %p289
      %p291 = scmp.ne.s32.totalorder %s279, %s280
      %p292 = scmp.eq.s32.totalorder %s36, 1
      %p293 = por %p291, %p292
      %p295 = scmp.ne.s32.totalorder %s280, %s294
      %p296 = scmp.eq.s32.totalorder %s36, 0
      %p297 = por %p295, %p296
      %s299 = sadd.s32 %s298, 1
      %p302 = scmp.eq.s32.totalorder %s30, 1
      %p303 = scmp.ne.s32.totalorder %s298, %s300
      %p304 = scmp.eq.s32.totalorder %s30, 0
      %p305 = por %p303, %p304
      %p306 = scmp.ne.s32.totalorder %s298, %s300
      %p307 = scmp.eq.s32.totalorder %s35, 1
      %p308 = por %p306, %p307
      %p309 = scmp.ne.s32.totalorder %s300, %s301
      %p310 = scmp.eq.s32.totalorder %s35, 0
      %p311 = por %p309, %p310
      %p312 = scmp.ne.s32.totalorder %s300, %s301
      %p313 = scmp.eq.s32.totalorder %s36, 1
      %p314 = por %p312, %p313
      %p316 = scmp.ne.s32.totalorder %s301, %s315
      %p317 = scmp.eq.s32.totalorder %s36, 0
      %p318 = por %p316, %p317
      %s320 = sadd.s32 %s319, 1
      %p323 = scmp.eq.s32.totalorder %s30, 1
      %p324 = scmp.ne.s32.totalorder %s319, %s321
      %p325 = scmp.eq.s32.totalorder %s30, 0
      %p326 = por %p324, %p325
      %p327 = scmp.ne.s32.totalorder %s319, %s321
      %p328 = scmp.eq.s32.totalorder %s35, 1
      %p329 = por %p327, %p328
      %p330 = scmp.ne.s32.totalorder %s321, %s322
      %p331 = scmp.eq.s32.totalorder %s35, 0
      %p332 = por %p330, %p331
      %p333 = scmp.ne.s32.totalorder %s321, %s322
      %p334 = scmp.eq.s32.totalorder %s36, 1
      %p335 = por %p333, %p334
      %p337 = scmp.ne.s32.totalorder %s322, %s336
      %p338 = scmp.eq.s32.totalorder %s36, 0
      %p339 = por %p337, %p338
      %s341 = sadd.s32 %s340, 1
      %p344 = scmp.eq.s32.totalorder %s30, 1
      %p345 = scmp.ne.s32.totalorder %s340, %s342
      %p346 = scmp.eq.s32.totalorder %s30, 0
      %p347 = por %p345, %p346
      %p348 = scmp.ne.s32.totalorder %s340, %s342
      %p349 = scmp.eq.s32.totalorder %s35, 1
      %p350 = por %p348, %p349
      %p351 = scmp.ne.s32.totalorder %s342, %s343
      %p352 = scmp.eq.s32.totalorder %s35, 0
      %p353 = por %p351, %p352
      %p354 = scmp.ne.s32.totalorder %s342, %s343
      %p355 = scmp.eq.s32.totalorder %s36, 1
      %p356 = por %p354, %p355
      %p358 = scmp.ne.s32.totalorder %s343, %s357
      %p359 = scmp.eq.s32.totalorder %s36, 0
      %p360 = por %p358, %p359
      %s362 = sadd.s32 %s361, 1
      %p365 = scmp.eq.s32.totalorder %s30, 1
      %p366 = scmp.ne.s32.totalorder %s361, %s363
      %p367 = scmp.eq.s32.totalorder %s30, 0
      %p368 = por %p366, %p367
      %p369 = scmp.ne.s32.totalorder %s361, %s363
      %p370 = scmp.eq.s32.totalorder %s35, 1
      %p371 = por %p369, %p370
      %p372 = scmp.ne.s32.totalorder %s363, %s364
      %p373 = scmp.eq.s32.totalorder %s35, 0
      %p374 = por %p372, %p373
      %p375 = scmp.ne.s32.totalorder %s363, %s364
      %p376 = scmp.eq.s32.totalorder %s36, 1
      %p377 = por %p375, %p376
      %p379 = scmp.ne.s32.totalorder %s364, %s378
      %p380 = scmp.eq.s32.totalorder %s36, 0
      %p381 = por %p379, %p380
      %s383 = sadd.s32 %s382, 1
      %p386 = scmp.eq.s32.totalorder %s30, 1
      %p387 = scmp.ne.s32.totalorder %s382, %s384
      %p388 = scmp.eq.s32.totalorder %s30, 0
      %p389 = por %p387, %p388
      %p390 = scmp.ne.s32.totalorder %s382, %s384
      %p391 = scmp.eq.s32.totalorder %s35, 1
      %p392 = por %p390, %p391
      %p393 = scmp.ne.s32.totalorder %s384, %s385
      %p394 = scmp.eq.s32.totalorder %s35, 0
      %p395 = por %p393, %p394
      %p396 = scmp.ne.s32.totalorder %s384, %s385
      %p397 = scmp.eq.s32.totalorder %s36, 1
      %p398 = por %p396, %p397
      %p400 = scmp.ne.s32.totalorder %s385, %s399
      %p401 = scmp.eq.s32.totalorder %s36, 0
      %p402 = por %p400, %p401
      %s404 = sadd.s32 %s403, 1
      %p407 = scmp.eq.s32.totalorder %s30, 1
      %p408 = scmp.ne.s32.totalorder %s403, %s405
      %p409 = scmp.eq.s32.totalorder %s30, 0
      %p410 = por %p408, %p409
      %p411 = scmp.ne.s32.totalorder %s403, %s405
      %p412 = scmp.eq.s32.totalorder %s35, 1
      %p413 = por %p411, %p412
      %p414 = scmp.ne.s32.totalorder %s405, %s406
      %p415 = scmp.eq.s32.totalorder %s35, 0
      %p416 = por %p414, %p415
      %p417 = scmp.ne.s32.totalorder %s405, %s406
      %p418 = scmp.eq.s32.totalorder %s36, 1
      %p419 = por %p417, %p418
      %p421 = scmp.ne.s32.totalorder %s406, %s420
      %p422 = scmp.eq.s32.totalorder %s36, 0
      %p423 = por %p421, %p422
      %s425 = sadd.s32 %s424, 1
      %p428 = scmp.eq.s32.totalorder %s30, 1
      %p429 = scmp.ne.s32.totalorder %s424, %s426
      %p430 = scmp.eq.s32.totalorder %s30, 0
      %p431 = por %p429, %p430
      %p432 = scmp.ne.s32.totalorder %s424, %s426
      %p433 = scmp.eq.s32.totalorder %s35, 1
      %p434 = por %p432, %p433
      %p435 = scmp.ne.s32.totalorder %s426, %s427
      %p436 = scmp.eq.s32.totalorder %s35, 0
      %p437 = por %p435, %p436
      %p438 = scmp.ne.s32.totalorder %s426, %s427
      %p439 = scmp.eq.s32.totalorder %s36, 1
      %p440 = por %p438, %p439
      %p442 = scmp.ne.s32.totalorder %s427, %s441
      %p443 = scmp.eq.s32.totalorder %s36, 0
      %p444 = por %p442, %p443
      %s446 = sadd.s32 %s445, 1
      %p449 = scmp.eq.s32.totalorder %s30, 1
      %p450 = scmp.ne.s32.totalorder %s445, %s447
      %p451 = scmp.eq.s32.totalorder %s30, 0
      %p452 = por %p450, %p451
      %p453 = scmp.ne.s32.totalorder %s445, %s447
      %p454 = scmp.eq.s32.totalorder %s35, 1
      %p455 = por %p453, %p454
      %p456 = scmp.ne.s32.totalorder %s447, %s448
      %p457 = scmp.eq.s32.totalorder %s35, 0
      %p458 = por %p456, %p457
      %p459 = scmp.ne.s32.totalorder %s447, %s448
      %p460 = scmp.eq.s32.totalorder %s36, 1
      %p461 = por %p459, %p460
      %p463 = scmp.ne.s32.totalorder %s448, %s462
      %p464 = scmp.eq.s32.totalorder %s36, 0
      %p465 = por %p463, %p464
      %s467 = sadd.s32 %s466, 1
      %p470 = scmp.eq.s32.totalorder %s30, 1
      %p471 = scmp.ne.s32.totalorder %s466, %s468
      %p472 = scmp.eq.s32.totalorder %s30, 0
      %p473 = por %p471, %p472
      %p474 = scmp.ne.s32.totalorder %s466, %s468
      %p475 = scmp.eq.s32.totalorder %s35, 1
      %p476 = por %p474, %p475
      %p477 = scmp.ne.s32.totalorder %s468, %s469
      %p478 = scmp.eq.s32.totalorder %s35, 0
      %p479 = por %p477, %p478
      %p480 = scmp.ne.s32.totalorder %s468, %s469
      %p481 = scmp.eq.s32.totalorder %s36, 1
      %p482 = por %p480, %p481
      %p484 = scmp.ne.s32.totalorder %s469, %s483
      %p485 = scmp.eq.s32.totalorder %s36, 0
      %p486 = por %p484, %p485
      %s488 = sadd.s32 %s487, 1
      %p491 = scmp.eq.s32.totalorder %s30, 1
      %p492 = scmp.ne.s32.totalorder %s487, %s489
      %p493 = scmp.eq.s32.totalorder %s30, 0
      %p494 = por %p492, %p493
      %p495 = scmp.ne.s32.totalorder %s487, %s489
      %p496 = scmp.eq.s32.totalorder %s35, 1
      %p497 = por %p495, %p496
      %p498 = scmp.ne.s32.totalorder %s489, %s490
      %p499 = scmp.eq.s32.totalorder %s35, 0
      %p500 = por %p498, %p499
      %p501 = scmp.ne.s32.totalorder %s489, %s490
      %p502 = scmp.eq.s32.totalorder %s36, 1
      %p503 = por %p501, %p502
      %p505 = scmp.ne.s32.totalorder %s490, %s504
      %p506 = scmp.eq.s32.totalorder %s36, 0
      %p507 = por %p505, %p506
      %s508 = ssub.s32 %s37, %s49
      %s509 = ssub.s32 %s38, %s45
      %s510 = sor.u32 %s508, %s509
      %p511 = scmp.eq.s32.totalorder %s510, 0
      %s513 = sadd.s32 %s512, 1
      %s514 = scalar_select %p511, %s512, %s513
      %p517 = pneg %p511
      %p518 = scmp.eq.s32.totalorder %s30, 1
      %p519 = por %p517, %p518
      %p520 = scmp.ne.s32.totalorder %s512, %s515
      %p521 = scmp.eq.s32.totalorder %s30, 0
      %p522 = por %p520, %p521
      %p523 = scmp.ne.s32.totalorder %s512, %s515
      %p524 = scmp.eq.s32.totalorder %s35, 1
      %p525 = por %p523, %p524
      %p526 = scmp.ne.s32.totalorder %s515, %s516
      %p527 = scmp.eq.s32.totalorder %s35, 0
      %p528 = por %p526, %p527
      %p529 = scmp.ne.s32.totalorder %s515, %s516
      %p530 = scmp.eq.s32.totalorder %s36, 1
      %p531 = por %p529, %p530
      %p533 = scmp.ne.s32.totalorder %s516, %s532
      %p534 = scmp.eq.s32.totalorder %s36, 0
      %p535 = por %p533, %p534
      %p536 = scmp.le.s32.totalorder 1, %s30
      %p537 = scmp.lt.s32.totalorder %s30, 3
      %p538 = pnand %p536, %p537
      %p539 = pneg %p538
      // Predicated region
      $region9: #{_decoder_block_impl.1} parent=5 // pred_check
        _
      $region10: #{_decoder_block_impl.1} parent=5 // pred_check_branch
        %541 = sbr.rel (%p538) target = $region12
      $region11: #{_decoder_block_impl.1} parent=5 // pred_region
        %s542 = ssub.s32 %s30, 1
        // Predicated region
        $region13: #{_decoder_block_impl.1} parent=11 // pred_check
          %p543 = pneg %p143
        $region14: #{_decoder_block_impl.1} parent=11 // pred_check_branch
          %545 = sbr.rel (%p543) target = $region16
        $region15: #{_decoder_block_impl.1} parent=11 // pred_region
          _
        $region16: #{_decoder_block_impl.1} parent=11 // pred_fallthru
          _
        // Predicated region
        $region17: #{_decoder_block_impl.1} parent=11 // pred_check
          %p546 = pneg %p164
        $region18: #{_decoder_block_impl.1} parent=11 // pred_check_branch
          %548 = sbr.rel (%p546) target = $region20
        $region19: #{_decoder_block_impl.1} parent=11 // pred_region
          _
        $region20: #{_decoder_block_impl.1} parent=11 // pred_fallthru
          _
        // Predicated region
        $region21: #{_decoder_block_impl.1} parent=11 // pred_check
          %p549 = pneg %p185
        $region22: #{_decoder_block_impl.1} parent=11 // pred_check_branch
          %551 = sbr.rel (%p549) target = $region24
        $region23: #{_decoder_block_impl.1} parent=11 // pred_region
          _
        $region24: #{_decoder_block_impl.1} parent=11 // pred_fallthru
          _
        // Predicated region
        $region25: #{_decoder_block_impl.1} parent=11 // pred_check
          %p552 = pneg %p206
        $region26: #{_decoder_block_impl.1} parent=11 // pred_check_branch
          %554 = sbr.rel (%p552) target = $region28
        $region27: #{_decoder_block_impl.1} parent=11 // pred_region
          _
        $region28: #{_decoder_block_impl.1} parent=11 // pred_fallthru
          _
        // Predicated region
        $region29: #{_decoder_block_impl.1} parent=11 // pred_check
          %p555 = pneg %p227
        $region30: #{_decoder_block_impl.1} parent=11 // pred_check_branch
          %557 = sbr.rel (%p555) target = $region32
        $region31: #{_decoder_block_impl.1} parent=11 // pred_region
          _
        $region32: #{_decoder_block_impl.1} parent=11 // pred_fallthru
          _
        // Predicated region
        $region33: #{_decoder_block_impl.1} parent=11 // pred_check
          %p558 = pneg %p248
        $region34: #{_decoder_block_impl.1} parent=11 // pred_check_branch
          %560 = sbr.rel (%p558) target = $region36
        $region35: #{_decoder_block_impl.1} parent=11 // pred_region
          _
        $region36: #{_decoder_block_impl.1} parent=11 // pred_fallthru
          _
        // Predicated region
        $region37: #{_decoder_block_impl.1} parent=11 // pred_check
          %p561 = pneg %p269
        $region38: #{_decoder_block_impl.1} parent=11 // pred_check_branch
          %563 = sbr.rel (%p561) target = $region40
        $region39: #{_decoder_block_impl.1} parent=11 // pred_region
          _
        $region40: #{_decoder_block_impl.1} parent=11 // pred_fallthru
          _
        // Predicated region
        $region41: #{_decoder_block_impl.1} parent=11 // pred_check
          %p564 = pneg %p290
        $region42: #{_decoder_block_impl.1} parent=11 // pred_check_branch
          %566 = sbr.rel (%p564) target = $region44
        $region43: #{_decoder_block_impl.1} parent=11 // pred_region
          _
        $region44: #{_decoder_block_impl.1} parent=11 // pred_fallthru
          _
        // Predicated region
        $region45: #{_decoder_block_impl.1} parent=11 // pred_check
          %p567 = pneg %p311
        $region46: #{_decoder_block_impl.1} parent=11 // pred_check_branch
          %569 = sbr.rel (%p567) target = $region48
        $region47: #{_decoder_block_impl.1} parent=11 // pred_region
          _
        $region48: #{_decoder_block_impl.1} parent=11 // pred_fallthru
          _
        // Predicated region
        $region49: #{_decoder_block_impl.1} parent=11 // pred_check
          %p570 = pneg %p332
        $region50: #{_decoder_block_impl.1} parent=11 // pred_check_branch
          %572 = sbr.rel (%p570) target = $region52
        $region51: #{_decoder_block_impl.1} parent=11 // pred_region
          _
        $region52: #{_decoder_block_impl.1} parent=11 // pred_fallthru
          _
        // Predicated region
        $region53: #{_decoder_block_impl.1} parent=11 // pred_check
          %p573 = pneg %p353
        $region54: #{_decoder_block_impl.1} parent=11 // pred_check_branch
          %575 = sbr.rel (%p573) target = $region56
        $region55: #{_decoder_block_impl.1} parent=11 // pred_region
          _
        $region56: #{_decoder_block_impl.1} parent=11 // pred_fallthru
          _
        // Predicated region
        $region57: #{_decoder_block_impl.1} parent=11 // pred_check
          %p576 = pneg %p374
        $region58: #{_decoder_block_impl.1} parent=11 // pred_check_branch
          %578 = sbr.rel (%p576) target = $region60
        $region59: #{_decoder_block_impl.1} parent=11 // pred_region
          _
        $region60: #{_decoder_block_impl.1} parent=11 // pred_fallthru
          _
        // Predicated region
        $region61: #{_decoder_block_impl.1} parent=11 // pred_check
          %p579 = pneg %p395
        $region62: #{_decoder_block_impl.1} parent=11 // pred_check_branch
          %581 = sbr.rel (%p579) target = $region64
        $region63: #{_decoder_block_impl.1} parent=11 // pred_region
          _
        $region64: #{_decoder_block_impl.1} parent=11 // pred_fallthru
          _
        // Predicated region
        $region65: #{_decoder_block_impl.1} parent=11 // pred_check
          %p582 = pneg %p416
        $region66: #{_decoder_block_impl.1} parent=11 // pred_check_branch
          %584 = sbr.rel (%p582) target = $region68
        $region67: #{_decoder_block_impl.1} parent=11 // pred_region
          _
        $region68: #{_decoder_block_impl.1} parent=11 // pred_fallthru
          _
        // Predicated region
        $region69: #{_decoder_block_impl.1} parent=11 // pred_check
          %p585 = pneg %p437
        $region70: #{_decoder_block_impl.1} parent=11 // pred_check_branch
          %587 = sbr.rel (%p585) target = $region72
        $region71: #{_decoder_block_impl.1} parent=11 // pred_region
          _
        $region72: #{_decoder_block_impl.1} parent=11 // pred_fallthru
          _
        // Predicated region
        $region73: #{_decoder_block_impl.1} parent=11 // pred_check
          %p588 = pneg %p458
        $region74: #{_decoder_block_impl.1} parent=11 // pred_check_branch
          %590 = sbr.rel (%p588) target = $region76
        $region75: #{_decoder_block_impl.1} parent=11 // pred_region
          _
        $region76: #{_decoder_block_impl.1} parent=11 // pred_fallthru
          _
        // Predicated region
        $region77: #{_decoder_block_impl.1} parent=11 // pred_check
          %p591 = pneg %p479
        $region78: #{_decoder_block_impl.1} parent=11 // pred_check_branch
          %593 = sbr.rel (%p591) target = $region80
        $region79: #{_decoder_block_impl.1} parent=11 // pred_region
          _
        $region80: #{_decoder_block_impl.1} parent=11 // pred_fallthru
          _
        // Predicated region
        $region81: #{_decoder_block_impl.1} parent=11 // pred_check
          %p594 = pneg %p500
        $region82: #{_decoder_block_impl.1} parent=11 // pred_check_branch
          %596 = sbr.rel (%p594) target = $region84
        $region83: #{_decoder_block_impl.1} parent=11 // pred_region
          _
        $region84: #{_decoder_block_impl.1} parent=11 // pred_fallthru
          _
      $region12: #{_decoder_block_impl.1} parent=5 // pred_fallthru
        _
      %p597 = scmp.lt.s32.totalorder %s30, 2
      // Predicated region
      $region85: #{_decoder_block_impl.1} parent=5 // pred_check
        %p598 = pneg %p597
      $region86: #{_decoder_block_impl.1} parent=5 // pred_check_branch
        %600 = sbr.rel (%p598) target = $region88
      $region87: #{_decoder_block_impl.1} parent=5 // pred_region
        // Predicated region
        $region89: #{_decoder_block_impl.1} parent=87 // pred_check
          %p601 = pneg %p64
        $region90: #{_decoder_block_impl.1} parent=87 // pred_check_branch
          %603 = sbr.rel (%p601) target = $region92
        $region91: #{_decoder_block_impl.1} parent=87 // pred_region
          %s604 = smul.u32 2, %s38
          %p605 = scmp.lt.s32.totalorder %s37, 1
          %s606 = scalar_select %p605, %s37, 1
          %p607 = scmp.lt.s32.totalorder %s604, 1
          %s608 = scalar_select %p607, %s604, 1
          %s609 = smul.addr %s608, 2
          %s610 = smul.addr %s606, 4
          %s611 = sadd.s32 %s609, %s610
          %s612 = smul.addr %s611, 8
          %s613 = scalar_lea.vmem %s0, %s612
          %s614 = smul.u32 2, %s38
        $region92: #{_decoder_block_impl.1} parent=87 // pred_fallthru
          _
        // Predicated region
        $region93: #{_decoder_block_impl.1} parent=87 // pred_check
          %p615 = pneg %p90
        $region94: #{_decoder_block_impl.1} parent=87 // pred_check_branch
          %617 = sbr.rel (%p615) target = $region96
        $region95: #{_decoder_block_impl.1} parent=87 // pred_region
          %p618 = scmp.lt.s32.totalorder %s37, 1
          %s619 = scalar_select %p618, %s37, 1
          %s620 = smul.addr %s619, 8
          %s621 = smul.addr %s620, 4
          %s622 = scalar_lea.vmem %s1, %s621
        $region96: #{_decoder_block_impl.1} parent=87 // pred_fallthru
          _
        // Predicated region
        $region97: #{_decoder_block_impl.1} parent=87 // pred_check
          %p623 = pneg %p116
        $region98: #{_decoder_block_impl.1} parent=87 // pred_check_branch
          %625 = sbr.rel (%p623) target = $region100
        $region99: #{_decoder_block_impl.1} parent=87 // pred_region
          %p626 = scmp.lt.s32.totalorder %s37, 1
          %s627 = scalar_select %p626, %s37, 1
          %s628 = smul.addr %s627, 8
          %s629 = smul.addr %s628, 4
          %s630 = scalar_lea.vmem %s2, %s629
        $region100: #{_decoder_block_impl.1} parent=87 // pred_fallthru
          _
      $region88: #{_decoder_block_impl.1} parent=5 // pred_fallthru
        _
      %p631 = scmp.le.s32.totalorder 1, %s30
      %p632 = scmp.lt.s32.totalorder %s30, 3
      %p633 = pnand %p631, %p632
      %p634 = pneg %p633
      // Predicated region
      $region101: #{_decoder_block_impl.1} parent=5 // pred_check
        _
      $region102: #{_decoder_block_impl.1} parent=5 // pred_check_branch
        %636 = sbr.rel (%p633) target = $region104
      $region103: #{_decoder_block_impl.1} parent=5 // pred_region
        %s637 = ssub.s32 %s30, 1
        %s638 = smul.u32 2, %s40
        %p639 = scmp.lt.s32.totalorder %s39, 1
        %s640 = scalar_select %p639, %s39, 1
        %p641 = scmp.lt.s32.totalorder %s638, 1
        %s642 = scalar_select %p641, %s638, 1
        %s643 = smul.addr %s642, 2
        %s644 = smul.addr %s640, 4
        %s645 = sadd.s32 %s643, %s644
        %s646 = smul.addr %s645, 8
        %s647 = scalar_lea.vmem %s0, %s646
        %p648 = pneg %p70
        %p649 = pneg %p67
        %p650 = scmp.lt.s32.totalorder %s39, 1
        %s651 = scalar_select %p650, %s39, 1
        %s652 = smul.addr %s651, 8
        %s653 = smul.addr %s652, 4
        %s654 = scalar_lea.vmem %s1, %s653
        %p655 = pneg %p96
        %p656 = pneg %p93
        %p657 = scmp.lt.s32.totalorder %s39, 1
        %s658 = scalar_select %p657, %s39, 1
        %s659 = smul.addr %s658, 8
        %s660 = smul.addr %s659, 4
        %s661 = scalar_lea.vmem %s2, %s660
        %p662 = pneg %p122
        %p663 = pneg %p119
        %p664 = pneg %p143
        %p665 = pneg %p140
        %p666 = pneg %p164
        %p667 = pneg %p161
        %p668 = pneg %p185
        %p669 = pneg %p182
        %p670 = pneg %p206
        %p671 = pneg %p203
        %p672 = pneg %p227
        %p673 = pneg %p224
        %p674 = pneg %p248
        %p675 = pneg %p245
        %p676 = pneg %p269
        %p677 = pneg %p266
        %p678 = pneg %p290
        %p679 = pneg %p287
        %p680 = pneg %p311
        %p681 = pneg %p308
        %p682 = pneg %p332
        %p683 = pneg %p329
        %p684 = pneg %p353
        %p685 = pneg %p350
        %p686 = pneg %p374
        %p687 = pneg %p371
        %p688 = pneg %p395
        %p689 = pneg %p392
        %p690 = pneg %p416
        %p691 = pneg %p413
        %p692 = pneg %p437
        %p693 = pneg %p434
        %p694 = pneg %p458
        %p695 = pneg %p455
        %p696 = pneg %p479
        %p697 = pneg %p476
        %p698 = pneg %p500
        %p699 = pneg %p497
        %p700 = pneg %p528
        %p701 = pneg %p525
        %s702 = sand.u32 %s515, 1
        %s703 = scalar_lea.sflag [#allocation4], %s702
        %s704 = sand.u32 %s515, 1
        %s705 = smul.addr %s704, 32
        %s706 = scalar_lea.vmem [#allocation3], %s705
        %s707 = smul.u32 2, %s40
        %p708 = scmp.lt.s32.totalorder %s39, 1
        %s709 = scalar_select %p708, %s39, 1
        %p710 = scmp.lt.s32.totalorder %s707, 1
        %s711 = scalar_select %p710, %s707, 1
        %s712 = smul.addr %s711, 2
        %s713 = smul.addr %s709, 4
        %s714 = sadd.s32 %s712, %s713
        %s715 = smul.addr %s714, 8
        %s716 = scalar_lea.vmem %s0, %s715
        %s717 = smul.u32 2, %s40
        %p718 = scmp.lt.s32.totalorder %s39, 1
        %s719 = scalar_select %p718, %s39, 1
        %s720 = smul.addr %s719, 8
        %s721 = smul.addr %s720, 4
        %s722 = scalar_lea.vmem %s1, %s721
        %p723 = scmp.lt.s32.totalorder %s39, 1
        %s724 = scalar_select %p723, %s39, 1
        %s725 = smul.addr %s724, 8
        %s726 = smul.addr %s725, 4
        %s727 = scalar_lea.vmem %s2, %s726
        %s728 = smul.u32 2, %s40
        %v730 = vld [vmem:[%s716] sm:$0xff]
        %v731 = vld [vmem:[%s716 + $0x8] sm:$0xff]
        %v732 = vld [vmem:[%s716 + $0x10] sm:$0xff]
        %v733 = vld [vmem:[%s716 + $0x18] sm:$0xff]
        %s734 = smul.u32 %s40, 16
        %v735 = vadd.f32 %v730, %v731
        %736 = vadd.xlane.f32.xlu0 %v735
        %v737 = vpop.xlane.xlu0 %736
        %v738 = vadd.f32 %v732, %v733
        %739 = vadd.xlane.f32.xlu0 %v738
        %v740 = vpop.xlane.xlu0 %739
        %v741 = vrcp.pop 256.0
        %v742 = vmul.f32 %v737, %v741
        %v743 = vmul.f32 %v740, %v741
        %v744 = vsub.f32 %v730, %v742
        %v745 = vsub.f32 %v731, %v742
        %v746 = vsub.f32 %v732, %v743
        %v747 = vsub.f32 %v733, %v743
        %v748 = vmul.f32 %v744, %v744
        %v749 = vmul.f32 %v745, %v745
        %v750 = vmul.f32 %v746, %v746
        %v751 = vmul.f32 %v747, %v747
        %v752 = vadd.f32 %v748, %v749
        %753 = vadd.xlane.f32.xlu0 %v752
        %v754 = vpop.xlane.xlu0 %753
        %v755 = vadd.f32 %v750, %v751
        %756 = vadd.xlane.f32.xlu0 %v755
        %v757 = vpop.xlane.xlu0 %756
        %v758 = vmul.f32 %v754, %v741
        %v759 = vmul.f32 %v757, %v741
        %v760 = vadd.f32 %v758, 1e-05
        %v761 = vadd.f32 %v759, 1e-05
        %v762 = vrsqrt.pop %v760
        %v763 = vrsqrt.pop %v761
        %v764 = vmul.f32 %v744, %v762
        %v765 = vmul.f32 %v745, %v762
        %v766 = vmul.f32 %v746, %v763
        %v767 = vmul.f32 %v747, %v763
        %v768 = vld [vmem:[%s3] sm:$0x3]
        %v770 = vlaneseq
        %v771 = vshrl.u32 %v770, 7
        %v772 = vsub.s32 0, %v771
        %v773 = vrot.slane %v768, %v772
        %v774 = vlaneseq
        %v775 = vshrl.u32 %v774, 7
        %v776 = vsub.s32 1, %v775
        %v777 = vrot.slane %v768, %v776
        %v780 = vmul.f32 %v764, %v773
        %v781 = vmul.f32 %v765, %v777
        %v782 = vmul.f32 %v766, %v773
        %v783 = vmul.f32 %v767, %v777
        %v784 = vld [vmem:[%s4] sm:$0x3]
        %v786 = vlaneseq
        %v787 = vshrl.u32 %v786, 7
        %v788 = vsub.s32 0, %v787
        %v789 = vrot.slane %v784, %v788
        %v790 = vlaneseq
        %v791 = vshrl.u32 %v790, 7
        %v792 = vsub.s32 1, %v791
        %v793 = vrot.slane %v784, %v792
        %v796 = vadd.f32 %v780, %v789
        %v797 = vadd.f32 %v781, %v793
        %v798 = vadd.f32 %v782, %v789
        %v799 = vadd.f32 %v783, %v793
        %v800 = vpack.c.bf16 %v798, %v796
        %v801 = vpack.c.bf16 %v799, %v797
        %v802 = vld [vmem:[%s5] sm:$0xff]
        %v803 = vld [vmem:[%s5 + $0x8] sm:$0xff]
        %v804 = vld [vmem:[%s5 + $0x10] sm:$0xff]
        %v805 = vld [vmem:[%s5 + $0x18] sm:$0xff]
        %v806 = vld [vmem:[%s5 + $0x20] sm:$0xff]
        %v807 = vld [vmem:[%s5 + $0x28] sm:$0xff]
        %v808 = vld [vmem:[%s5 + $0x30] sm:$0xff]
        %v809 = vld [vmem:[%s5 + $0x38] sm:$0xff]
        %v810 = vld [vmem:[%s5 + $0x40] sm:$0xff]
        %v811 = vld [vmem:[%s5 + $0x48] sm:$0xff]
        %v812 = vld [vmem:[%s5 + $0x50] sm:$0xff]
        %v813 = vld [vmem:[%s5 + $0x58] sm:$0xff]
        %v814 = vld [vmem:[%s5 + $0x60] sm:$0xff]
        %v815 = vld [vmem:[%s5 + $0x68] sm:$0xff]
        %v816 = vld [vmem:[%s5 + $0x70] sm:$0xff]
        %v817 = vld [vmem:[%s5 + $0x78] sm:$0xff]
        %v818 = vld [vmem:[%s5 + $0x80] sm:$0xff]
        %v819 = vld [vmem:[%s5 + $0x88] sm:$0xff]
        %v820 = vld [vmem:[%s5 + $0x90] sm:$0xff]
        %v821 = vld [vmem:[%s5 + $0x98] sm:$0xff]
        %v822 = vld [vmem:[%s5 + $0xa0] sm:$0xff]
        %v823 = vld [vmem:[%s5 + $0xa8] sm:$0xff]
        %v824 = vld [vmem:[%s5 + $0xb0] sm:$0xff]
        %v825 = vld [vmem:[%s5 + $0xb8] sm:$0xff]
        %v826 = vld [vmem:[%s5 + $0xc0] sm:$0xff]
        %v827 = vld [vmem:[%s5 + $0xc8] sm:$0xff]
        %v828 = vld [vmem:[%s5 + $0xd0] sm:$0xff]
        %v829 = vld [vmem:[%s5 + $0xd8] sm:$0xff]
        %v830 = vld [vmem:[%s5 + $0xe0] sm:$0xff]
        %v831 = vld [vmem:[%s5 + $0xe8] sm:$0xff]
        %v832 = vld [vmem:[%s5 + $0xf0] sm:$0xff]
        %v833 = vld [vmem:[%s5 + $0xf8] sm:$0xff]
        %v834 = vld [vmem:[%s6] sm:$0x3]
        %v836 = vlaneseq
        %v837 = vshrl.u32 %v836, 7
        %v838 = vsub.s32 0, %v837
        %v839 = vrot.slane %v834, %v838
        %v840 = vlaneseq
        %v841 = vshrl.u32 %v840, 7
        %v842 = vsub.s32 1, %v841
        %v843 = vrot.slane %v834, %v842
        %v878 = vunpack.c.l.b16 %v802
        %v879 = vunpack.c.h.b16 %v802
        %v880 = vunpack.c.l.b16 %v803
        %v881 = vunpack.c.h.b16 %v803
        %v882 = vunpack.c.l.b16 %v804
        %v883 = vunpack.c.h.b16 %v804
        %v884 = vunpack.c.l.b16 %v805
        %v885 = vunpack.c.h.b16 %v805
        %v886 = vunpack.c.l.b16 %v806
        %v887 = vunpack.c.h.b16 %v806
        %v888 = vunpack.c.l.b16 %v807
        %v889 = vunpack.c.h.b16 %v807
        %v890 = vunpack.c.l.b16 %v808
        %v891 = vunpack.c.h.b16 %v808
        %v892 = vunpack.c.l.b16 %v809
        %v893 = vunpack.c.h.b16 %v809
        %v894 = vunpack.c.l.b16 %v810
        %v895 = vunpack.c.h.b16 %v810
        %v896 = vunpack.c.l.b16 %v811
        %v897 = vunpack.c.h.b16 %v811
        %v898 = vunpack.c.l.b16 %v812
        %v899 = vunpack.c.h.b16 %v812
        %v900 = vunpack.c.l.b16 %v813
        %v901 = vunpack.c.h.b16 %v813
        %v902 = vunpack.c.l.b16 %v814
        %v903 = vunpack.c.h.b16 %v814
        %v904 = vunpack.c.l.b16 %v815
        %v905 = vunpack.c.h.b16 %v815
        %v906 = vunpack.c.l.b16 %v816
        %v907 = vunpack.c.h.b16 %v816
        %v908 = vunpack.c.l.b16 %v817
        %v909 = vunpack.c.h.b16 %v817
        %v910 = vunpack.c.l.b16 %v818
        %v911 = vunpack.c.h.b16 %v818
        %v912 = vunpack.c.l.b16 %v819
        %v913 = vunpack.c.h.b16 %v819
        %v914 = vunpack.c.l.b16 %v820
        %v915 = vunpack.c.h.b16 %v820
        %v916 = vunpack.c.l.b16 %v821
        %v917 = vunpack.c.h.b16 %v821
        %v918 = vunpack.c.l.b16 %v822
        %v919 = vunpack.c.h.b16 %v822
        %v920 = vunpack.c.l.b16 %v823
        %v921 = vunpack.c.h.b16 %v823
        %v922 = vunpack.c.l.b16 %v824
        %v923 = vunpack.c.h.b16 %v824
        %v924 = vunpack.c.l.b16 %v825
        %v925 = vunpack.c.h.b16 %v825
        %v926 = vunpack.c.l.b16 %v826
        %v927 = vunpack.c.h.b16 %v826
        %v928 = vunpack.c.l.b16 %v827
        %v929 = vunpack.c.h.b16 %v827
        %v930 = vunpack.c.l.b16 %v828
        %v931 = vunpack.c.h.b16 %v828
        %v932 = vunpack.c.l.b16 %v829
        %v933 = vunpack.c.h.b16 %v829
        %v934 = vunpack.c.l.b16 %v830
        %v935 = vunpack.c.h.b16 %v830
        %v936 = vunpack.c.l.b16 %v831
        %v937 = vunpack.c.h.b16 %v831
        %v938 = vunpack.c.l.b16 %v832
        %v939 = vunpack.c.h.b16 %v832
        %v940 = vunpack.c.l.b16 %v833
        %v941 = vunpack.c.h.b16 %v833
        %v942 = vpack.c.b16 %v880, %v878
        %v943 = vpack.c.b16 %v881, %v879
        %v944 = vpack.c.b16 %v884, %v882
        %v945 = vpack.c.b16 %v885, %v883
        %v946 = vpack.c.b16 %v888, %v886
        %v947 = vpack.c.b16 %v889, %v887
        %v948 = vpack.c.b16 %v892, %v890
        %v949 = vpack.c.b16 %v893, %v891
        %v950 = vpack.c.b16 %v896, %v894
        %v951 = vpack.c.b16 %v897, %v895
        %v952 = vpack.c.b16 %v900, %v898
        %v953 = vpack.c.b16 %v901, %v899
        %v954 = vpack.c.b16 %v904, %v902
        %v955 = vpack.c.b16 %v905, %v903
        %v956 = vpack.c.b16 %v908, %v906
        %v957 = vpack.c.b16 %v909, %v907
        %v958 = vpack.c.b16 %v912, %v910
        %v959 = vpack.c.b16 %v913, %v911
        %v960 = vpack.c.b16 %v916, %v914
        %v961 = vpack.c.b16 %v917, %v915
        %v962 = vpack.c.b16 %v920, %v918
        %v963 = vpack.c.b16 %v921, %v919
        %v964 = vpack.c.b16 %v924, %v922
        %v965 = vpack.c.b16 %v925, %v923
        %v966 = vpack.c.b16 %v928, %v926
        %v967 = vpack.c.b16 %v929, %v927
        %v968 = vpack.c.b16 %v932, %v930
        %v969 = vpack.c.b16 %v933, %v931
        %v970 = vpack.c.b16 %v936, %v934
        %v971 = vpack.c.b16 %v937, %v935
        %v972 = vpack.c.b16 %v940, %v938
        %v973 = vpack.c.b16 %v941, %v939
        %1006 = vmatprep.subr.bf16.mxu0 %v943
        %1007 = vmatpush1.bf16.msra.mxu0 %v942
        %1008 = vmatprep.subr.bf16.mxu0 %v945
        %1009 = vmatpush1.bf16.msra.mxu0 %v944
        %1010 = vmatprep.subr.bf16.mxu0 %v947
        %1011 = vmatpush1.bf16.msra.mxu0 %v946
        %1012 = vmatprep.subr.bf16.mxu0 %v949
        %1013 = vmatpush1.bf16.msra.mxu0 %v948
        %1014 = vmatprep.subr.bf16.mxu0 %v951
        %1015 = vmatpush1.bf16.msra.mxu0 %v950
        %1016 = vmatprep.subr.bf16.mxu0 %v953
        %1017 = vmatpush1.bf16.msra.mxu0 %v952
        %1018 = vmatprep.subr.bf16.mxu0 %v955
        %1019 = vmatpush1.bf16.msra.mxu0 %v954
        %1020 = vmatprep.subr.bf16.mxu0 %v957
        %1021 = vmatpush1.bf16.msra.mxu0 %v956
        %1022 = vmatprep.subr.bf16.mxu0 %v959
        %1023 = vmatpush1.bf16.msra.mxu0 %v958
        %1024 = vmatprep.subr.bf16.mxu0 %v961
        %1025 = vmatpush1.bf16.msra.mxu0 %v960
        %1026 = vmatprep.subr.bf16.mxu0 %v963
        %1027 = vmatpush1.bf16.msra.mxu0 %v962
        %1028 = vmatprep.subr.bf16.mxu0 %v965
        %1029 = vmatpush1.bf16.msra.mxu0 %v964
        %1030 = vmatprep.subr.bf16.mxu0 %v967
        %1031 = vmatpush1.bf16.msra.mxu0 %v966
        %1032 = vmatprep.subr.bf16.mxu0 %v969
        %1033 = vmatpush1.bf16.msra.mxu0 %v968
        %1034 = vmatprep.subr.bf16.mxu0 %v971
        %1035 = vmatpush1.bf16.msra.mxu0 %v970
        %1036 = vmatprep.subr.bf16.mxu0 %v973
        %1037 = vmatpush1.bf16.msra.mxu0 %v972
        %1038 = vmatprep.mubr.bf16.mxu0 %v801
        %1039 = vmatmul.mubr.bf16.gmra.mrb[0].mxu0 %v800
        %v1040 = vpop.f32.mrb[0].mxu0
        %v1041 = vadd.f32 %v839, %v1040
        %v1042 = vpop.f32.mrb[0].mxu0
        %v1043 = vadd.f32 %v843, %v1042
        %v1044 = vpop.f32.mrb[0].mxu0
        %v1045 = vadd.f32 %v839, %v1044
        %v1046 = vpop.f32.mrb[0].mxu0
        %v1047 = vadd.f32 %v843, %v1046
        %1048 = vdwg.mxu0
        %v1049 = vmul.f32 %v1041, 0.088388346
        %v1050 = vmul.f32 %v1043, 0.088388346
        %v1051 = vmul.f32 %v1045, 0.088388346
        %v1052 = vmul.f32 %v1047, 0.088388346
        %v1053 = vlaneseq
        %v1054 = vshrl.u32 %v1053, 7
        %v1055 = vadd.s32 %v1054, 8
        %v1056 = vstv %s734
        %v1057 = vadd.s32 %v1054, %v1056
        %v1058 = vadd.s32 %v1055, %v1056
        %v1059 = vlaneseq
        %v1060 = vand.u32 %v1059, 127
        %vm1061 = vcmp.le.s32.totalorder %v1060, %v1057
        %vm1062 = vcmp.le.s32.totalorder %v1060, %v1058
        %v1063 = vpack.c.bf16 %v1051, %v1049
        %v1064 = vld [vmem:[%s722] sm:$0xf]
        %v1065 = vld [vmem:[%s722 + $0x10] sm:$0xf]
        %v1066 = vld [vmem:[%s722 + $0x8] sm:$0xf]
        %v1067 = vld [vmem:[%s722 + $0x18] sm:$0xf]
        %v1070 = vunpack.c.l.b16 %v1064
        %v1071 = vunpack.c.l.b16 %v1065
        %v1072 = vpack.c.b16 %v1071, %v1070
        %1074 = vmatprep.subr.bf16.mxu0 0
        %1075 = vmatpush1.bf16.xpose.msra.mxu0 %v1072
        %1076 = vmatprep.subr.bf16.mxu0 0
        %1077 = vmatpush1.bf16.xpose.msra.mxu0 0
        %1078 = vmatprep.subr.bf16.mxu0 0
        %1079 = vmatpush1.bf16.xpose.msra.mxu0 0
        %1080 = vmatprep.subr.bf16.mxu0 0
        %1081 = vmatpush1.bf16.xpose.msra.mxu0 0
        %1082 = vmatprep.subr.bf16.mxu0 0
        %1083 = vmatpush1.bf16.xpose.msra.mxu0 0
        %1084 = vmatprep.subr.bf16.mxu0 0
        %1085 = vmatpush1.bf16.xpose.msra.mxu0 0
        %1086 = vmatprep.subr.bf16.mxu0 0
        %1087 = vmatpush1.bf16.xpose.msra.mxu0 0
        %1088 = vmatprep.subr.bf16.mxu0 0
        %1089 = vmatpush1.bf16.xpose.msra.mxu0 0
        %1090 = vmatprep.subr.bf16.mxu0 0
        %1091 = vmatpush1.bf16.xpose.msra.mxu0 0
        %1092 = vmatprep.subr.bf16.mxu0 0
        %1093 = vmatpush1.bf16.xpose.msra.mxu0 0
        %1094 = vmatprep.subr.bf16.mxu0 0
        %1095 = vmatpush1.bf16.xpose.msra.mxu0 0
        %1096 = vmatprep.subr.bf16.mxu0 0
        %1097 = vmatpush1.bf16.xpose.msra.mxu0 0
        %1098 = vmatprep.subr.bf16.mxu0 0
        %1099 = vmatpush1.bf16.xpose.msra.mxu0 0
        %1100 = vmatprep.subr.bf16.mxu0 0
        %1101 = vmatpush1.bf16.xpose.msra.mxu0 0
        %1102 = vmatprep.subr.bf16.mxu0 0
        %1103 = vmatpush1.bf16.xpose.msra.mxu0 0
        %1104 = vmatprep.subr.bf16.mxu0 0
        %1105 = vmatpush1.bf16.xpose.msra.mxu0 0
        %1106 = vmatprep.mubr.bf16.mxu0 0
        %1107 = vmatmul.mubr.bf16.gmra.mrb[0].mxu0 %v1063
        %v1108 = vpop.f32.mrb[0].mxu0
        %v1109 = vadd.f32 0.0, %v1108
        %v1110 = vpop.f32.mrb[0].mxu0
        %v1111 = vpop.f32.mrb[0].mxu0
        %v1112 = vadd.f32 0.0, %v1111
        %v1113 = vpop.f32.mrb[0].mxu0
        %1114 = vdwg.mxu0
        %v1115 = vsel %vm1061, %v1109, -1e+30
        %v1116 = vsel %vm1062, %v1112, -1e+30
        %vm1117 = vcmask 130048
        %v1118 = vsel %vm1117, %v1115, -inf
        %1119 = vmax.xlane.f32.xlu0 %v1118
        %v1120 = vpop.xlane.xlu0 %1119
        %v1121 = vsel %vm1117, %v1116, -inf
        %1122 = vmax.xlane.f32.xlu0 %v1121
        %v1123 = vpop.xlane.xlu0 %1122
        %v1124 = vsub.f32 %v1115, %v1120
        %v1125 = vsub.f32 %v1116, %v1123
        %v1126 = vmul.f32 %v1124, 1.442695
        %v1127 = vpow.pop %v1126
        %v1128 = vmul.f32 %v1125, 1.442695
        %v1129 = vpow.pop %v1128
        %v1130 = vsel %vm1117, %v1127, 0.0
        %1131 = vadd.xlane.f32.xlu0 %v1130
        %v1132 = vpop.xlane.xlu0 %1131
        %v1133 = vsel %vm1117, %v1129, 0.0
        %1134 = vadd.xlane.f32.xlu0 %v1133
        %v1135 = vpop.xlane.xlu0 %1134
        %v1136 = vrcp.pop %v1132
        %v1137 = vrcp.pop %v1135
        %v1138 = vmul.f32 %v1127, %v1136
        %v1139 = vmul.f32 %v1129, %v1137
        %v1140 = vpack.c.bf16 %v1139, %v1138
        %v1143 = vunpack.c.l.b16 %v1066
        %v1144 = vunpack.c.l.b16 %v1067
        %v1145 = vpack.c.b16 %v1144, %v1143
        %v1148 = vsel %vm1117, %v1140, 0
        %1150 = vmatprep.subr.bf16.mxu0 0
        %1151 = vmatpush1.bf16.msra.mxu0 %v1145
        %1152 = vmatprep.subr.bf16.mxu0 0
        %1153 = vmatpush1.bf16.msra.mxu0 0
        %1154 = vmatprep.subr.bf16.mxu0 0
        %1155 = vmatpush1.bf16.msra.mxu0 0
        %1156 = vmatprep.subr.bf16.mxu0 0
        %1157 = vmatpush1.bf16.msra.mxu0 0
        %1158 = vmatprep.subr.bf16.mxu0 0
        %1159 = vmatpush1.bf16.msra.mxu0 0
        %1160 = vmatprep.subr.bf16.mxu0 0
        %1161 = vmatpush1.bf16.msra.mxu0 0
        %1162 = vmatprep.subr.bf16.mxu0 0
        %1163 = vmatpush1.bf16.msra.mxu0 0
        %1164 = vmatprep.subr.bf16.mxu0 0
        %1165 = vmatpush1.bf16.msra.mxu0 0
        %1166 = vmatprep.subr.bf16.mxu0 0
        %1167 = vmatpush1.bf16.msra.mxu0 0
        %1168 = vmatprep.subr.bf16.mxu0 0
        %1169 = vmatpush1.bf16.msra.mxu0 0
        %1170 = vmatprep.subr.bf16.mxu0 0
        %1171 = vmatpush1.bf16.msra.mxu0 0
        %1172 = vmatprep.subr.bf16.mxu0 0
        %1173 = vmatpush1.bf16.msra.mxu0 0
        %1174 = vmatprep.subr.bf16.mxu0 0
        %1175 = vmatpush1.bf16.msra.mxu0 0
        %1176 = vmatprep.subr.bf16.mxu0 0
        %1177 = vmatpush1.bf16.msra.mxu0 0
        %1178 = vmatprep.subr.bf16.mxu0 0
        %1179 = vmatpush1.bf16.msra.mxu0 0
        %1180 = vmatprep.subr.bf16.mxu0 0
        %1181 = vmatpush1.bf16.msra.mxu0 0
        %1182 = vmatprep.mubr.bf16.mxu0 0
        %1183 = vmatmul.mubr.bf16.gmra.mrb[0].mxu0 %v1148
        %v1184 = vpop.f32.mrb[0].mxu0
        %v1185 = vadd.f32 0.0, %v1184
        %v1186 = vpop.f32.mrb[0].mxu0
        %v1187 = vpop.f32.mrb[0].mxu0
        %v1188 = vadd.f32 0.0, %v1187
        %v1189 = vpop.f32.mrb[0].mxu0
        %1190 = vdwg.mxu0
        %v1191 = vpack.c.bf16 %v1188, %v1185
        %1192 = vst [vmem:[#allocation2] sm:$0xff] %v1191
        %v1193 = vpack.c.bf16 %v1052, %v1050
        %v1194 = vld [vmem:[%s722 + $0x4] sm:$0xf]
        %v1195 = vld [vmem:[%s722 + $0x14] sm:$0xf]
        %v1196 = vld [vmem:[%s722 + $0xc] sm:$0xf]
        %v1197 = vld [vmem:[%s722 + $0x1c] sm:$0xf]
        %v1200 = vunpack.c.l.b16 %v1194
        %v1201 = vunpack.c.l.b16 %v1195
        %v1202 = vpack.c.b16 %v1201, %v1200
        %1204 = vmatprep.subr.bf16.mxu0 0
        %1205 = vmatpush1.bf16.xpose.msra.mxu0 %v1202
        %1206 = vmatprep.subr.bf16.mxu0 0
        %1207 = vmatpush1.bf16.xpose.msra.mxu0 0
        %1208 = vmatprep.subr.bf16.mxu0 0
        %1209 = vmatpush1.bf16.xpose.msra.mxu0 0
        %1210 = vmatprep.subr.bf16.mxu0 0
        %1211 = vmatpush1.bf16.xpose.msra.mxu0 0
        %1212 = vmatprep.subr.bf16.mxu0 0
        %1213 = vmatpush1.bf16.xpose.msra.mxu0 0
        %1214 = vmatprep.subr.bf16.mxu0 0
        %1215 = vmatpush1.bf16.xpose.msra.mxu0 0
        %1216 = vmatprep.subr.bf16.mxu0 0
        %1217 = vmatpush1.bf16.xpose.msra.mxu0 0
        %1218 = vmatprep.subr.bf16.mxu0 0
        %1219 = vmatpush1.bf16.xpose.msra.mxu0 0
        %1220 = vmatprep.subr.bf16.mxu0 0
        %1221 = vmatpush1.bf16.xpose.msra.mxu0 0
        %1222 = vmatprep.subr.bf16.mxu0 0
        %1223 = vmatpush1.bf16.xpose.msra.mxu0 0
        %1224 = vmatprep.subr.bf16.mxu0 0
        %1225 = vmatpush1.bf16.xpose.msra.mxu0 0
        %1226 = vmatprep.subr.bf16.mxu0 0
        %1227 = vmatpush1.bf16.xpose.msra.mxu0 0
        %1228 = vmatprep.subr.bf16.mxu0 0
        %1229 = vmatpush1.bf16.xpose.msra.mxu0 0
        %1230 = vmatprep.subr.bf16.mxu0 0
        %1231 = vmatpush1.bf16.xpose.msra.mxu0 0
        %1232 = vmatprep.subr.bf16.mxu0 0
        %1233 = vmatpush1.bf16.xpose.msra.mxu0 0
        %1234 = vmatprep.subr.bf16.mxu0 0
        %1235 = vmatpush1.bf16.xpose.msra.mxu0 0
        %1236 = vmatprep.mubr.bf16.mxu0 0
        %1237 = vmatmul.mubr.bf16.gmra.mrb[0].mxu0 %v1193
        %v1238 = vpop.f32.mrb[0].mxu0
        %v1239 = vadd.f32 0.0, %v1238
        %v1240 = vpop.f32.mrb[0].mxu0
        %v1241 = vpop.f32.mrb[0].mxu0
        %v1242 = vadd.f32 0.0, %v1241
        %v1243 = vpop.f32.mrb[0].mxu0
        %1244 = vdwg.mxu0
        %v1245 = vsel %vm1061, %v1239, -1e+30
        %v1246 = vsel %vm1062, %v1242, -1e+30
        %v1247 = vsel %vm1117, %v1245, -inf
        %1248 = vmax.xlane.f32.xlu0 %v1247
        %v1249 = vpop.xlane.xlu0 %1248
        %v1250 = vsel %vm1117, %v1246, -inf
        %1251 = vmax.xlane.f32.xlu0 %v1250
        %v1252 = vpop.xlane.xlu0 %1251
        %v1253 = vsub.f32 %v1245, %v1249
        %v1254 = vsub.f32 %v1246, %v1252
        %v1255 = vmul.f32 %v1253, 1.442695
        %v1256 = vpow.pop %v1255
        %v1257 = vmul.f32 %v1254, 1.442695
        %v1258 = vpow.pop %v1257
        %v1259 = vsel %vm1117, %v1256, 0.0
        %1260 = vadd.xlane.f32.xlu0 %v1259
        %v1261 = vpop.xlane.xlu0 %1260
        %v1262 = vsel %vm1117, %v1258, 0.0
        %1263 = vadd.xlane.f32.xlu0 %v1262
        %v1264 = vpop.xlane.xlu0 %1263
        %v1265 = vrcp.pop %v1261
        %v1266 = vrcp.pop %v1264
        %v1267 = vmul.f32 %v1256, %v1265
        %v1268 = vmul.f32 %v1258, %v1266
        %v1269 = vpack.c.bf16 %v1268, %v1267
        %v1272 = vunpack.c.l.b16 %v1196
        %v1273 = vunpack.c.l.b16 %v1197
        %v1274 = vpack.c.b16 %v1273, %v1272
        %v1277 = vsel %vm1117, %v1269, 0
        %1279 = vmatprep.subr.bf16.mxu0 0
        %1280 = vmatpush1.bf16.msra.mxu0 %v1274
        %1281 = vmatprep.subr.bf16.mxu0 0
        %1282 = vmatpush1.bf16.msra.mxu0 0
        %1283 = vmatprep.subr.bf16.mxu0 0
        %1284 = vmatpush1.bf16.msra.mxu0 0
        %1285 = vmatprep.subr.bf16.mxu0 0
        %1286 = vmatpush1.bf16.msra.mxu0 0
        %1287 = vmatprep.subr.bf16.mxu0 0
        %1288 = vmatpush1.bf16.msra.mxu0 0
        %1289 = vmatprep.subr.bf16.mxu0 0
        %1290 = vmatpush1.bf16.msra.mxu0 0
        %1291 = vmatprep.subr.bf16.mxu0 0
        %1292 = vmatpush1.bf16.msra.mxu0 0
        %1293 = vmatprep.subr.bf16.mxu0 0
        %1294 = vmatpush1.bf16.msra.mxu0 0
        %1295 = vmatprep.subr.bf16.mxu0 0
        %1296 = vmatpush1.bf16.msra.mxu0 0
        %1297 = vmatprep.subr.bf16.mxu0 0
        %1298 = vmatpush1.bf16.msra.mxu0 0
        %1299 = vmatprep.subr.bf16.mxu0 0
        %1300 = vmatpush1.bf16.msra.mxu0 0
        %1301 = vmatprep.subr.bf16.mxu0 0
        %1302 = vmatpush1.bf16.msra.mxu0 0
        %1303 = vmatprep.subr.bf16.mxu0 0
        %1304 = vmatpush1.bf16.msra.mxu0 0
        %1305 = vmatprep.subr.bf16.mxu0 0
        %1306 = vmatpush1.bf16.msra.mxu0 0
        %1307 = vmatprep.subr.bf16.mxu0 0
        %1308 = vmatpush1.bf16.msra.mxu0 0
        %1309 = vmatprep.subr.bf16.mxu0 0
        %1310 = vmatpush1.bf16.msra.mxu0 0
        %1311 = vmatprep.mubr.bf16.mxu0 0
        %1312 = vmatmul.mubr.bf16.gmra.mrb[0].mxu0 %v1277
        %v1313 = vpop.f32.mrb[0].mxu0
        %v1314 = vadd.f32 0.0, %v1313
        %v1315 = vpop.f32.mrb[0].mxu0
        %v1316 = vpop.f32.mrb[0].mxu0
        %v1317 = vadd.f32 0.0, %v1316
        %v1318 = vpop.f32.mrb[0].mxu0
        %1319 = vdwg.mxu0
        %v1320 = vpack.c.bf16 %v1317, %v1314
        %1321 = vst [vmem:[#allocation2 + $0x8] sm:$0xff] %v1320
        %v1322 = vld [vmem:[#allocation2] sm:$0xff]
        %v1323 = vld [vmem:[#allocation2 + $0x8] sm:$0xff]
        %v1324 = vld [vmem:[%s7] sm:$0xff]
        %v1325 = vld [vmem:[%s7 + $0x8] sm:$0xff]
        %v1326 = vld [vmem:[%s7 + $0x10] sm:$0xff]
        %v1327 = vld [vmem:[%s7 + $0x18] sm:$0xff]
        %v1328 = vld [vmem:[%s7 + $0x20] sm:$0xff]
        %v1329 = vld [vmem:[%s7 + $0x28] sm:$0xff]
        %v1330 = vld [vmem:[%s7 + $0x30] sm:$0xff]
        %v1331 = vld [vmem:[%s7 + $0x38] sm:$0xff]
        %v1332 = vld [vmem:[%s7 + $0x40] sm:$0xff]
        %v1333 = vld [vmem:[%s7 + $0x48] sm:$0xff]
        %v1334 = vld [vmem:[%s7 + $0x50] sm:$0xff]
        %v1335 = vld [vmem:[%s7 + $0x58] sm:$0xff]
        %v1336 = vld [vmem:[%s7 + $0x60] sm:$0xff]
        %v1337 = vld [vmem:[%s7 + $0x68] sm:$0xff]
        %v1338 = vld [vmem:[%s7 + $0x70] sm:$0xff]
        %v1339 = vld [vmem:[%s7 + $0x78] sm:$0xff]
        %v1340 = vld [vmem:[%s7 + $0x80] sm:$0xff]
        %v1341 = vld [vmem:[%s7 + $0x88] sm:$0xff]
        %v1342 = vld [vmem:[%s7 + $0x90] sm:$0xff]
        %v1343 = vld [vmem:[%s7 + $0x98] sm:$0xff]
        %v1344 = vld [vmem:[%s7 + $0xa0] sm:$0xff]
        %v1345 = vld [vmem:[%s7 + $0xa8] sm:$0xff]
        %v1346 = vld [vmem:[%s7 + $0xb0] sm:$0xff]
        %v1347 = vld [vmem:[%s7 + $0xb8] sm:$0xff]
        %v1348 = vld [vmem:[%s7 + $0xc0] sm:$0xff]
        %v1349 = vld [vmem:[%s7 + $0xc8] sm:$0xff]
        %v1350 = vld [vmem:[%s7 + $0xd0] sm:$0xff]
        %v1351 = vld [vmem:[%s7 + $0xd8] sm:$0xff]
        %v1352 = vld [vmem:[%s7 + $0xe0] sm:$0xff]
        %v1353 = vld [vmem:[%s7 + $0xe8] sm:$0xff]
        %v1354 = vld [vmem:[%s7 + $0xf0] sm:$0xff]
        %v1355 = vld [vmem:[%s7 + $0xf8] sm:$0xff]
        %v1356 = vld [vmem:[%s8] sm:$0x3]
        %v1358 = vlaneseq
        %v1359 = vshrl.u32 %v1358, 7
        %v1360 = vsub.s32 0, %v1359
        %v1361 = vrot.slane %v1356, %v1360
        %v1362 = vlaneseq
        %v1363 = vshrl.u32 %v1362, 7
        %v1364 = vsub.s32 1, %v1363
        %v1365 = vrot.slane %v1356, %v1364
        %v1400 = vunpack.c.l.b16 %v1324
        %v1401 = vunpack.c.h.b16 %v1324
        %v1402 = vunpack.c.l.b16 %v1325
        %v1403 = vunpack.c.h.b16 %v1325
        %v1404 = vunpack.c.l.b16 %v1326
        %v1405 = vunpack.c.h.b16 %v1326
        %v1406 = vunpack.c.l.b16 %v1327
        %v1407 = vunpack.c.h.b16 %v1327
        %v1408 = vunpack.c.l.b16 %v1328
        %v1409 = vunpack.c.h.b16 %v1328
        %v1410 = vunpack.c.l.b16 %v1329
        %v1411 = vunpack.c.h.b16 %v1329
        %v1412 = vunpack.c.l.b16 %v1330
        %v1413 = vunpack.c.h.b16 %v1330
        %v1414 = vunpack.c.l.b16 %v1331
        %v1415 = vunpack.c.h.b16 %v1331
        %v1416 = vunpack.c.l.b16 %v1332
        %v1417 = vunpack.c.h.b16 %v1332
        %v1418 = vunpack.c.l.b16 %v1333
        %v1419 = vunpack.c.h.b16 %v1333
        %v1420 = vunpack.c.l.b16 %v1334
        %v1421 = vunpack.c.h.b16 %v1334
        %v1422 = vunpack.c.l.b16 %v1335
        %v1423 = vunpack.c.h.b16 %v1335
        %v1424 = vunpack.c.l.b16 %v1336
        %v1425 = vunpack.c.h.b16 %v1336
        %v1426 = vunpack.c.l.b16 %v1337
        %v1427 = vunpack.c.h.b16 %v1337
        %v1428 = vunpack.c.l.b16 %v1338
        %v1429 = vunpack.c.h.b16 %v1338
        %v1430 = vunpack.c.l.b16 %v1339
        %v1431 = vunpack.c.h.b16 %v1339
        %v1432 = vunpack.c.l.b16 %v1340
        %v1433 = vunpack.c.h.b16 %v1340
        %v1434 = vunpack.c.l.b16 %v1341
        %v1435 = vunpack.c.h.b16 %v1341
        %v1436 = vunpack.c.l.b16 %v1342
        %v1437 = vunpack.c.h.b16 %v1342
        %v1438 = vunpack.c.l.b16 %v1343
        %v1439 = vunpack.c.h.b16 %v1343
        %v1440 = vunpack.c.l.b16 %v1344
        %v1441 = vunpack.c.h.b16 %v1344
        %v1442 = vunpack.c.l.b16 %v1345
        %v1443 = vunpack.c.h.b16 %v1345
        %v1444 = vunpack.c.l.b16 %v1346
        %v1445 = vunpack.c.h.b16 %v1346
        %v1446 = vunpack.c.l.b16 %v1347
        %v1447 = vunpack.c.h.b16 %v1347
        %v1448 = vunpack.c.l.b16 %v1348
        %v1449 = vunpack.c.h.b16 %v1348
        %v1450 = vunpack.c.l.b16 %v1349
        %v1451 = vunpack.c.h.b16 %v1349
        %v1452 = vunpack.c.l.b16 %v1350
        %v1453 = vunpack.c.h.b16 %v1350
        %v1454 = vunpack.c.l.b16 %v1351
        %v1455 = vunpack.c.h.b16 %v1351
        %v1456 = vunpack.c.l.b16 %v1352
        %v1457 = vunpack.c.h.b16 %v1352
        %v1458 = vunpack.c.l.b16 %v1353
        %v1459 = vunpack.c.h.b16 %v1353
        %v1460 = vunpack.c.l.b16 %v1354
        %v1461 = vunpack.c.h.b16 %v1354
        %v1462 = vunpack.c.l.b16 %v1355
        %v1463 = vunpack.c.h.b16 %v1355
        %v1464 = vpack.c.b16 %v1402, %v1400
        %v1465 = vpack.c.b16 %v1403, %v1401
        %v1466 = vpack.c.b16 %v1406, %v1404
        %v1467 = vpack.c.b16 %v1407, %v1405
        %v1468 = vpack.c.b16 %v1410, %v1408
        %v1469 = vpack.c.b16 %v1411, %v1409
        %v1470 = vpack.c.b16 %v1414, %v1412
        %v1471 = vpack.c.b16 %v1415, %v1413
        %v1472 = vpack.c.b16 %v1418, %v1416
        %v1473 = vpack.c.b16 %v1419, %v1417
        %v1474 = vpack.c.b16 %v1422, %v1420
        %v1475 = vpack.c.b16 %v1423, %v1421
        %v1476 = vpack.c.b16 %v1426, %v1424
        %v1477 = vpack.c.b16 %v1427, %v1425
        %v1478 = vpack.c.b16 %v1430, %v1428
        %v1479 = vpack.c.b16 %v1431, %v1429
        %v1480 = vpack.c.b16 %v1434, %v1432
        %v1481 = vpack.c.b16 %v1435, %v1433
        %v1482 = vpack.c.b16 %v1438, %v1436
        %v1483 = vpack.c.b16 %v1439, %v1437
        %v1484 = vpack.c.b16 %v1442, %v1440
        %v1485 = vpack.c.b16 %v1443, %v1441
        %v1486 = vpack.c.b16 %v1446, %v1444
        %v1487 = vpack.c.b16 %v1447, %v1445
        %v1488 = vpack.c.b16 %v1450, %v1448
        %v1489 = vpack.c.b16 %v1451, %v1449
        %v1490 = vpack.c.b16 %v1454, %v1452
        %v1491 = vpack.c.b16 %v1455, %v1453
        %v1492 = vpack.c.b16 %v1458, %v1456
        %v1493 = vpack.c.b16 %v1459, %v1457
        %v1494 = vpack.c.b16 %v1462, %v1460
        %v1495 = vpack.c.b16 %v1463, %v1461
        %1528 = vmatprep.subr.bf16.mxu0 %v1465
        %1529 = vmatpush1.bf16.msra.mxu0 %v1464
        %1530 = vmatprep.subr.bf16.mxu0 %v1467
        %1531 = vmatpush1.bf16.msra.mxu0 %v1466
        %1532 = vmatprep.subr.bf16.mxu0 %v1469
        %1533 = vmatpush1.bf16.msra.mxu0 %v1468
        %1534 = vmatprep.subr.bf16.mxu0 %v1471
        %1535 = vmatpush1.bf16.msra.mxu0 %v1470
        %1536 = vmatprep.subr.bf16.mxu0 %v1473
        %1537 = vmatpush1.bf16.msra.mxu0 %v1472
        %1538 = vmatprep.subr.bf16.mxu0 %v1475
        %1539 = vmatpush1.bf16.msra.mxu0 %v1474
        %1540 = vmatprep.subr.bf16.mxu0 %v1477
        %1541 = vmatpush1.bf16.msra.mxu0 %v1476
        %1542 = vmatprep.subr.bf16.mxu0 %v1479
        %1543 = vmatpush1.bf16.msra.mxu0 %v1478
        %1544 = vmatprep.subr.bf16.mxu0 %v1481
        %1545 = vmatpush1.bf16.msra.mxu0 %v1480
        %1546 = vmatprep.subr.bf16.mxu0 %v1483
        %1547 = vmatpush1.bf16.msra.mxu0 %v1482
        %1548 = vmatprep.subr.bf16.mxu0 %v1485
        %1549 = vmatpush1.bf16.msra.mxu0 %v1484
        %1550 = vmatprep.subr.bf16.mxu0 %v1487
        %1551 = vmatpush1.bf16.msra.mxu0 %v1486
        %1552 = vmatprep.subr.bf16.mxu0 %v1489
        %1553 = vmatpush1.bf16.msra.mxu0 %v1488
        %1554 = vmatprep.subr.bf16.mxu0 %v1491
        %1555 = vmatpush1.bf16.msra.mxu0 %v1490
        %1556 = vmatprep.subr.bf16.mxu0 %v1493
        %1557 = vmatpush1.bf16.msra.mxu0 %v1492
        %1558 = vmatprep.subr.bf16.mxu0 %v1495
        %1559 = vmatpush1.bf16.msra.mxu0 %v1494
        %1560 = vmatprep.mubr.bf16.mxu0 %v1323
        %1561 = vmatmul.mubr.bf16.gmra.mrb[0].mxu0 %v1322
        %v1562 = vpop.f32.mrb[0].mxu0
        %v1563 = vadd.f32 %v1361, %v1562
        %v1564 = vpop.f32.mrb[0].mxu0
        %v1565 = vadd.f32 %v1365, %v1564
        %v1566 = vpop.f32.mrb[0].mxu0
        %v1567 = vadd.f32 %v1361, %v1566
        %v1568 = vpop.f32.mrb[0].mxu0
        %v1569 = vadd.f32 %v1365, %v1568
        %1570 = vdwg.mxu0
        %v1571 = vadd.f32 %v730, %v1563
        %v1572 = vadd.f32 %v731, %v1565
        %v1573 = vadd.f32 %v732, %v1567
        %v1574 = vadd.f32 %v733, %v1569
        %v1575 = vadd.f32 %v1571, %v1572
        %1576 = vadd.xlane.f32.xlu0 %v1575
        %v1577 = vpop.xlane.xlu0 %1576
        %v1578 = vadd.f32 %v1573, %v1574
        %1579 = vadd.xlane.f32.xlu0 %v1578
        %v1580 = vpop.xlane.xlu0 %1579
        %v1581 = vmul.f32 %v1577, %v741
        %v1582 = vmul.f32 %v1580, %v741
        %v1583 = vsub.f32 %v1571, %v1581
        %v1584 = vsub.f32 %v1572, %v1581
        %v1585 = vsub.f32 %v1573, %v1582
        %v1586 = vsub.f32 %v1574, %v1582
        %v1587 = vmul.f32 %v1583, %v1583
        %v1588 = vmul.f32 %v1584, %v1584
        %v1589 = vmul.f32 %v1585, %v1585
        %v1590 = vmul.f32 %v1586, %v1586
        %v1591 = vadd.f32 %v1587, %v1588
        %1592 = vadd.xlane.f32.xlu0 %v1591
        %v1593 = vpop.xlane.xlu0 %1592
        %v1594 = vadd.f32 %v1589, %v1590
        %1595 = vadd.xlane.f32.xlu0 %v1594
        %v1596 = vpop.xlane.xlu0 %1595
        %v1597 = vmul.f32 %v1593, %v741
        %v1598 = vmul.f32 %v1596, %v741
        %v1599 = vadd.f32 %v1597, 1e-05
        %v1600 = vadd.f32 %v1598, 1e-05
        %v1601 = vrsqrt.pop %v1599
        %v1602 = vrsqrt.pop %v1600
        %v1603 = vmul.f32 %v1583, %v1601
        %v1604 = vmul.f32 %v1584, %v1601
        %v1605 = vmul.f32 %v1585, %v1602
        %v1606 = vmul.f32 %v1586, %v1602
        %v1607 = vld [vmem:[%s9] sm:$0x3]
        %v1609 = vlaneseq
        %v1610 = vshrl.u32 %v1609, 7
        %v1611 = vsub.s32 0, %v1610
        %v1612 = vrot.slane %v1607, %v1611
        %v1613 = vlaneseq
        %v1614 = vshrl.u32 %v1613, 7
        %v1615 = vsub.s32 1, %v1614
        %v1616 = vrot.slane %v1607, %v1615
        %v1619 = vmul.f32 %v1603, %v1612
        %v1620 = vmul.f32 %v1604, %v1616
        %v1621 = vmul.f32 %v1605, %v1612
        %v1622 = vmul.f32 %v1606, %v1616
        %v1623 = vld [vmem:[%s10] sm:$0x3]
        %v1625 = vlaneseq
        %v1626 = vshrl.u32 %v1625, 7
        %v1627 = vsub.s32 0, %v1626
        %v1628 = vrot.slane %v1623, %v1627
        %v1629 = vlaneseq
        %v1630 = vshrl.u32 %v1629, 7
        %v1631 = vsub.s32 1, %v1630
        %v1632 = vrot.slane %v1623, %v1631
        %v1635 = vadd.f32 %v1619, %v1628
        %v1636 = vadd.f32 %v1620, %v1632
        %v1637 = vadd.f32 %v1621, %v1628
        %v1638 = vadd.f32 %v1622, %v1632
        %v1639 = vpack.c.bf16 %v1637, %v1635
        %v1640 = vpack.c.bf16 %v1638, %v1636
        %v1641 = vld [vmem:[%s11] sm:$0xff]
        %v1642 = vld [vmem:[%s11 + $0x8] sm:$0xff]
        %v1643 = vld [vmem:[%s11 + $0x10] sm:$0xff]
        %v1644 = vld [vmem:[%s11 + $0x18] sm:$0xff]
        %v1645 = vld [vmem:[%s11 + $0x20] sm:$0xff]
        %v1646 = vld [vmem:[%s11 + $0x28] sm:$0xff]
        %v1647 = vld [vmem:[%s11 + $0x30] sm:$0xff]
        %v1648 = vld [vmem:[%s11 + $0x38] sm:$0xff]
        %v1649 = vld [vmem:[%s11 + $0x40] sm:$0xff]
        %v1650 = vld [vmem:[%s11 + $0x48] sm:$0xff]
        %v1651 = vld [vmem:[%s11 + $0x50] sm:$0xff]
        %v1652 = vld [vmem:[%s11 + $0x58] sm:$0xff]
        %v1653 = vld [vmem:[%s11 + $0x60] sm:$0xff]
        %v1654 = vld [vmem:[%s11 + $0x68] sm:$0xff]
        %v1655 = vld [vmem:[%s11 + $0x70] sm:$0xff]
        %v1656 = vld [vmem:[%s11 + $0x78] sm:$0xff]
        %v1657 = vld [vmem:[%s11 + $0x80] sm:$0xff]
        %v1658 = vld [vmem:[%s11 + $0x88] sm:$0xff]
        %v1659 = vld [vmem:[%s11 + $0x90] sm:$0xff]
        %v1660 = vld [vmem:[%s11 + $0x98] sm:$0xff]
        %v1661 = vld [vmem:[%s11 + $0xa0] sm:$0xff]
        %v1662 = vld [vmem:[%s11 + $0xa8] sm:$0xff]
        %v1663 = vld [vmem:[%s11 + $0xb0] sm:$0xff]
        %v1664 = vld [vmem:[%s11 + $0xb8] sm:$0xff]
        %v1665 = vld [vmem:[%s11 + $0xc0] sm:$0xff]
        %v1666 = vld [vmem:[%s11 + $0xc8] sm:$0xff]
        %v1667 = vld [vmem:[%s11 + $0xd0] sm:$0xff]
        %v1668 = vld [vmem:[%s11 + $0xd8] sm:$0xff]
        %v1669 = vld [vmem:[%s11 + $0xe0] sm:$0xff]
        %v1670 = vld [vmem:[%s11 + $0xe8] sm:$0xff]
        %v1671 = vld [vmem:[%s11 + $0xf0] sm:$0xff]
        %v1672 = vld [vmem:[%s11 + $0xf8] sm:$0xff]
        %v1673 = vld [vmem:[%s12] sm:$0x3]
        %v1675 = vlaneseq
        %v1676 = vshrl.u32 %v1675, 7
        %v1677 = vsub.s32 0, %v1676
        %v1678 = vrot.slane %v1673, %v1677
        %v1679 = vlaneseq
        %v1680 = vshrl.u32 %v1679, 7
        %v1681 = vsub.s32 1, %v1680
        %v1682 = vrot.slane %v1673, %v1681
        %v1717 = vunpack.c.l.b16 %v1641
        %v1718 = vunpack.c.h.b16 %v1641
        %v1719 = vunpack.c.l.b16 %v1642
        %v1720 = vunpack.c.h.b16 %v1642
        %v1721 = vunpack.c.l.b16 %v1643
        %v1722 = vunpack.c.h.b16 %v1643
        %v1723 = vunpack.c.l.b16 %v1644
        %v1724 = vunpack.c.h.b16 %v1644
        %v1725 = vunpack.c.l.b16 %v1645
        %v1726 = vunpack.c.h.b16 %v1645
        %v1727 = vunpack.c.l.b16 %v1646
        %v1728 = vunpack.c.h.b16 %v1646
        %v1729 = vunpack.c.l.b16 %v1647
        %v1730 = vunpack.c.h.b16 %v1647
        %v1731 = vunpack.c.l.b16 %v1648
        %v1732 = vunpack.c.h.b16 %v1648
        %v1733 = vunpack.c.l.b16 %v1649
        %v1734 = vunpack.c.h.b16 %v1649
        %v1735 = vunpack.c.l.b16 %v1650
        %v1736 = vunpack.c.h.b16 %v1650
        %v1737 = vunpack.c.l.b16 %v1651
        %v1738 = vunpack.c.h.b16 %v1651
        %v1739 = vunpack.c.l.b16 %v1652
        %v1740 = vunpack.c.h.b16 %v1652
        %v1741 = vunpack.c.l.b16 %v1653
        %v1742 = vunpack.c.h.b16 %v1653
        %v1743 = vunpack.c.l.b16 %v1654
        %v1744 = vunpack.c.h.b16 %v1654
        %v1745 = vunpack.c.l.b16 %v1655
        %v1746 = vunpack.c.h.b16 %v1655
        %v1747 = vunpack.c.l.b16 %v1656
        %v1748 = vunpack.c.h.b16 %v1656
        %v1749 = vunpack.c.l.b16 %v1657
        %v1750 = vunpack.c.h.b16 %v1657
        %v1751 = vunpack.c.l.b16 %v1658
        %v1752 = vunpack.c.h.b16 %v1658
        %v1753 = vunpack.c.l.b16 %v1659
        %v1754 = vunpack.c.h.b16 %v1659
        %v1755 = vunpack.c.l.b16 %v1660
        %v1756 = vunpack.c.h.b16 %v1660
        %v1757 = vunpack.c.l.b16 %v1661
        %v1758 = vunpack.c.h.b16 %v1661
        %v1759 = vunpack.c.l.b16 %v1662
        %v1760 = vunpack.c.h.b16 %v1662
        %v1761 = vunpack.c.l.b16 %v1663
        %v1762 = vunpack.c.h.b16 %v1663
        %v1763 = vunpack.c.l.b16 %v1664
        %v1764 = vunpack.c.h.b16 %v1664
        %v1765 = vunpack.c.l.b16 %v1665
        %v1766 = vunpack.c.h.b16 %v1665
        %v1767 = vunpack.c.l.b16 %v1666
        %v1768 = vunpack.c.h.b16 %v1666
        %v1769 = vunpack.c.l.b16 %v1667
        %v1770 = vunpack.c.h.b16 %v1667
        %v1771 = vunpack.c.l.b16 %v1668
        %v1772 = vunpack.c.h.b16 %v1668
        %v1773 = vunpack.c.l.b16 %v1669
        %v1774 = vunpack.c.h.b16 %v1669
        %v1775 = vunpack.c.l.b16 %v1670
        %v1776 = vunpack.c.h.b16 %v1670
        %v1777 = vunpack.c.l.b16 %v1671
        %v1778 = vunpack.c.h.b16 %v1671
        %v1779 = vunpack.c.l.b16 %v1672
        %v1780 = vunpack.c.h.b16 %v1672
        %v1781 = vpack.c.b16 %v1719, %v1717
        %v1782 = vpack.c.b16 %v1720, %v1718
        %v1783 = vpack.c.b16 %v1723, %v1721
        %v1784 = vpack.c.b16 %v1724, %v1722
        %v1785 = vpack.c.b16 %v1727, %v1725
        %v1786 = vpack.c.b16 %v1728, %v1726
        %v1787 = vpack.c.b16 %v1731, %v1729
        %v1788 = vpack.c.b16 %v1732, %v1730
        %v1789 = vpack.c.b16 %v1735, %v1733
        %v1790 = vpack.c.b16 %v1736, %v1734
        %v1791 = vpack.c.b16 %v1739, %v1737
        %v1792 = vpack.c.b16 %v1740, %v1738
        %v1793 = vpack.c.b16 %v1743, %v1741
        %v1794 = vpack.c.b16 %v1744, %v1742
        %v1795 = vpack.c.b16 %v1747, %v1745
        %v1796 = vpack.c.b16 %v1748, %v1746
        %v1797 = vpack.c.b16 %v1751, %v1749
        %v1798 = vpack.c.b16 %v1752, %v1750
        %v1799 = vpack.c.b16 %v1755, %v1753
        %v1800 = vpack.c.b16 %v1756, %v1754
        %v1801 = vpack.c.b16 %v1759, %v1757
        %v1802 = vpack.c.b16 %v1760, %v1758
        %v1803 = vpack.c.b16 %v1763, %v1761
        %v1804 = vpack.c.b16 %v1764, %v1762
        %v1805 = vpack.c.b16 %v1767, %v1765
        %v1806 = vpack.c.b16 %v1768, %v1766
        %v1807 = vpack.c.b16 %v1771, %v1769
        %v1808 = vpack.c.b16 %v1772, %v1770
        %v1809 = vpack.c.b16 %v1775, %v1773
        %v1810 = vpack.c.b16 %v1776, %v1774
        %v1811 = vpack.c.b16 %v1779, %v1777
        %v1812 = vpack.c.b16 %v1780, %v1778
        %1845 = vmatprep.subr.bf16.mxu0 %v1782
        %1846 = vmatpush1.bf16.msra.mxu0 %v1781
        %1847 = vmatprep.subr.bf16.mxu0 %v1784
        %1848 = vmatpush1.bf16.msra.mxu0 %v1783
        %1849 = vmatprep.subr.bf16.mxu0 %v1786
        %1850 = vmatpush1.bf16.msra.mxu0 %v1785
        %1851 = vmatprep.subr.bf16.mxu0 %v1788
        %1852 = vmatpush1.bf16.msra.mxu0 %v1787
        %1853 = vmatprep.subr.bf16.mxu0 %v1790
        %1854 = vmatpush1.bf16.msra.mxu0 %v1789
        %1855 = vmatprep.subr.bf16.mxu0 %v1792
        %1856 = vmatpush1.bf16.msra.mxu0 %v1791
        %1857 = vmatprep.subr.bf16.mxu0 %v1794
        %1858 = vmatpush1.bf16.msra.mxu0 %v1793
        %1859 = vmatprep.subr.bf16.mxu0 %v1796
        %1860 = vmatpush1.bf16.msra.mxu0 %v1795
        %1861 = vmatprep.subr.bf16.mxu0 %v1798
        %1862 = vmatpush1.bf16.msra.mxu0 %v1797
        %1863 = vmatprep.subr.bf16.mxu0 %v1800
        %1864 = vmatpush1.bf16.msra.mxu0 %v1799
        %1865 = vmatprep.subr.bf16.mxu0 %v1802
        %1866 = vmatpush1.bf16.msra.mxu0 %v1801
        %1867 = vmatprep.subr.bf16.mxu0 %v1804
        %1868 = vmatpush1.bf16.msra.mxu0 %v1803
        %1869 = vmatprep.subr.bf16.mxu0 %v1806
        %1870 = vmatpush1.bf16.msra.mxu0 %v1805
        %1871 = vmatprep.subr.bf16.mxu0 %v1808
        %1872 = vmatpush1.bf16.msra.mxu0 %v1807
        %1873 = vmatprep.subr.bf16.mxu0 %v1810
        %1874 = vmatpush1.bf16.msra.mxu0 %v1809
        %1875 = vmatprep.subr.bf16.mxu0 %v1812
        %1876 = vmatpush1.bf16.msra.mxu0 %v1811
        %1877 = vmatprep.mubr.bf16.mxu0 %v1640
        %1878 = vmatmul.mubr.bf16.gmra.mrb[0].mxu0 %v1639
        %v1879 = vpop.f32.mrb[0].mxu0
        %v1880 = vadd.f32 %v1678, %v1879
        %v1881 = vpop.f32.mrb[0].mxu0
        %v1882 = vadd.f32 %v1682, %v1881
        %v1883 = vpop.f32.mrb[0].mxu0
        %v1884 = vadd.f32 %v1678, %v1883
        %v1885 = vpop.f32.mrb[0].mxu0
        %v1886 = vadd.f32 %v1682, %v1885
        %1887 = vdwg.mxu0
        %v1888 = vmul.f32 %v1880, 0.088388346
        %v1889 = vmul.f32 %v1882, 0.088388346
        %v1890 = vmul.f32 %v1884, 0.088388346
        %v1891 = vmul.f32 %v1886, 0.088388346
        %vm1892 = vcmp.lt.s32.totalorder %v1060, 12
        %v1893 = vpack.c.bf16 %v1890, %v1888
        %v1894 = vld [vmem:[%s727] sm:$0xf]
        %v1895 = vld [vmem:[%s727 + $0x10] sm:$0xf]
        %v1896 = vld [vmem:[%s727 + $0x8] sm:$0xf]
        %v1897 = vld [vmem:[%s727 + $0x18] sm:$0xf]
        %v1900 = vunpack.c.l.b16 %v1894
        %v1901 = vunpack.c.l.b16 %v1895
        %v1902 = vpack.c.b16 %v1901, %v1900
        %1904 = vmatprep.subr.bf16.mxu0 0
        %1905 = vmatpush1.bf16.xpose.msra.mxu0 %v1902
        %1906 = vmatprep.subr.bf16.mxu0 0
        %1907 = vmatpush1.bf16.xpose.msra.mxu0 0
        %1908 = vmatprep.subr.bf16.mxu0 0
        %1909 = vmatpush1.bf16.xpose.msra.mxu0 0
        %1910 = vmatprep.subr.bf16.mxu0 0
        %1911 = vmatpush1.bf16.xpose.msra.mxu0 0
        %1912 = vmatprep.subr.bf16.mxu0 0
        %1913 = vmatpush1.bf16.xpose.msra.mxu0 0
        %1914 = vmatprep.subr.bf16.mxu0 0
        %1915 = vmatpush1.bf16.xpose.msra.mxu0 0
        %1916 = vmatprep.subr.bf16.mxu0 0
        %1917 = vmatpush1.bf16.xpose.msra.mxu0 0
        %1918 = vmatprep.subr.bf16.mxu0 0
        %1919 = vmatpush1.bf16.xpose.msra.mxu0 0
        %1920 = vmatprep.subr.bf16.mxu0 0
        %1921 = vmatpush1.bf16.xpose.msra.mxu0 0
        %1922 = vmatprep.subr.bf16.mxu0 0
        %1923 = vmatpush1.bf16.xpose.msra.mxu0 0
        %1924 = vmatprep.subr.bf16.mxu0 0
        %1925 = vmatpush1.bf16.xpose.msra.mxu0 0
        %1926 = vmatprep.subr.bf16.mxu0 0
        %1927 = vmatpush1.bf16.xpose.msra.mxu0 0
        %1928 = vmatprep.subr.bf16.mxu0 0
        %1929 = vmatpush1.bf16.xpose.msra.mxu0 0
        %1930 = vmatprep.subr.bf16.mxu0 0
        %1931 = vmatpush1.bf16.xpose.msra.mxu0 0
        %1932 = vmatprep.subr.bf16.mxu0 0
        %1933 = vmatpush1.bf16.xpose.msra.mxu0 0
        %1934 = vmatprep.subr.bf16.mxu0 0
        %1935 = vmatpush1.bf16.xpose.msra.mxu0 0
        %1936 = vmatprep.mubr.bf16.mxu0 0
        %1937 = vmatmul.mubr.bf16.gmra.mrb[0].mxu0 %v1893
        %v1938 = vpop.f32.mrb[0].mxu0
        %v1939 = vadd.f32 0.0, %v1938
        %v1940 = vpop.f32.mrb[0].mxu0
        %v1941 = vpop.f32.mrb[0].mxu0
        %v1942 = vadd.f32 0.0, %v1941
        %v1943 = vpop.f32.mrb[0].mxu0
        %1944 = vdwg.mxu0
        %v1945 = vsel %vm1892, %v1939, -1e+30
        %v1946 = vsel %vm1892, %v1942, -1e+30
        %v1947 = vsel %vm1117, %v1945, -inf
        %1948 = vmax.xlane.f32.xlu0 %v1947
        %v1949 = vpop.xlane.xlu0 %1948
        %v1950 = vsel %vm1117, %v1946, -inf
        %1951 = vmax.xlane.f32.xlu0 %v1950
        %v1952 = vpop.xlane.xlu0 %1951
        %v1953 = vsub.f32 %v1945, %v1949
        %v1954 = vsub.f32 %v1946, %v1952
        %v1955 = vmul.f32 %v1953, 1.442695
        %v1956 = vpow.pop %v1955
        %v1957 = vmul.f32 %v1954, 1.442695
        %v1958 = vpow.pop %v1957
        %v1959 = vsel %vm1117, %v1956, 0.0
        %1960 = vadd.xlane.f32.xlu0 %v1959
        %v1961 = vpop.xlane.xlu0 %1960
        %v1962 = vsel %vm1117, %v1958, 0.0
        %1963 = vadd.xlane.f32.xlu0 %v1962
        %v1964 = vpop.xlane.xlu0 %1963
        %v1965 = vrcp.pop %v1961
        %v1966 = vrcp.pop %v1964
        %v1967 = vmul.f32 %v1956, %v1965
        %v1968 = vmul.f32 %v1958, %v1966
        %v1969 = vpack.c.bf16 %v1968, %v1967
        %v1972 = vunpack.c.l.b16 %v1896
        %v1973 = vunpack.c.l.b16 %v1897
        %v1974 = vpack.c.b16 %v1973, %v1972
        %v1977 = vsel %vm1117, %v1969, 0
        %1979 = vmatprep.subr.bf16.mxu0 0
        %1980 = vmatpush1.bf16.msra.mxu0 %v1974
        %1981 = vmatprep.subr.bf16.mxu0 0
        %1982 = vmatpush1.bf16.msra.mxu0 0
        %1983 = vmatprep.subr.bf16.mxu0 0
        %1984 = vmatpush1.bf16.msra.mxu0 0
        %1985 = vmatprep.subr.bf16.mxu0 0
        %1986 = vmatpush1.bf16.msra.mxu0 0
        %1987 = vmatprep.subr.bf16.mxu0 0
        %1988 = vmatpush1.bf16.msra.mxu0 0
        %1989 = vmatprep.subr.bf16.mxu0 0
        %1990 = vmatpush1.bf16.msra.mxu0 0
        %1991 = vmatprep.subr.bf16.mxu0 0
        %1992 = vmatpush1.bf16.msra.mxu0 0
        %1993 = vmatprep.subr.bf16.mxu0 0
        %1994 = vmatpush1.bf16.msra.mxu0 0
        %1995 = vmatprep.subr.bf16.mxu0 0
        %1996 = vmatpush1.bf16.msra.mxu0 0
        %1997 = vmatprep.subr.bf16.mxu0 0
        %1998 = vmatpush1.bf16.msra.mxu0 0
        %1999 = vmatprep.subr.bf16.mxu0 0
        %2000 = vmatpush1.bf16.msra.mxu0 0
        %2001 = vmatprep.subr.bf16.mxu0 0
        %2002 = vmatpush1.bf16.msra.mxu0 0
        %2003 = vmatprep.subr.bf16.mxu0 0
        %2004 = vmatpush1.bf16.msra.mxu0 0
        %2005 = vmatprep.subr.bf16.mxu0 0
        %2006 = vmatpush1.bf16.msra.mxu0 0
        %2007 = vmatprep.subr.bf16.mxu0 0
        %2008 = vmatpush1.bf16.msra.mxu0 0
        %2009 = vmatprep.subr.bf16.mxu0 0
        %2010 = vmatpush1.bf16.msra.mxu0 0
        %2011 = vmatprep.mubr.bf16.mxu0 0
        %2012 = vmatmul.mubr.bf16.gmra.mrb[0].mxu0 %v1977
        %v2013 = vpop.f32.mrb[0].mxu0
        %v2014 = vadd.f32 0.0, %v2013
        %v2015 = vpop.f32.mrb[0].mxu0
        %v2016 = vpop.f32.mrb[0].mxu0
        %v2017 = vadd.f32 0.0, %v2016
        %v2018 = vpop.f32.mrb[0].mxu0
        %2019 = vdwg.mxu0
        %v2020 = vpack.c.bf16 %v2017, %v2014
        %2021 = vst [vmem:[#allocation2] sm:$0xff] %v2020
        %v2022 = vpack.c.bf16 %v1891, %v1889
        %v2023 = vld [vmem:[%s727 + $0x4] sm:$0xf]
        %v2024 = vld [vmem:[%s727 + $0x14] sm:$0xf]
        %v2025 = vld [vmem:[%s727 + $0xc] sm:$0xf]
        %v2026 = vld [vmem:[%s727 + $0x1c] sm:$0xf]
        %v2029 = vunpack.c.l.b16 %v2023
        %v2030 = vunpack.c.l.b16 %v2024
        %v2031 = vpack.c.b16 %v2030, %v2029
        %2033 = vmatprep.subr.bf16.mxu0 0
        %2034 = vmatpush1.bf16.xpose.msra.mxu0 %v2031
        %2035 = vmatprep.subr.bf16.mxu0 0
        %2036 = vmatpush1.bf16.xpose.msra.mxu0 0
        %2037 = vmatprep.subr.bf16.mxu0 0
        %2038 = vmatpush1.bf16.xpose.msra.mxu0 0
        %2039 = vmatprep.subr.bf16.mxu0 0
        %2040 = vmatpush1.bf16.xpose.msra.mxu0 0
        %2041 = vmatprep.subr.bf16.mxu0 0
        %2042 = vmatpush1.bf16.xpose.msra.mxu0 0
        %2043 = vmatprep.subr.bf16.mxu0 0
        %2044 = vmatpush1.bf16.xpose.msra.mxu0 0
        %2045 = vmatprep.subr.bf16.mxu0 0
        %2046 = vmatpush1.bf16.xpose.msra.mxu0 0
        %2047 = vmatprep.subr.bf16.mxu0 0
        %2048 = vmatpush1.bf16.xpose.msra.mxu0 0
        %2049 = vmatprep.subr.bf16.mxu0 0
        %2050 = vmatpush1.bf16.xpose.msra.mxu0 0
        %2051 = vmatprep.subr.bf16.mxu0 0
        %2052 = vmatpush1.bf16.xpose.msra.mxu0 0
        %2053 = vmatprep.subr.bf16.mxu0 0
        %2054 = vmatpush1.bf16.xpose.msra.mxu0 0
        %2055 = vmatprep.subr.bf16.mxu0 0
        %2056 = vmatpush1.bf16.xpose.msra.mxu0 0
        %2057 = vmatprep.subr.bf16.mxu0 0
        %2058 = vmatpush1.bf16.xpose.msra.mxu0 0
        %2059 = vmatprep.subr.bf16.mxu0 0
        %2060 = vmatpush1.bf16.xpose.msra.mxu0 0
        %2061 = vmatprep.subr.bf16.mxu0 0
        %2062 = vmatpush1.bf16.xpose.msra.mxu0 0
        %2063 = vmatprep.subr.bf16.mxu0 0
        %2064 = vmatpush1.bf16.xpose.msra.mxu0 0
        %2065 = vmatprep.mubr.bf16.mxu0 0
        %2066 = vmatmul.mubr.bf16.gmra.mrb[0].mxu0 %v2022
        %v2067 = vpop.f32.mrb[0].mxu0
        %v2068 = vadd.f32 0.0, %v2067
        %v2069 = vpop.f32.mrb[0].mxu0
        %v2070 = vpop.f32.mrb[0].mxu0
        %v2071 = vadd.f32 0.0, %v2070
        %v2072 = vpop.f32.mrb[0].mxu0
        %2073 = vdwg.mxu0
        %v2074 = vsel %vm1892, %v2068, -1e+30
        %v2075 = vsel %vm1892, %v2071, -1e+30
        %v2076 = vsel %vm1117, %v2074, -inf
        %2077 = vmax.xlane.f32.xlu0 %v2076
        %v2078 = vpop.xlane.xlu0 %2077
        %v2079 = vsel %vm1117, %v2075, -inf
        %2080 = vmax.xlane.f32.xlu0 %v2079
        %v2081 = vpop.xlane.xlu0 %2080
        %v2082 = vsub.f32 %v2074, %v2078
        %v2083 = vsub.f32 %v2075, %v2081
        %v2084 = vmul.f32 %v2082, 1.442695
        %v2085 = vpow.pop %v2084
        %v2086 = vmul.f32 %v2083, 1.442695
        %v2087 = vpow.pop %v2086
        %v2088 = vsel %vm1117, %v2085, 0.0
        %2089 = vadd.xlane.f32.xlu0 %v2088
        %v2090 = vpop.xlane.xlu0 %2089
        %v2091 = vsel %vm1117, %v2087, 0.0
        %2092 = vadd.xlane.f32.xlu0 %v2091
        %v2093 = vpop.xlane.xlu0 %2092
        %v2094 = vrcp.pop %v2090
        %v2095 = vrcp.pop %v2093
        %v2096 = vmul.f32 %v2085, %v2094
        %v2097 = vmul.f32 %v2087, %v2095
        %v2098 = vpack.c.bf16 %v2097, %v2096
        %v2101 = vunpack.c.l.b16 %v2025
        %v2102 = vunpack.c.l.b16 %v2026
        %v2103 = vpack.c.b16 %v2102, %v2101
        %v2106 = vsel %vm1117, %v2098, 0
        %2108 = vmatprep.subr.bf16.mxu0 0
        %2109 = vmatpush1.bf16.msra.mxu0 %v2103
        %2110 = vmatprep.subr.bf16.mxu0 0
        %2111 = vmatpush1.bf16.msra.mxu0 0
        %2112 = vmatprep.subr.bf16.mxu0 0
        %2113 = vmatpush1.bf16.msra.mxu0 0
        %2114 = vmatprep.subr.bf16.mxu0 0
        %2115 = vmatpush1.bf16.msra.mxu0 0
        %2116 = vmatprep.subr.bf16.mxu0 0
        %2117 = vmatpush1.bf16.msra.mxu0 0
        %2118 = vmatprep.subr.bf16.mxu0 0
        %2119 = vmatpush1.bf16.msra.mxu0 0
        %2120 = vmatprep.subr.bf16.mxu0 0
        %2121 = vmatpush1.bf16.msra.mxu0 0
        %2122 = vmatprep.subr.bf16.mxu0 0
        %2123 = vmatpush1.bf16.msra.mxu0 0
        %2124 = vmatprep.subr.bf16.mxu0 0
        %2125 = vmatpush1.bf16.msra.mxu0 0
        %2126 = vmatprep.subr.bf16.mxu0 0
        %2127 = vmatpush1.bf16.msra.mxu0 0
        %2128 = vmatprep.subr.bf16.mxu0 0
        %2129 = vmatpush1.bf16.msra.mxu0 0
        %2130 = vmatprep.subr.bf16.mxu0 0
        %2131 = vmatpush1.bf16.msra.mxu0 0
        %2132 = vmatprep.subr.bf16.mxu0 0
        %2133 = vmatpush1.bf16.msra.mxu0 0
        %2134 = vmatprep.subr.bf16.mxu0 0
        %2135 = vmatpush1.bf16.msra.mxu0 0
        %2136 = vmatprep.subr.bf16.mxu0 0
        %2137 = vmatpush1.bf16.msra.mxu0 0
        %2138 = vmatprep.subr.bf16.mxu0 0
        %2139 = vmatpush1.bf16.msra.mxu0 0
        %2140 = vmatprep.mubr.bf16.mxu0 0
        %2141 = vmatmul.mubr.bf16.gmra.mrb[0].mxu0 %v2106
        %v2142 = vpop.f32.mrb[0].mxu0
        %v2143 = vadd.f32 0.0, %v2142
        %v2144 = vpop.f32.mrb[0].mxu0
        %v2145 = vpop.f32.mrb[0].mxu0
        %v2146 = vadd.f32 0.0, %v2145
        %v2147 = vpop.f32.mrb[0].mxu0
        %2148 = vdwg.mxu0
        %v2149 = vpack.c.bf16 %v2146, %v2143
        %2150 = vst [vmem:[#allocation2 + $0x8] sm:$0xff] %v2149
        %v2151 = vld [vmem:[#allocation2] sm:$0xff]
        %v2152 = vld [vmem:[#allocation2 + $0x8] sm:$0xff]
        %v2153 = vld [vmem:[%s13] sm:$0xff]
        %v2154 = vld [vmem:[%s13 + $0x8] sm:$0xff]
        %v2155 = vld [vmem:[%s13 + $0x10] sm:$0xff]
        %v2156 = vld [vmem:[%s13 + $0x18] sm:$0xff]
        %v2157 = vld [vmem:[%s13 + $0x20] sm:$0xff]
        %v2158 = vld [vmem:[%s13 + $0x28] sm:$0xff]
        %v2159 = vld [vmem:[%s13 + $0x30] sm:$0xff]
        %v2160 = vld [vmem:[%s13 + $0x38] sm:$0xff]
        %v2161 = vld [vmem:[%s13 + $0x40] sm:$0xff]
        %v2162 = vld [vmem:[%s13 + $0x48] sm:$0xff]
        %v2163 = vld [vmem:[%s13 + $0x50] sm:$0xff]
        %v2164 = vld [vmem:[%s13 + $0x58] sm:$0xff]
        %v2165 = vld [vmem:[%s13 + $0x60] sm:$0xff]
        %v2166 = vld [vmem:[%s13 + $0x68] sm:$0xff]
        %v2167 = vld [vmem:[%s13 + $0x70] sm:$0xff]
        %v2168 = vld [vmem:[%s13 + $0x78] sm:$0xff]
        %v2169 = vld [vmem:[%s13 + $0x80] sm:$0xff]
        %v2170 = vld [vmem:[%s13 + $0x88] sm:$0xff]
        %v2171 = vld [vmem:[%s13 + $0x90] sm:$0xff]
        %v2172 = vld [vmem:[%s13 + $0x98] sm:$0xff]
        %v2173 = vld [vmem:[%s13 + $0xa0] sm:$0xff]
        %v2174 = vld [vmem:[%s13 + $0xa8] sm:$0xff]
        %v2175 = vld [vmem:[%s13 + $0xb0] sm:$0xff]
        %v2176 = vld [vmem:[%s13 + $0xb8] sm:$0xff]
        %v2177 = vld [vmem:[%s13 + $0xc0] sm:$0xff]
        %v2178 = vld [vmem:[%s13 + $0xc8] sm:$0xff]
        %v2179 = vld [vmem:[%s13 + $0xd0] sm:$0xff]
        %v2180 = vld [vmem:[%s13 + $0xd8] sm:$0xff]
        %v2181 = vld [vmem:[%s13 + $0xe0] sm:$0xff]
        %v2182 = vld [vmem:[%s13 + $0xe8] sm:$0xff]
        %v2183 = vld [vmem:[%s13 + $0xf0] sm:$0xff]
        %v2184 = vld [vmem:[%s13 + $0xf8] sm:$0xff]
        %v2185 = vld [vmem:[%s14] sm:$0x3]
        %v2187 = vlaneseq
        %v2188 = vshrl.u32 %v2187, 7
        %v2189 = vsub.s32 0, %v2188
        %v2190 = vrot.slane %v2185, %v2189
        %v2191 = vlaneseq
        %v2192 = vshrl.u32 %v2191, 7
        %v2193 = vsub.s32 1, %v2192
        %v2194 = vrot.slane %v2185, %v2193
        %v2229 = vunpack.c.l.b16 %v2153
        %v2230 = vunpack.c.h.b16 %v2153
        %v2231 = vunpack.c.l.b16 %v2154
        %v2232 = vunpack.c.h.b16 %v2154
        %v2233 = vunpack.c.l.b16 %v2155
        %v2234 = vunpack.c.h.b16 %v2155
        %v2235 = vunpack.c.l.b16 %v2156
        %v2236 = vunpack.c.h.b16 %v2156
        %v2237 = vunpack.c.l.b16 %v2157
        %v2238 = vunpack.c.h.b16 %v2157
        %v2239 = vunpack.c.l.b16 %v2158
        %v2240 = vunpack.c.h.b16 %v2158
        %v2241 = vunpack.c.l.b16 %v2159
        %v2242 = vunpack.c.h.b16 %v2159
        %v2243 = vunpack.c.l.b16 %v2160
        %v2244 = vunpack.c.h.b16 %v2160
        %v2245 = vunpack.c.l.b16 %v2161
        %v2246 = vunpack.c.h.b16 %v2161
        %v2247 = vunpack.c.l.b16 %v2162
        %v2248 = vunpack.c.h.b16 %v2162
        %v2249 = vunpack.c.l.b16 %v2163
        %v2250 = vunpack.c.h.b16 %v2163
        %v2251 = vunpack.c.l.b16 %v2164
        %v2252 = vunpack.c.h.b16 %v2164
        %v2253 = vunpack.c.l.b16 %v2165
        %v2254 = vunpack.c.h.b16 %v2165
        %v2255 = vunpack.c.l.b16 %v2166
        %v2256 = vunpack.c.h.b16 %v2166
        %v2257 = vunpack.c.l.b16 %v2167
        %v2258 = vunpack.c.h.b16 %v2167
        %v2259 = vunpack.c.l.b16 %v2168
        %v2260 = vunpack.c.h.b16 %v2168
        %v2261 = vunpack.c.l.b16 %v2169
        %v2262 = vunpack.c.h.b16 %v2169
        %v2263 = vunpack.c.l.b16 %v2170
        %v2264 = vunpack.c.h.b16 %v2170
        %v2265 = vunpack.c.l.b16 %v2171
        %v2266 = vunpack.c.h.b16 %v2171
        %v2267 = vunpack.c.l.b16 %v2172
        %v2268 = vunpack.c.h.b16 %v2172
        %v2269 = vunpack.c.l.b16 %v2173
        %v2270 = vunpack.c.h.b16 %v2173
        %v2271 = vunpack.c.l.b16 %v2174
        %v2272 = vunpack.c.h.b16 %v2174
        %v2273 = vunpack.c.l.b16 %v2175
        %v2274 = vunpack.c.h.b16 %v2175
        %v2275 = vunpack.c.l.b16 %v2176
        %v2276 = vunpack.c.h.b16 %v2176
        %v2277 = vunpack.c.l.b16 %v2177
        %v2278 = vunpack.c.h.b16 %v2177
        %v2279 = vunpack.c.l.b16 %v2178
        %v2280 = vunpack.c.h.b16 %v2178
        %v2281 = vunpack.c.l.b16 %v2179
        %v2282 = vunpack.c.h.b16 %v2179
        %v2283 = vunpack.c.l.b16 %v2180
        %v2284 = vunpack.c.h.b16 %v2180
        %v2285 = vunpack.c.l.b16 %v2181
        %v2286 = vunpack.c.h.b16 %v2181
        %v2287 = vunpack.c.l.b16 %v2182
        %v2288 = vunpack.c.h.b16 %v2182
        %v2289 = vunpack.c.l.b16 %v2183
        %v2290 = vunpack.c.h.b16 %v2183
        %v2291 = vunpack.c.l.b16 %v2184
        %v2292 = vunpack.c.h.b16 %v2184
        %v2293 = vpack.c.b16 %v2231, %v2229
        %v2294 = vpack.c.b16 %v2232, %v2230
        %v2295 = vpack.c.b16 %v2235, %v2233
        %v2296 = vpack.c.b16 %v2236, %v2234
        %v2297 = vpack.c.b16 %v2239, %v2237
        %v2298 = vpack.c.b16 %v2240, %v2238
        %v2299 = vpack.c.b16 %v2243, %v2241
        %v2300 = vpack.c.b16 %v2244, %v2242
        %v2301 = vpack.c.b16 %v2247, %v2245
        %v2302 = vpack.c.b16 %v2248, %v2246
        %v2303 = vpack.c.b16 %v2251, %v2249
        %v2304 = vpack.c.b16 %v2252, %v2250
        %v2305 = vpack.c.b16 %v2255, %v2253
        %v2306 = vpack.c.b16 %v2256, %v2254
        %v2307 = vpack.c.b16 %v2259, %v2257
        %v2308 = vpack.c.b16 %v2260, %v2258
        %v2309 = vpack.c.b16 %v2263, %v2261
        %v2310 = vpack.c.b16 %v2264, %v2262
        %v2311 = vpack.c.b16 %v2267, %v2265
        %v2312 = vpack.c.b16 %v2268, %v2266
        %v2313 = vpack.c.b16 %v2271, %v2269
        %v2314 = vpack.c.b16 %v2272, %v2270
        %v2315 = vpack.c.b16 %v2275, %v2273
        %v2316 = vpack.c.b16 %v2276, %v2274
        %v2317 = vpack.c.b16 %v2279, %v2277
        %v2318 = vpack.c.b16 %v2280, %v2278
        %v2319 = vpack.c.b16 %v2283, %v2281
        %v2320 = vpack.c.b16 %v2284, %v2282
        %v2321 = vpack.c.b16 %v2287, %v2285
        %v2322 = vpack.c.b16 %v2288, %v2286
        %v2323 = vpack.c.b16 %v2291, %v2289
        %v2324 = vpack.c.b16 %v2292, %v2290
        %2357 = vmatprep.subr.bf16.mxu0 %v2294
        %2358 = vmatpush1.bf16.msra.mxu0 %v2293
        %2359 = vmatprep.subr.bf16.mxu0 %v2296
        %2360 = vmatpush1.bf16.msra.mxu0 %v2295
        %2361 = vmatprep.subr.bf16.mxu0 %v2298
        %2362 = vmatpush1.bf16.msra.mxu0 %v2297
        %2363 = vmatprep.subr.bf16.mxu0 %v2300
        %2364 = vmatpush1.bf16.msra.mxu0 %v2299
        %2365 = vmatprep.subr.bf16.mxu0 %v2302
        %2366 = vmatpush1.bf16.msra.mxu0 %v2301
        %2367 = vmatprep.subr.bf16.mxu0 %v2304
        %2368 = vmatpush1.bf16.msra.mxu0 %v2303
        %2369 = vmatprep.subr.bf16.mxu0 %v2306
        %2370 = vmatpush1.bf16.msra.mxu0 %v2305
        %2371 = vmatprep.subr.bf16.mxu0 %v2308
        %2372 = vmatpush1.bf16.msra.mxu0 %v2307
        %2373 = vmatprep.subr.bf16.mxu0 %v2310
        %2374 = vmatpush1.bf16.msra.mxu0 %v2309
        %2375 = vmatprep.subr.bf16.mxu0 %v2312
        %2376 = vmatpush1.bf16.msra.mxu0 %v2311
        %2377 = vmatprep.subr.bf16.mxu0 %v2314
        %2378 = vmatpush1.bf16.msra.mxu0 %v2313
        %2379 = vmatprep.subr.bf16.mxu0 %v2316
        %2380 = vmatpush1.bf16.msra.mxu0 %v2315
        %2381 = vmatprep.subr.bf16.mxu0 %v2318
        %2382 = vmatpush1.bf16.msra.mxu0 %v2317
        %2383 = vmatprep.subr.bf16.mxu0 %v2320
        %2384 = vmatpush1.bf16.msra.mxu0 %v2319
        %2385 = vmatprep.subr.bf16.mxu0 %v2322
        %2386 = vmatpush1.bf16.msra.mxu0 %v2321
        %2387 = vmatprep.subr.bf16.mxu0 %v2324
        %2388 = vmatpush1.bf16.msra.mxu0 %v2323
        %2389 = vmatprep.mubr.bf16.mxu0 %v2152
        %2390 = vmatmul.mubr.bf16.gmra.mrb[0].mxu0 %v2151
        %v2391 = vpop.f32.mrb[0].mxu0
        %v2392 = vadd.f32 %v2190, %v2391
        %v2393 = vpop.f32.mrb[0].mxu0
        %v2394 = vadd.f32 %v2194, %v2393
        %v2395 = vpop.f32.mrb[0].mxu0
        %v2396 = vadd.f32 %v2190, %v2395
        %v2397 = vpop.f32.mrb[0].mxu0
        %v2398 = vadd.f32 %v2194, %v2397
        %2399 = vdwg.mxu0
        %v2400 = vadd.f32 %v1571, %v2392
        %v2401 = vadd.f32 %v1572, %v2394
        %v2402 = vadd.f32 %v1573, %v2396
        %v2403 = vadd.f32 %v1574, %v2398
        %v2404 = vadd.f32 %v2400, %v2401
        %2405 = vadd.xlane.f32.xlu0 %v2404
        %v2406 = vpop.xlane.xlu0 %2405
        %v2407 = vadd.f32 %v2402, %v2403
        %2408 = vadd.xlane.f32.xlu0 %v2407
        %v2409 = vpop.xlane.xlu0 %2408
        %v2410 = vmul.f32 %v2406, %v741
        %v2411 = vmul.f32 %v2409, %v741
        %v2412 = vsub.f32 %v2400, %v2410
        %v2413 = vsub.f32 %v2401, %v2410
        %v2414 = vsub.f32 %v2402, %v2411
        %v2415 = vsub.f32 %v2403, %v2411
        %v2416 = vmul.f32 %v2412, %v2412
        %v2417 = vmul.f32 %v2413, %v2413
        %v2418 = vmul.f32 %v2414, %v2414
        %v2419 = vmul.f32 %v2415, %v2415
        %v2420 = vadd.f32 %v2416, %v2417
        %2421 = vadd.xlane.f32.xlu0 %v2420
        %v2422 = vpop.xlane.xlu0 %2421
        %v2423 = vadd.f32 %v2418, %v2419
        %2424 = vadd.xlane.f32.xlu0 %v2423
        %v2425 = vpop.xlane.xlu0 %2424
        %v2426 = vmul.f32 %v2422, %v741
        %v2427 = vmul.f32 %v2425, %v741
        %v2428 = vadd.f32 %v2426, 1e-05
        %v2429 = vadd.f32 %v2427, 1e-05
        %v2430 = vrsqrt.pop %v2428
        %v2431 = vrsqrt.pop %v2429
        %v2432 = vmul.f32 %v2412, %v2430
        %v2433 = vmul.f32 %v2413, %v2430
        %v2434 = vmul.f32 %v2414, %v2431
        %v2435 = vmul.f32 %v2415, %v2431
        %v2436 = vld [vmem:[%s15] sm:$0x3]
        %v2438 = vlaneseq
        %v2439 = vshrl.u32 %v2438, 7
        %v2440 = vsub.s32 0, %v2439
        %v2441 = vrot.slane %v2436, %v2440
        %v2442 = vlaneseq
        %v2443 = vshrl.u32 %v2442, 7
        %v2444 = vsub.s32 1, %v2443
        %v2445 = vrot.slane %v2436, %v2444
        %v2448 = vmul.f32 %v2432, %v2441
        %v2449 = vmul.f32 %v2433, %v2445
        %v2450 = vmul.f32 %v2434, %v2441
        %v2451 = vmul.f32 %v2435, %v2445
        %v2452 = vld [vmem:[%s16] sm:$0x3]
        %v2454 = vlaneseq
        %v2455 = vshrl.u32 %v2454, 7
        %v2456 = vsub.s32 0, %v2455
        %v2457 = vrot.slane %v2452, %v2456
        %v2458 = vlaneseq
        %v2459 = vshrl.u32 %v2458, 7
        %v2460 = vsub.s32 1, %v2459
        %v2461 = vrot.slane %v2452, %v2460
        %v2464 = vadd.f32 %v2448, %v2457
        %v2465 = vadd.f32 %v2449, %v2461
        %v2466 = vadd.f32 %v2450, %v2457
        %v2467 = vadd.f32 %v2451, %v2461
        %v2468 = vpack.c.bf16 %v2466, %v2464
        %v2469 = vpack.c.bf16 %v2467, %v2465
        %v2470 = vld [vmem:[%s17] sm:$0xff]
        %v2471 = vld [vmem:[%s17 + $0x8] sm:$0xff]
        %v2472 = vld [vmem:[%s17 + $0x10] sm:$0xff]
        %v2473 = vld [vmem:[%s17 + $0x18] sm:$0xff]
        %v2474 = vld [vmem:[%s17 + $0x20] sm:$0xff]
        %v2475 = vld [vmem:[%s17 + $0x28] sm:$0xff]
        %v2476 = vld [vmem:[%s17 + $0x30] sm:$0xff]
        %v2477 = vld [vmem:[%s17 + $0x38] sm:$0xff]
        %v2478 = vld [vmem:[%s17 + $0x40] sm:$0xff]
        %v2479 = vld [vmem:[%s17 + $0x48] sm:$0xff]
        %v2480 = vld [vmem:[%s17 + $0x50] sm:$0xff]
        %v2481 = vld [vmem:[%s17 + $0x58] sm:$0xff]
        %v2482 = vld [vmem:[%s17 + $0x60] sm:$0xff]
        %v2483 = vld [vmem:[%s17 + $0x68] sm:$0xff]
        %v2484 = vld [vmem:[%s17 + $0x70] sm:$0xff]
        %v2485 = vld [vmem:[%s17 + $0x78] sm:$0xff]
        %v2486 = vld [vmem:[%s17 + $0x80] sm:$0xff]
        %v2487 = vld [vmem:[%s17 + $0x88] sm:$0xff]
        %v2488 = vld [vmem:[%s17 + $0x90] sm:$0xff]
        %v2489 = vld [vmem:[%s17 + $0x98] sm:$0xff]
        %v2490 = vld [vmem:[%s17 + $0xa0] sm:$0xff]
        %v2491 = vld [vmem:[%s17 + $0xa8] sm:$0xff]
        %v2492 = vld [vmem:[%s17 + $0xb0] sm:$0xff]
        %v2493 = vld [vmem:[%s17 + $0xb8] sm:$0xff]
        %v2494 = vld [vmem:[%s17 + $0xc0] sm:$0xff]
        %v2495 = vld [vmem:[%s17 + $0xc8] sm:$0xff]
        %v2496 = vld [vmem:[%s17 + $0xd0] sm:$0xff]
        %v2497 = vld [vmem:[%s17 + $0xd8] sm:$0xff]
        %v2498 = vld [vmem:[%s17 + $0xe0] sm:$0xff]
        %v2499 = vld [vmem:[%s17 + $0xe8] sm:$0xff]
        %v2500 = vld [vmem:[%s17 + $0xf0] sm:$0xff]
        %v2501 = vld [vmem:[%s17 + $0xf8] sm:$0xff]
        %v2502 = vld [vmem:[%s17 + $0x100] sm:$0xff]
        %v2503 = vld [vmem:[%s17 + $0x108] sm:$0xff]
        %v2504 = vld [vmem:[%s17 + $0x110] sm:$0xff]
        %v2505 = vld [vmem:[%s17 + $0x118] sm:$0xff]
        %v2506 = vld [vmem:[%s17 + $0x120] sm:$0xff]
        %v2507 = vld [vmem:[%s17 + $0x128] sm:$0xff]
        %v2508 = vld [vmem:[%s17 + $0x130] sm:$0xff]
        %v2509 = vld [vmem:[%s17 + $0x138] sm:$0xff]
        %v2510 = vld [vmem:[%s17 + $0x140] sm:$0xff]
        %v2511 = vld [vmem:[%s17 + $0x148] sm:$0xff]
        %v2512 = vld [vmem:[%s17 + $0x150] sm:$0xff]
        %v2513 = vld [vmem:[%s17 + $0x158] sm:$0xff]
        %v2514 = vld [vmem:[%s17 + $0x160] sm:$0xff]
        %v2515 = vld [vmem:[%s17 + $0x168] sm:$0xff]
        %v2516 = vld [vmem:[%s17 + $0x170] sm:$0xff]
        %v2517 = vld [vmem:[%s17 + $0x178] sm:$0xff]
        %v2518 = vld [vmem:[%s17 + $0x180] sm:$0xff]
        %v2519 = vld [vmem:[%s17 + $0x188] sm:$0xff]
        %v2520 = vld [vmem:[%s17 + $0x190] sm:$0xff]
        %v2521 = vld [vmem:[%s17 + $0x198] sm:$0xff]
        %v2522 = vld [vmem:[%s17 + $0x1a0] sm:$0xff]
        %v2523 = vld [vmem:[%s17 + $0x1a8] sm:$0xff]
        %v2524 = vld [vmem:[%s17 + $0x1b0] sm:$0xff]
        %v2525 = vld [vmem:[%s17 + $0x1b8] sm:$0xff]
        %v2526 = vld [vmem:[%s17 + $0x1c0] sm:$0xff]
        %v2527 = vld [vmem:[%s17 + $0x1c8] sm:$0xff]
        %v2528 = vld [vmem:[%s17 + $0x1d0] sm:$0xff]
        %v2529 = vld [vmem:[%s17 + $0x1d8] sm:$0xff]
        %v2530 = vld [vmem:[%s17 + $0x1e0] sm:$0xff]
        %v2531 = vld [vmem:[%s17 + $0x1e8] sm:$0xff]
        %v2532 = vld [vmem:[%s17 + $0x1f0] sm:$0xff]
        %v2533 = vld [vmem:[%s17 + $0x1f8] sm:$0xff]
        %v2534 = vld [vmem:[%s17 + $0x200] sm:$0xff]
        %v2535 = vld [vmem:[%s17 + $0x208] sm:$0xff]
        %v2536 = vld [vmem:[%s17 + $0x210] sm:$0xff]
        %v2537 = vld [vmem:[%s17 + $0x218] sm:$0xff]
        %v2538 = vld [vmem:[%s17 + $0x220] sm:$0xff]
        %v2539 = vld [vmem:[%s17 + $0x228] sm:$0xff]
        %v2540 = vld [vmem:[%s17 + $0x230] sm:$0xff]
        %v2541 = vld [vmem:[%s17 + $0x238] sm:$0xff]
        %v2542 = vld [vmem:[%s17 + $0x240] sm:$0xff]
        %v2543 = vld [vmem:[%s17 + $0x248] sm:$0xff]
        %v2544 = vld [vmem:[%s17 + $0x250] sm:$0xff]
        %v2545 = vld [vmem:[%s17 + $0x258] sm:$0xff]
        %v2546 = vld [vmem:[%s17 + $0x260] sm:$0xff]
        %v2547 = vld [vmem:[%s17 + $0x268] sm:$0xff]
        %v2548 = vld [vmem:[%s17 + $0x270] sm:$0xff]
        %v2549 = vld [vmem:[%s17 + $0x278] sm:$0xff]
        %v2550 = vld [vmem:[%s17 + $0x280] sm:$0xff]
        %v2551 = vld [vmem:[%s17 + $0x288] sm:$0xff]
        %v2552 = vld [vmem:[%s17 + $0x290] sm:$0xff]
        %v2553 = vld [vmem:[%s17 + $0x298] sm:$0xff]
        %v2554 = vld [vmem:[%s17 + $0x2a0] sm:$0xff]
        %v2555 = vld [vmem:[%s17 + $0x2a8] sm:$0xff]
        %v2556 = vld [vmem:[%s17 + $0x2b0] sm:$0xff]
        %v2557 = vld [vmem:[%s17 + $0x2b8] sm:$0xff]
        %v2558 = vld [vmem:[%s17 + $0x2c0] sm:$0xff]
        %v2559 = vld [vmem:[%s17 + $0x2c8] sm:$0xff]
        %v2560 = vld [vmem:[%s17 + $0x2d0] sm:$0xff]
        %v2561 = vld [vmem:[%s17 + $0x2d8] sm:$0xff]
        %v2562 = vld [vmem:[%s17 + $0x2e0] sm:$0xff]
        %v2563 = vld [vmem:[%s17 + $0x2e8] sm:$0xff]
        %v2564 = vld [vmem:[%s17 + $0x2f0] sm:$0xff]
        %v2565 = vld [vmem:[%s17 + $0x2f8] sm:$0xff]
        %v2566 = vld [vmem:[%s17 + $0x300] sm:$0xff]
        %v2567 = vld [vmem:[%s17 + $0x308] sm:$0xff]
        %v2568 = vld [vmem:[%s17 + $0x310] sm:$0xff]
        %v2569 = vld [vmem:[%s17 + $0x318] sm:$0xff]
        %v2570 = vld [vmem:[%s17 + $0x320] sm:$0xff]
        %v2571 = vld [vmem:[%s17 + $0x328] sm:$0xff]
        %v2572 = vld [vmem:[%s17 + $0x330] sm:$0xff]
        %v2573 = vld [vmem:[%s17 + $0x338] sm:$0xff]
        %v2574 = vld [vmem:[%s17 + $0x340] sm:$0xff]
        %v2575 = vld [vmem:[%s17 + $0x348] sm:$0xff]
        %v2576 = vld [vmem:[%s17 + $0x350] sm:$0xff]
        %v2577 = vld [vmem:[%s17 + $0x358] sm:$0xff]
        %v2578 = vld [vmem:[%s17 + $0x360] sm:$0xff]
        %v2579 = vld [vmem:[%s17 + $0x368] sm:$0xff]
        %v2580 = vld [vmem:[%s17 + $0x370] sm:$0xff]
        %v2581 = vld [vmem:[%s17 + $0x378] sm:$0xff]
        %v2582 = vld [vmem:[%s17 + $0x380] sm:$0xff]
        %v2583 = vld [vmem:[%s17 + $0x388] sm:$0xff]
        %v2584 = vld [vmem:[%s17 + $0x390] sm:$0xff]
        %v2585 = vld [vmem:[%s17 + $0x398] sm:$0xff]
        %v2586 = vld [vmem:[%s17 + $0x3a0] sm:$0xff]
        %v2587 = vld [vmem:[%s17 + $0x3a8] sm:$0xff]
        %v2588 = vld [vmem:[%s17 + $0x3b0] sm:$0xff]
        %v2589 = vld [vmem:[%s17 + $0x3b8] sm:$0xff]
        %v2590 = vld [vmem:[%s17 + $0x3c0] sm:$0xff]
        %v2591 = vld [vmem:[%s17 + $0x3c8] sm:$0xff]
        %v2592 = vld [vmem:[%s17 + $0x3d0] sm:$0xff]
        %v2593 = vld [vmem:[%s17 + $0x3d8] sm:$0xff]
        %v2594 = vld [vmem:[%s17 + $0x3e0] sm:$0xff]
        %v2595 = vld [vmem:[%s17 + $0x3e8] sm:$0xff]
        %v2596 = vld [vmem:[%s17 + $0x3f0] sm:$0xff]
        %v2597 = vld [vmem:[%s17 + $0x3f8] sm:$0xff]
        %v2598 = vld [vmem:[%s18] sm:$0xff]
        %v2600 = vlaneseq
        %v2601 = vshrl.u32 %v2600, 7
        %v2602 = vsub.s32 0, %v2601
        %v2603 = vrot.slane %v2598, %v2602
        %v2604 = vlaneseq
        %v2605 = vshrl.u32 %v2604, 7
        %v2606 = vsub.s32 1, %v2605
        %v2607 = vrot.slane %v2598, %v2606
        %v2608 = vlaneseq
        %v2609 = vshrl.u32 %v2608, 7
        %v2610 = vsub.s32 2, %v2609
        %v2611 = vrot.slane %v2598, %v2610
        %v2612 = vlaneseq
        %v2613 = vshrl.u32 %v2612, 7
        %v2614 = vsub.s32 3, %v2613
        %v2615 = vrot.slane %v2598, %v2614
        %v2616 = vlaneseq
        %v2617 = vshrl.u32 %v2616, 7
        %v2618 = vsub.s32 4, %v2617
        %v2619 = vrot.slane %v2598, %v2618
        %v2620 = vlaneseq
        %v2621 = vshrl.u32 %v2620, 7
        %v2622 = vsub.s32 5, %v2621
        %v2623 = vrot.slane %v2598, %v2622
        %v2624 = vlaneseq
        %v2625 = vshrl.u32 %v2624, 7
        %v2626 = vsub.s32 6, %v2625
        %v2627 = vrot.slane %v2598, %v2626
        %v2628 = vlaneseq
        %v2629 = vshrl.u32 %v2628, 7
        %v2630 = vsub.s32 7, %v2629
        %v2631 = vrot.slane %v2598, %v2630
        %v2768 = vunpack.c.l.b16 %v2470
        %v2769 = vunpack.c.h.b16 %v2470
        %v2770 = vunpack.c.l.b16 %v2471
        %v2771 = vunpack.c.h.b16 %v2471
        %v2772 = vunpack.c.l.b16 %v2472
        %v2773 = vunpack.c.h.b16 %v2472
        %v2774 = vunpack.c.l.b16 %v2473
        %v2775 = vunpack.c.h.b16 %v2473
        %v2776 = vunpack.c.l.b16 %v2474
        %v2777 = vunpack.c.h.b16 %v2474
        %v2778 = vunpack.c.l.b16 %v2475
        %v2779 = vunpack.c.h.b16 %v2475
        %v2780 = vunpack.c.l.b16 %v2476
        %v2781 = vunpack.c.h.b16 %v2476
        %v2782 = vunpack.c.l.b16 %v2477
        %v2783 = vunpack.c.h.b16 %v2477
        %v2784 = vunpack.c.l.b16 %v2478
        %v2785 = vunpack.c.h.b16 %v2478
        %v2786 = vunpack.c.l.b16 %v2479
        %v2787 = vunpack.c.h.b16 %v2479
        %v2788 = vunpack.c.l.b16 %v2480
        %v2789 = vunpack.c.h.b16 %v2480
        %v2790 = vunpack.c.l.b16 %v2481
        %v2791 = vunpack.c.h.b16 %v2481
        %v2792 = vunpack.c.l.b16 %v2482
        %v2793 = vunpack.c.h.b16 %v2482
        %v2794 = vunpack.c.l.b16 %v2483
        %v2795 = vunpack.c.h.b16 %v2483
        %v2796 = vunpack.c.l.b16 %v2484
        %v2797 = vunpack.c.h.b16 %v2484
        %v2798 = vunpack.c.l.b16 %v2485
        %v2799 = vunpack.c.h.b16 %v2485
        %v2800 = vunpack.c.l.b16 %v2486
        %v2801 = vunpack.c.h.b16 %v2486
        %v2802 = vunpack.c.l.b16 %v2487
        %v2803 = vunpack.c.h.b16 %v2487
        %v2804 = vunpack.c.l.b16 %v2488
        %v2805 = vunpack.c.h.b16 %v2488
        %v2806 = vunpack.c.l.b16 %v2489
        %v2807 = vunpack.c.h.b16 %v2489
        %v2808 = vunpack.c.l.b16 %v2490
        %v2809 = vunpack.c.h.b16 %v2490
        %v2810 = vunpack.c.l.b16 %v2491
        %v2811 = vunpack.c.h.b16 %v2491
        %v2812 = vunpack.c.l.b16 %v2492
        %v2813 = vunpack.c.h.b16 %v2492
        %v2814 = vunpack.c.l.b16 %v2493
        %v2815 = vunpack.c.h.b16 %v2493
        %v2816 = vunpack.c.l.b16 %v2494
        %v2817 = vunpack.c.h.b16 %v2494
        %v2818 = vunpack.c.l.b16 %v2495
        %v2819 = vunpack.c.h.b16 %v2495
        %v2820 = vunpack.c.l.b16 %v2496
        %v2821 = vunpack.c.h.b16 %v2496
        %v2822 = vunpack.c.l.b16 %v2497
        %v2823 = vunpack.c.h.b16 %v2497
        %v2824 = vunpack.c.l.b16 %v2498
        %v2825 = vunpack.c.h.b16 %v2498
        %v2826 = vunpack.c.l.b16 %v2499
        %v2827 = vunpack.c.h.b16 %v2499
        %v2828 = vunpack.c.l.b16 %v2500
        %v2829 = vunpack.c.h.b16 %v2500
        %v2830 = vunpack.c.l.b16 %v2501
        %v2831 = vunpack.c.h.b16 %v2501
        %v2832 = vunpack.c.l.b16 %v2502
        %v2833 = vunpack.c.h.b16 %v2502
        %v2834 = vunpack.c.l.b16 %v2503
        %v2835 = vunpack.c.h.b16 %v2503
        %v2836 = vunpack.c.l.b16 %v2504
        %v2837 = vunpack.c.h.b16 %v2504
        %v2838 = vunpack.c.l.b16 %v2505
        %v2839 = vunpack.c.h.b16 %v2505
        %v2840 = vunpack.c.l.b16 %v2506
        %v2841 = vunpack.c.h.b16 %v2506
        %v2842 = vunpack.c.l.b16 %v2507
        %v2843 = vunpack.c.h.b16 %v2507
        %v2844 = vunpack.c.l.b16 %v2508
        %v2845 = vunpack.c.h.b16 %v2508
        %v2846 = vunpack.c.l.b16 %v2509
        %v2847 = vunpack.c.h.b16 %v2509
        %v2848 = vunpack.c.l.b16 %v2510
        %v2849 = vunpack.c.h.b16 %v2510
        %v2850 = vunpack.c.l.b16 %v2511
        %v2851 = vunpack.c.h.b16 %v2511
        %v2852 = vunpack.c.l.b16 %v2512
        %v2853 = vunpack.c.h.b16 %v2512
        %v2854 = vunpack.c.l.b16 %v2513
        %v2855 = vunpack.c.h.b16 %v2513
        %v2856 = vunpack.c.l.b16 %v2514
        %v2857 = vunpack.c.h.b16 %v2514
        %v2858 = vunpack.c.l.b16 %v2515
        %v2859 = vunpack.c.h.b16 %v2515
        %v2860 = vunpack.c.l.b16 %v2516
        %v2861 = vunpack.c.h.b16 %v2516
        %v2862 = vunpack.c.l.b16 %v2517
        %v2863 = vunpack.c.h.b16 %v2517
        %v2864 = vunpack.c.l.b16 %v2518
        %v2865 = vunpack.c.h.b16 %v2518
        %v2866 = vunpack.c.l.b16 %v2519
        %v2867 = vunpack.c.h.b16 %v2519
        %v2868 = vunpack.c.l.b16 %v2520
        %v2869 = vunpack.c.h.b16 %v2520
        %v2870 = vunpack.c.l.b16 %v2521
        %v2871 = vunpack.c.h.b16 %v2521
        %v2872 = vunpack.c.l.b16 %v2522
        %v2873 = vunpack.c.h.b16 %v2522
        %v2874 = vunpack.c.l.b16 %v2523
        %v2875 = vunpack.c.h.b16 %v2523
        %v2876 = vunpack.c.l.b16 %v2524
        %v2877 = vunpack.c.h.b16 %v2524
        %v2878 = vunpack.c.l.b16 %v2525
        %v2879 = vunpack.c.h.b16 %v2525
        %v2880 = vunpack.c.l.b16 %v2526
        %v2881 = vunpack.c.h.b16 %v2526
        %v2882 = vunpack.c.l.b16 %v2527
        %v2883 = vunpack.c.h.b16 %v2527
        %v2884 = vunpack.c.l.b16 %v2528
        %v2885 = vunpack.c.h.b16 %v2528
        %v2886 = vunpack.c.l.b16 %v2529
        %v2887 = vunpack.c.h.b16 %v2529
        %v2888 = vunpack.c.l.b16 %v2530
        %v2889 = vunpack.c.h.b16 %v2530
        %v2890 = vunpack.c.l.b16 %v2531
        %v2891 = vunpack.c.h.b16 %v2531
        %v2892 = vunpack.c.l.b16 %v2532
        %v2893 = vunpack.c.h.b16 %v2532
        %v2894 = vunpack.c.l.b16 %v2533
        %v2895 = vunpack.c.h.b16 %v2533
        %v2896 = vunpack.c.l.b16 %v2534
        %v2897 = vunpack.c.h.b16 %v2534
        %v2898 = vunpack.c.l.b16 %v2535
        %v2899 = vunpack.c.h.b16 %v2535
        %v2900 = vunpack.c.l.b16 %v2536
        %v2901 = vunpack.c.h.b16 %v2536
        %v2902 = vunpack.c.l.b16 %v2537
        %v2903 = vunpack.c.h.b16 %v2537
        %v2904 = vunpack.c.l.b16 %v2538
        %v2905 = vunpack.c.h.b16 %v2538
        %v2906 = vunpack.c.l.b16 %v2539
        %v2907 = vunpack.c.h.b16 %v2539
        %v2908 = vunpack.c.l.b16 %v2540
        %v2909 = vunpack.c.h.b16 %v2540
        %v2910 = vunpack.c.l.b16 %v2541
        %v2911 = vunpack.c.h.b16 %v2541
        %v2912 = vunpack.c.l.b16 %v2542
        %v2913 = vunpack.c.h.b16 %v2542
        %v2914 = vunpack.c.l.b16 %v2543
        %v2915 = vunpack.c.h.b16 %v2543
        %v2916 = vunpack.c.l.b16 %v2544
        %v2917 = vunpack.c.h.b16 %v2544
        %v2918 = vunpack.c.l.b16 %v2545
        %v2919 = vunpack.c.h.b16 %v2545
        %v2920 = vunpack.c.l.b16 %v2546
        %v2921 = vunpack.c.h.b16 %v2546
        %v2922 = vunpack.c.l.b16 %v2547
        %v2923 = vunpack.c.h.b16 %v2547
        %v2924 = vunpack.c.l.b16 %v2548
        %v2925 = vunpack.c.h.b16 %v2548
        %v2926 = vunpack.c.l.b16 %v2549
        %v2927 = vunpack.c.h.b16 %v2549
        %v2928 = vunpack.c.l.b16 %v2550
        %v2929 = vunpack.c.h.b16 %v2550
        %v2930 = vunpack.c.l.b16 %v2551
        %v2931 = vunpack.c.h.b16 %v2551
        %v2932 = vunpack.c.l.b16 %v2552
        %v2933 = vunpack.c.h.b16 %v2552
        %v2934 = vunpack.c.l.b16 %v2553
        %v2935 = vunpack.c.h.b16 %v2553
        %v2936 = vunpack.c.l.b16 %v2554
        %v2937 = vunpack.c.h.b16 %v2554
        %v2938 = vunpack.c.l.b16 %v2555
        %v2939 = vunpack.c.h.b16 %v2555
        %v2940 = vunpack.c.l.b16 %v2556
        %v2941 = vunpack.c.h.b16 %v2556
        %v2942 = vunpack.c.l.b16 %v2557
        %v2943 = vunpack.c.h.b16 %v2557
        %v2944 = vunpack.c.l.b16 %v2558
        %v2945 = vunpack.c.h.b16 %v2558
        %v2946 = vunpack.c.l.b16 %v2559
        %v2947 = vunpack.c.h.b16 %v2559
        %v2948 = vunpack.c.l.b16 %v2560
        %v2949 = vunpack.c.h.b16 %v2560
        %v2950 = vunpack.c.l.b16 %v2561
        %v2951 = vunpack.c.h.b16 %v2561
        %v2952 = vunpack.c.l.b16 %v2562
        %v2953 = vunpack.c.h.b16 %v2562
        %v2954 = vunpack.c.l.b16 %v2563
        %v2955 = vunpack.c.h.b16 %v2563
        %v2956 = vunpack.c.l.b16 %v2564
        %v2957 = vunpack.c.h.b16 %v2564
        %v2958 = vunpack.c.l.b16 %v2565
        %v2959 = vunpack.c.h.b16 %v2565
        %v2960 = vunpack.c.l.b16 %v2566
        %v2961 = vunpack.c.h.b16 %v2566
        %v2962 = vunpack.c.l.b16 %v2567
        %v2963 = vunpack.c.h.b16 %v2567
        %v2964 = vunpack.c.l.b16 %v2568
        %v2965 = vunpack.c.h.b16 %v2568
        %v2966 = vunpack.c.l.b16 %v2569
        %v2967 = vunpack.c.h.b16 %v2569
        %v2968 = vunpack.c.l.b16 %v2570
        %v2969 = vunpack.c.h.b16 %v2570
        %v2970 = vunpack.c.l.b16 %v2571
        %v2971 = vunpack.c.h.b16 %v2571
        %v2972 = vunpack.c.l.b16 %v2572
        %v2973 = vunpack.c.h.b16 %v2572
        %v2974 = vunpack.c.l.b16 %v2573
        %v2975 = vunpack.c.h.b16 %v2573
        %v2976 = vunpack.c.l.b16 %v2574
        %v2977 = vunpack.c.h.b16 %v2574
        %v2978 = vunpack.c.l.b16 %v2575
        %v2979 = vunpack.c.h.b16 %v2575
        %v2980 = vunpack.c.l.b16 %v2576
        %v2981 = vunpack.c.h.b16 %v2576
        %v2982 = vunpack.c.l.b16 %v2577
        %v2983 = vunpack.c.h.b16 %v2577
        %v2984 = vunpack.c.l.b16 %v2578
        %v2985 = vunpack.c.h.b16 %v2578
        %v2986 = vunpack.c.l.b16 %v2579
        %v2987 = vunpack.c.h.b16 %v2579
        %v2988 = vunpack.c.l.b16 %v2580
        %v2989 = vunpack.c.h.b16 %v2580
        %v2990 = vunpack.c.l.b16 %v2581
        %v2991 = vunpack.c.h.b16 %v2581
        %v2992 = vunpack.c.l.b16 %v2582
        %v2993 = vunpack.c.h.b16 %v2582
        %v2994 = vunpack.c.l.b16 %v2583
        %v2995 = vunpack.c.h.b16 %v2583
        %v2996 = vunpack.c.l.b16 %v2584
        %v2997 = vunpack.c.h.b16 %v2584
        %v2998 = vunpack.c.l.b16 %v2585
        %v2999 = vunpack.c.h.b16 %v2585
        %v3000 = vunpack.c.l.b16 %v2586
        %v3001 = vunpack.c.h.b16 %v2586
        %v3002 = vunpack.c.l.b16 %v2587
        %v3003 = vunpack.c.h.b16 %v2587
        %v3004 = vunpack.c.l.b16 %v2588
        %v3005 = vunpack.c.h.b16 %v2588
        %v3006 = vunpack.c.l.b16 %v2589
        %v3007 = vunpack.c.h.b16 %v2589
        %v3008 = vunpack.c.l.b16 %v2590
        %v3009 = vunpack.c.h.b16 %v2590
        %v3010 = vunpack.c.l.b16 %v2591
        %v3011 = vunpack.c.h.b16 %v2591
        %v3012 = vunpack.c.l.b16 %v2592
        %v3013 = vunpack.c.h.b16 %v2592
        %v3014 = vunpack.c.l.b16 %v2593
        %v3015 = vunpack.c.h.b16 %v2593
        %v3016 = vunpack.c.l.b16 %v2594
        %v3017 = vunpack.c.h.b16 %v2594
        %v3018 = vunpack.c.l.b16 %v2595
        %v3019 = vunpack.c.h.b16 %v2595
        %v3020 = vunpack.c.l.b16 %v2596
        %v3021 = vunpack.c.h.b16 %v2596
        %v3022 = vunpack.c.l.b16 %v2597
        %v3023 = vunpack.c.h.b16 %v2597
        %v3024 = vpack.c.b16 %v2776, %v2768
        %v3025 = vpack.c.b16 %v2777, %v2769
        %v3026 = vpack.c.b16 %v2778, %v2770
        %v3027 = vpack.c.b16 %v2779, %v2771
        %v3028 = vpack.c.b16 %v2780, %v2772
        %v3029 = vpack.c.b16 %v2781, %v2773
        %v3030 = vpack.c.b16 %v2782, %v2774
        %v3031 = vpack.c.b16 %v2783, %v2775
        %v3032 = vpack.c.b16 %v2792, %v2784
        %v3033 = vpack.c.b16 %v2793, %v2785
        %v3034 = vpack.c.b16 %v2794, %v2786
        %v3035 = vpack.c.b16 %v2795, %v2787
        %v3036 = vpack.c.b16 %v2796, %v2788
        %v3037 = vpack.c.b16 %v2797, %v2789
        %v3038 = vpack.c.b16 %v2798, %v2790
        %v3039 = vpack.c.b16 %v2799, %v2791
        %v3040 = vpack.c.b16 %v2808, %v2800
        %v3041 = vpack.c.b16 %v2809, %v2801
        %v3042 = vpack.c.b16 %v2810, %v2802
        %v3043 = vpack.c.b16 %v2811, %v2803
        %v3044 = vpack.c.b16 %v2812, %v2804
        %v3045 = vpack.c.b16 %v2813, %v2805
        %v3046 = vpack.c.b16 %v2814, %v2806
        %v3047 = vpack.c.b16 %v2815, %v2807
        %v3048 = vpack.c.b16 %v2824, %v2816
        %v3049 = vpack.c.b16 %v2825, %v2817
        %v3050 = vpack.c.b16 %v2826, %v2818
        %v3051 = vpack.c.b16 %v2827, %v2819
        %v3052 = vpack.c.b16 %v2828, %v2820
        %v3053 = vpack.c.b16 %v2829, %v2821
        %v3054 = vpack.c.b16 %v2830, %v2822
        %v3055 = vpack.c.b16 %v2831, %v2823
        %v3056 = vpack.c.b16 %v2840, %v2832
        %v3057 = vpack.c.b16 %v2841, %v2833
        %v3058 = vpack.c.b16 %v2842, %v2834
        %v3059 = vpack.c.b16 %v2843, %v2835
        %v3060 = vpack.c.b16 %v2844, %v2836
        %v3061 = vpack.c.b16 %v2845, %v2837
        %v3062 = vpack.c.b16 %v2846, %v2838
        %v3063 = vpack.c.b16 %v2847, %v2839
        %v3064 = vpack.c.b16 %v2856, %v2848
        %v3065 = vpack.c.b16 %v2857, %v2849
        %v3066 = vpack.c.b16 %v2858, %v2850
        %v3067 = vpack.c.b16 %v2859, %v2851
        %v3068 = vpack.c.b16 %v2860, %v2852
        %v3069 = vpack.c.b16 %v2861, %v2853
        %v3070 = vpack.c.b16 %v2862, %v2854
        %v3071 = vpack.c.b16 %v2863, %v2855
        %v3072 = vpack.c.b16 %v2872, %v2864
        %v3073 = vpack.c.b16 %v2873, %v2865
        %v3074 = vpack.c.b16 %v2874, %v2866
        %v3075 = vpack.c.b16 %v2875, %v2867
        %v3076 = vpack.c.b16 %v2876, %v2868
        %v3077 = vpack.c.b16 %v2877, %v2869
        %v3078 = vpack.c.b16 %v2878, %v2870
        %v3079 = vpack.c.b16 %v2879, %v2871
        %v3080 = vpack.c.b16 %v2888, %v2880
        %v3081 = vpack.c.b16 %v2889, %v2881
        %v3082 = vpack.c.b16 %v2890, %v2882
        %v3083 = vpack.c.b16 %v2891, %v2883
        %v3084 = vpack.c.b16 %v2892, %v2884
        %v3085 = vpack.c.b16 %v2893, %v2885
        %v3086 = vpack.c.b16 %v2894, %v2886
        %v3087 = vpack.c.b16 %v2895, %v2887
        %v3088 = vpack.c.b16 %v2904, %v2896
        %v3089 = vpack.c.b16 %v2905, %v2897
        %v3090 = vpack.c.b16 %v2906, %v2898
        %v3091 = vpack.c.b16 %v2907, %v2899
        %v3092 = vpack.c.b16 %v2908, %v2900
        %v3093 = vpack.c.b16 %v2909, %v2901
        %v3094 = vpack.c.b16 %v2910, %v2902
        %v3095 = vpack.c.b16 %v2911, %v2903
        %v3096 = vpack.c.b16 %v2920, %v2912
        %v3097 = vpack.c.b16 %v2921, %v2913
        %v3098 = vpack.c.b16 %v2922, %v2914
        %v3099 = vpack.c.b16 %v2923, %v2915
        %v3100 = vpack.c.b16 %v2924, %v2916
        %v3101 = vpack.c.b16 %v2925, %v2917
        %v3102 = vpack.c.b16 %v2926, %v2918
        %v3103 = vpack.c.b16 %v2927, %v2919
        %v3104 = vpack.c.b16 %v2936, %v2928
        %v3105 = vpack.c.b16 %v2937, %v2929
        %v3106 = vpack.c.b16 %v2938, %v2930
        %v3107 = vpack.c.b16 %v2939, %v2931
        %v3108 = vpack.c.b16 %v2940, %v2932
        %v3109 = vpack.c.b16 %v2941, %v2933
        %v3110 = vpack.c.b16 %v2942, %v2934
        %v3111 = vpack.c.b16 %v2943, %v2935
        %v3112 = vpack.c.b16 %v2952, %v2944
        %v3113 = vpack.c.b16 %v2953, %v2945
        %v3114 = vpack.c.b16 %v2954, %v2946
        %v3115 = vpack.c.b16 %v2955, %v2947
        %v3116 = vpack.c.b16 %v2956, %v2948
        %v3117 = vpack.c.b16 %v2957, %v2949
        %v3118 = vpack.c.b16 %v2958, %v2950
        %v3119 = vpack.c.b16 %v2959, %v2951
        %v3120 = vpack.c.b16 %v2968, %v2960
        %v3121 = vpack.c.b16 %v2969, %v2961
        %v3122 = vpack.c.b16 %v2970, %v2962
        %v3123 = vpack.c.b16 %v2971, %v2963
        %v3124 = vpack.c.b16 %v2972, %v2964
        %v3125 = vpack.c.b16 %v2973, %v2965
        %v3126 = vpack.c.b16 %v2974, %v2966
        %v3127 = vpack.c.b16 %v2975, %v2967
        %v3128 = vpack.c.b16 %v2984, %v2976
        %v3129 = vpack.c.b16 %v2985, %v2977
        %v3130 = vpack.c.b16 %v2986, %v2978
        %v3131 = vpack.c.b16 %v2987, %v2979
        %v3132 = vpack.c.b16 %v2988, %v2980
        %v3133 = vpack.c.b16 %v2989, %v2981
        %v3134 = vpack.c.b16 %v2990, %v2982
        %v3135 = vpack.c.b16 %v2991, %v2983
        %v3136 = vpack.c.b16 %v3000, %v2992
        %v3137 = vpack.c.b16 %v3001, %v2993
        %v3138 = vpack.c.b16 %v3002, %v2994
        %v3139 = vpack.c.b16 %v3003, %v2995
        %v3140 = vpack.c.b16 %v3004, %v2996
        %v3141 = vpack.c.b16 %v3005, %v2997
        %v3142 = vpack.c.b16 %v3006, %v2998
        %v3143 = vpack.c.b16 %v3007, %v2999
        %v3144 = vpack.c.b16 %v3016, %v3008
        %v3145 = vpack.c.b16 %v3017, %v3009
        %v3146 = vpack.c.b16 %v3018, %v3010
        %v3147 = vpack.c.b16 %v3019, %v3011
        %v3148 = vpack.c.b16 %v3020, %v3012
        %v3149 = vpack.c.b16 %v3021, %v3013
        %v3150 = vpack.c.b16 %v3022, %v3014
        %v3151 = vpack.c.b16 %v3023, %v3015
        %3280 = vmatprep.subr.bf16.mxu0 %v3025
        %3281 = vmatpush1.bf16.msra.mxu0 %v3024
        %3282 = vmatprep.subr.bf16.mxu0 %v3033
        %3283 = vmatpush1.bf16.msra.mxu0 %v3032
        %3284 = vmatprep.subr.bf16.mxu0 %v3041
        %3285 = vmatpush1.bf16.msra.mxu0 %v3040
        %3286 = vmatprep.subr.bf16.mxu0 %v3049
        %3287 = vmatpush1.bf16.msra.mxu0 %v3048
        %3288 = vmatprep.subr.bf16.mxu0 %v3057
        %3289 = vmatpush1.bf16.msra.mxu0 %v3056
        %3290 = vmatprep.subr.bf16.mxu0 %v3065
        %3291 = vmatpush1.bf16.msra.mxu0 %v3064
        %3292 = vmatprep.subr.bf16.mxu0 %v3073
        %3293 = vmatpush1.bf16.msra.mxu0 %v3072
        %3294 = vmatprep.subr.bf16.mxu0 %v3081
        %3295 = vmatpush1.bf16.msra.mxu0 %v3080
        %3296 = vmatprep.subr.bf16.mxu0 %v3089
        %3297 = vmatpush1.bf16.msra.mxu0 %v3088
        %3298 = vmatprep.subr.bf16.mxu0 %v3097
        %3299 = vmatpush1.bf16.msra.mxu0 %v3096
        %3300 = vmatprep.subr.bf16.mxu0 %v3105
        %3301 = vmatpush1.bf16.msra.mxu0 %v3104
        %3302 = vmatprep.subr.bf16.mxu0 %v3113
        %3303 = vmatpush1.bf16.msra.mxu0 %v3112
        %3304 = vmatprep.subr.bf16.mxu0 %v3121
        %3305 = vmatpush1.bf16.msra.mxu0 %v3120
        %3306 = vmatprep.subr.bf16.mxu0 %v3129
        %3307 = vmatpush1.bf16.msra.mxu0 %v3128
        %3308 = vmatprep.subr.bf16.mxu0 %v3137
        %3309 = vmatpush1.bf16.msra.mxu0 %v3136
        %3310 = vmatprep.subr.bf16.mxu0 %v3145
        %3311 = vmatpush1.bf16.msra.mxu0 %v3144
        %3312 = vmatprep.mubr.bf16.mxu0 %v2469
        %3313 = vmatmul.mubr.bf16.gmra.mrb[0].mxu0 %v2468
        %v3314 = vpop.f32.mrb[0].mxu0
        %v3315 = vadd.f32 %v2603, %v3314
        %v3316 = vpop.f32.mrb[0].mxu0
        %v3317 = vadd.f32 %v2607, %v3316
        %v3318 = vpop.f32.mrb[0].mxu0
        %v3319 = vadd.f32 %v2603, %v3318
        %v3320 = vpop.f32.mrb[0].mxu0
        %v3321 = vadd.f32 %v2607, %v3320
        %3322 = vdwg.mxu0
        %3323 = vmatprep.subr.bf16.mxu0 %v3027
        %3324 = vmatpush1.bf16.msra.mxu0 %v3026
        %3325 = vmatprep.subr.bf16.mxu0 %v3035
        %3326 = vmatpush1.bf16.msra.mxu0 %v3034
        %3327 = vmatprep.subr.bf16.mxu0 %v3043
        %3328 = vmatpush1.bf16.msra.mxu0 %v3042
        %3329 = vmatprep.subr.bf16.mxu0 %v3051
        %3330 = vmatpush1.bf16.msra.mxu0 %v3050
        %3331 = vmatprep.subr.bf16.mxu0 %v3059
        %3332 = vmatpush1.bf16.msra.mxu0 %v3058
        %3333 = vmatprep.subr.bf16.mxu0 %v3067
        %3334 = vmatpush1.bf16.msra.mxu0 %v3066
        %3335 = vmatprep.subr.bf16.mxu0 %v3075
        %3336 = vmatpush1.bf16.msra.mxu0 %v3074
        %3337 = vmatprep.subr.bf16.mxu0 %v3083
        %3338 = vmatpush1.bf16.msra.mxu0 %v3082
        %3339 = vmatprep.subr.bf16.mxu0 %v3091
        %3340 = vmatpush1.bf16.msra.mxu0 %v3090
        %3341 = vmatprep.subr.bf16.mxu0 %v3099
        %3342 = vmatpush1.bf16.msra.mxu0 %v3098
        %3343 = vmatprep.subr.bf16.mxu0 %v3107
        %3344 = vmatpush1.bf16.msra.mxu0 %v3106
        %3345 = vmatprep.subr.bf16.mxu0 %v3115
        %3346 = vmatpush1.bf16.msra.mxu0 %v3114
        %3347 = vmatprep.subr.bf16.mxu0 %v3123
        %3348 = vmatpush1.bf16.msra.mxu0 %v3122
        %3349 = vmatprep.subr.bf16.mxu0 %v3131
        %3350 = vmatpush1.bf16.msra.mxu0 %v3130
        %3351 = vmatprep.subr.bf16.mxu0 %v3139
        %3352 = vmatpush1.bf16.msra.mxu0 %v3138
        %3353 = vmatprep.subr.bf16.mxu0 %v3147
        %3354 = vmatpush1.bf16.msra.mxu0 %v3146
        %3355 = vmatprep.mubr.bf16.mxu0 %v2469
        %3356 = vmatmul.mubr.bf16.gmra.mrb[0].mxu0 %v2468
        %v3357 = vpop.f32.mrb[0].mxu0
        %v3358 = vadd.f32 %v2611, %v3357
        %v3359 = vpop.f32.mrb[0].mxu0
        %v3360 = vadd.f32 %v2615, %v3359
        %v3361 = vpop.f32.mrb[0].mxu0
        %v3362 = vadd.f32 %v2611, %v3361
        %v3363 = vpop.f32.mrb[0].mxu0
        %v3364 = vadd.f32 %v2615, %v3363
        %3365 = vdwg.mxu0
        %3366 = vmatprep.subr.bf16.mxu0 %v3029
        %3367 = vmatpush1.bf16.msra.mxu0 %v3028
        %3368 = vmatprep.subr.bf16.mxu0 %v3037
        %3369 = vmatpush1.bf16.msra.mxu0 %v3036
        %3370 = vmatprep.subr.bf16.mxu0 %v3045
        %3371 = vmatpush1.bf16.msra.mxu0 %v3044
        %3372 = vmatprep.subr.bf16.mxu0 %v3053
        %3373 = vmatpush1.bf16.msra.mxu0 %v3052
        %3374 = vmatprep.subr.bf16.mxu0 %v3061
        %3375 = vmatpush1.bf16.msra.mxu0 %v3060
        %3376 = vmatprep.subr.bf16.mxu0 %v3069
        %3377 = vmatpush1.bf16.msra.mxu0 %v3068
        %3378 = vmatprep.subr.bf16.mxu0 %v3077
        %3379 = vmatpush1.bf16.msra.mxu0 %v3076
        %3380 = vmatprep.subr.bf16.mxu0 %v3085
        %3381 = vmatpush1.bf16.msra.mxu0 %v3084
        %3382 = vmatprep.subr.bf16.mxu0 %v3093
        %3383 = vmatpush1.bf16.msra.mxu0 %v3092
        %3384 = vmatprep.subr.bf16.mxu0 %v3101
        %3385 = vmatpush1.bf16.msra.mxu0 %v3100
        %3386 = vmatprep.subr.bf16.mxu0 %v3109
        %3387 = vmatpush1.bf16.msra.mxu0 %v3108
        %3388 = vmatprep.subr.bf16.mxu0 %v3117
        %3389 = vmatpush1.bf16.msra.mxu0 %v3116
        %3390 = vmatprep.subr.bf16.mxu0 %v3125
        %3391 = vmatpush1.bf16.msra.mxu0 %v3124
        %3392 = vmatprep.subr.bf16.mxu0 %v3133
        %3393 = vmatpush1.bf16.msra.mxu0 %v3132
        %3394 = vmatprep.subr.bf16.mxu0 %v3141
        %3395 = vmatpush1.bf16.msra.mxu0 %v3140
        %3396 = vmatprep.subr.bf16.mxu0 %v3149
        %3397 = vmatpush1.bf16.msra.mxu0 %v3148
        %3398 = vmatprep.mubr.bf16.mxu0 %v2469
        %3399 = vmatmul.mubr.bf16.gmra.mrb[0].mxu0 %v2468
        %v3400 = vpop.f32.mrb[0].mxu0
        %v3401 = vadd.f32 %v2619, %v3400
        %v3402 = vpop.f32.mrb[0].mxu0
        %v3403 = vadd.f32 %v2623, %v3402
        %v3404 = vpop.f32.mrb[0].mxu0
        %v3405 = vadd.f32 %v2619, %v3404
        %v3406 = vpop.f32.mrb[0].mxu0
        %v3407 = vadd.f32 %v2623, %v3406
        %3408 = vdwg.mxu0
        %3409 = vmatprep.subr.bf16.mxu0 %v3031
        %3410 = vmatpush1.bf16.msra.mxu0 %v3030
        %3411 = vmatprep.subr.bf16.mxu0 %v3039
        %3412 = vmatpush1.bf16.msra.mxu0 %v3038
        %3413 = vmatprep.subr.bf16.mxu0 %v3047
        %3414 = vmatpush1.bf16.msra.mxu0 %v3046
        %3415 = vmatprep.subr.bf16.mxu0 %v3055
        %3416 = vmatpush1.bf16.msra.mxu0 %v3054
        %3417 = vmatprep.subr.bf16.mxu0 %v3063
        %3418 = vmatpush1.bf16.msra.mxu0 %v3062
        %3419 = vmatprep.subr.bf16.mxu0 %v3071
        %3420 = vmatpush1.bf16.msra.mxu0 %v3070
        %3421 = vmatprep.subr.bf16.mxu0 %v3079
        %3422 = vmatpush1.bf16.msra.mxu0 %v3078
        %3423 = vmatprep.subr.bf16.mxu0 %v3087
        %3424 = vmatpush1.bf16.msra.mxu0 %v3086
        %3425 = vmatprep.subr.bf16.mxu0 %v3095
        %3426 = vmatpush1.bf16.msra.mxu0 %v3094
        %3427 = vmatprep.subr.bf16.mxu0 %v3103
        %3428 = vmatpush1.bf16.msra.mxu0 %v3102
        %3429 = vmatprep.subr.bf16.mxu0 %v3111
        %3430 = vmatpush1.bf16.msra.mxu0 %v3110
        %3431 = vmatprep.subr.bf16.mxu0 %v3119
        %3432 = vmatpush1.bf16.msra.mxu0 %v3118
        %3433 = vmatprep.subr.bf16.mxu0 %v3127
        %3434 = vmatpush1.bf16.msra.mxu0 %v3126
        %3435 = vmatprep.subr.bf16.mxu0 %v3135
        %3436 = vmatpush1.bf16.msra.mxu0 %v3134
        %3437 = vmatprep.subr.bf16.mxu0 %v3143
        %3438 = vmatpush1.bf16.msra.mxu0 %v3142
        %3439 = vmatprep.subr.bf16.mxu0 %v3151
        %3440 = vmatpush1.bf16.msra.mxu0 %v3150
        %3441 = vmatprep.mubr.bf16.mxu0 %v2469
        %3442 = vmatmul.mubr.bf16.gmra.mrb[0].mxu0 %v2468
        %v3443 = vpop.f32.mrb[0].mxu0
        %v3444 = vadd.f32 %v2627, %v3443
        %v3445 = vpop.f32.mrb[0].mxu0
        %v3446 = vadd.f32 %v2631, %v3445
        %v3447 = vpop.f32.mrb[0].mxu0
        %v3448 = vadd.f32 %v2627, %v3447
        %v3449 = vpop.f32.mrb[0].mxu0
        %v3450 = vadd.f32 %v2631, %v3449
        %3451 = vdwg.mxu0
        %v3452 = vmul.f32 %v3315, 0.70710677
        %v3453 = vmul.f32 %v3317, 0.70710677
        %v3454 = vmul.f32 %v3358, 0.70710677
        %v3455 = vmul.f32 %v3360, 0.70710677
        %v3456 = vmul.f32 %v3401, 0.70710677
        %v3457 = vmul.f32 %v3403, 0.70710677
        %v3458 = vmul.f32 %v3444, 0.70710677
        %v3459 = vmul.f32 %v3446, 0.70710677
        %v3460 = vmul.f32 %v3319, 0.70710677
        %v3461 = vmul.f32 %v3321, 0.70710677
        %v3462 = vmul.f32 %v3362, 0.70710677
        %v3463 = vmul.f32 %v3364, 0.70710677
        %v3464 = vmul.f32 %v3405, 0.70710677
        %v3465 = vmul.f32 %v3407, 0.70710677
        %v3466 = vmul.f32 %v3448, 0.70710677
        %v3467 = vmul.f32 %v3450, 0.70710677
        %v3468 = vand.u32 2147483647, %v3452
        %v3469 = vand.u32 2147483647, %v3453
        %v3470 = vand.u32 2147483647, %v3454
        %v3471 = vand.u32 2147483647, %v3455
        %v3472 = vand.u32 2147483647, %v3456
        %v3473 = vand.u32 2147483647, %v3457
        %v3474 = vand.u32 2147483647, %v3458
        %v3475 = vand.u32 2147483647, %v3459
        %v3476 = vand.u32 2147483647, %v3460
        %v3477 = vand.u32 2147483647, %v3461
        %v3478 = vand.u32 2147483647, %v3462
        %v3479 = vand.u32 2147483647, %v3463
        %v3480 = vand.u32 2147483647, %v3464
        %v3481 = vand.u32 2147483647, %v3465
        %v3482 = vand.u32 2147483647, %v3466
        %v3483 = vand.u32 2147483647, %v3467
        %v3484 = vmul.f32 %v3468, 0.3275911
        %v3485 = vmul.f32 %v3469, 0.3275911
        %v3486 = vmul.f32 %v3470, 0.3275911
        %v3487 = vmul.f32 %v3471, 0.3275911
        %v3488 = vmul.f32 %v3472, 0.3275911
        %v3489 = vmul.f32 %v3473, 0.3275911
        %v3490 = vmul.f32 %v3474, 0.3275911
        %v3491 = vmul.f32 %v3475, 0.3275911
        %v3492 = vmul.f32 %v3476, 0.3275911
        %v3493 = vmul.f32 %v3477, 0.3275911
        %v3494 = vmul.f32 %v3478, 0.3275911
        %v3495 = vmul.f32 %v3479, 0.3275911
        %v3496 = vmul.f32 %v3480, 0.3275911
        %v3497 = vmul.f32 %v3481, 0.3275911
        %v3498 = vmul.f32 %v3482, 0.3275911
        %v3499 = vmul.f32 %v3483, 0.3275911
        %v3500 = vadd.f32 %v3484, 1.0
        %v3501 = vadd.f32 %v3485, 1.0
        %v3502 = vadd.f32 %v3486, 1.0
        %v3503 = vadd.f32 %v3487, 1.0
        %v3504 = vadd.f32 %v3488, 1.0
        %v3505 = vadd.f32 %v3489, 1.0
        %v3506 = vadd.f32 %v3490, 1.0
        %v3507 = vadd.f32 %v3491, 1.0
        %v3508 = vadd.f32 %v3492, 1.0
        %v3509 = vadd.f32 %v3493, 1.0
        %v3510 = vadd.f32 %v3494, 1.0
        %v3511 = vadd.f32 %v3495, 1.0
        %v3512 = vadd.f32 %v3496, 1.0
        %v3513 = vadd.f32 %v3497, 1.0
        %v3514 = vadd.f32 %v3498, 1.0
        %v3515 = vadd.f32 %v3499, 1.0
        %v3516 = vrcp.pop %v3500
        %v3517 = vmul.f32 1.0, %v3516
        %v3518 = vrcp.pop %v3501
        %v3519 = vmul.f32 1.0, %v3518
        %v3520 = vrcp.pop %v3502
        %v3521 = vmul.f32 1.0, %v3520
        %v3522 = vrcp.pop %v3503
        %v3523 = vmul.f32 1.0, %v3522
        %v3524 = vrcp.pop %v3504
        %v3525 = vmul.f32 1.0, %v3524
        %v3526 = vrcp.pop %v3505
        %v3527 = vmul.f32 1.0, %v3526
        %v3528 = vrcp.pop %v3506
        %v3529 = vmul.f32 1.0, %v3528
        %v3530 = vrcp.pop %v3507
        %v3531 = vmul.f32 1.0, %v3530
        %v3532 = vrcp.pop %v3508
        %v3533 = vmul.f32 1.0, %v3532
        %v3534 = vrcp.pop %v3509
        %v3535 = vmul.f32 1.0, %v3534
        %v3536 = vrcp.pop %v3510
        %v3537 = vmul.f32 1.0, %v3536
        %v3538 = vrcp.pop %v3511
        %v3539 = vmul.f32 1.0, %v3538
        %v3540 = vrcp.pop %v3512
        %v3541 = vmul.f32 1.0, %v3540
        %v3542 = vrcp.pop %v3513
        %v3543 = vmul.f32 1.0, %v3542
        %v3544 = vrcp.pop %v3514
        %v3545 = vmul.f32 1.0, %v3544
        %v3546 = vrcp.pop %v3515
        %v3547 = vmul.f32 1.0, %v3546
        %v3548 = vmul.f32 %v3517, 1.0614054
        %v3549 = vmul.f32 %v3519, 1.0614054
        %v3550 = vmul.f32 %v3521, 1.0614054
        %v3551 = vmul.f32 %v3523, 1.0614054
        %v3552 = vmul.f32 %v3525, 1.0614054
        %v3553 = vmul.f32 %v3527, 1.0614054
        %v3554 = vmul.f32 %v3529, 1.0614054
        %v3555 = vmul.f32 %v3531, 1.0614054
        %v3556 = vmul.f32 %v3533, 1.0614054
        %v3557 = vmul.f32 %v3535, 1.0614054
        %v3558 = vmul.f32 %v3537, 1.0614054
        %v3559 = vmul.f32 %v3539, 1.0614054
        %v3560 = vmul.f32 %v3541, 1.0614054
        %v3561 = vmul.f32 %v3543, 1.0614054
        %v3562 = vmul.f32 %v3545, 1.0614054
        %v3563 = vmul.f32 %v3547, 1.0614054
        %v3564 = vadd.f32 %v3548, -1.4531521
        %v3565 = vadd.f32 %v3549, -1.4531521
        %v3566 = vadd.f32 %v3550, -1.4531521
        %v3567 = vadd.f32 %v3551, -1.4531521
        %v3568 = vadd.f32 %v3552, -1.4531521
        %v3569 = vadd.f32 %v3553, -1.4531521
        %v3570 = vadd.f32 %v3554, -1.4531521
        %v3571 = vadd.f32 %v3555, -1.4531521
        %v3572 = vadd.f32 %v3556, -1.4531521
        %v3573 = vadd.f32 %v3557, -1.4531521
        %v3574 = vadd.f32 %v3558, -1.4531521
        %v3575 = vadd.f32 %v3559, -1.4531521
        %v3576 = vadd.f32 %v3560, -1.4531521
        %v3577 = vadd.f32 %v3561, -1.4531521
        %v3578 = vadd.f32 %v3562, -1.4531521
        %v3579 = vadd.f32 %v3563, -1.4531521
        %v3580 = vmul.f32 %v3564, %v3517
        %v3581 = vmul.f32 %v3565, %v3519
        %v3582 = vmul.f32 %v3566, %v3521
        %v3583 = vmul.f32 %v3567, %v3523
        %v3584 = vmul.f32 %v3568, %v3525
        %v3585 = vmul.f32 %v3569, %v3527
        %v3586 = vmul.f32 %v3570, %v3529
        %v3587 = vmul.f32 %v3571, %v3531
        %v3588 = vmul.f32 %v3572, %v3533
        %v3589 = vmul.f32 %v3573, %v3535
        %v3590 = vmul.f32 %v3574, %v3537
        %v3591 = vmul.f32 %v3575, %v3539
        %v3592 = vmul.f32 %v3576, %v3541
        %v3593 = vmul.f32 %v3577, %v3543
        %v3594 = vmul.f32 %v3578, %v3545
        %v3595 = vmul.f32 %v3579, %v3547
        %v3596 = vadd.f32 %v3580, 1.4214138
        %v3597 = vadd.f32 %v3581, 1.4214138
        %v3598 = vadd.f32 %v3582, 1.4214138
        %v3599 = vadd.f32 %v3583, 1.4214138
        %v3600 = vadd.f32 %v3584, 1.4214138
        %v3601 = vadd.f32 %v3585, 1.4214138
        %v3602 = vadd.f32 %v3586, 1.4214138
        %v3603 = vadd.f32 %v3587, 1.4214138
        %v3604 = vadd.f32 %v3588, 1.4214138
        %v3605 = vadd.f32 %v3589, 1.4214138
        %v3606 = vadd.f32 %v3590, 1.4214138
        %v3607 = vadd.f32 %v3591, 1.4214138
        %v3608 = vadd.f32 %v3592, 1.4214138
        %v3609 = vadd.f32 %v3593, 1.4214138
        %v3610 = vadd.f32 %v3594, 1.4214138
        %v3611 = vadd.f32 %v3595, 1.4214138
        %v3612 = vmul.f32 %v3596, %v3517
        %v3613 = vmul.f32 %v3597, %v3519
        %v3614 = vmul.f32 %v3598, %v3521
        %v3615 = vmul.f32 %v3599, %v3523
        %v3616 = vmul.f32 %v3600, %v3525
        %v3617 = vmul.f32 %v3601, %v3527
        %v3618 = vmul.f32 %v3602, %v3529
        %v3619 = vmul.f32 %v3603, %v3531
        %v3620 = vmul.f32 %v3604, %v3533
        %v3621 = vmul.f32 %v3605, %v3535
        %v3622 = vmul.f32 %v3606, %v3537
        %v3623 = vmul.f32 %v3607, %v3539
        %v3624 = vmul.f32 %v3608, %v3541
        %v3625 = vmul.f32 %v3609, %v3543
        %v3626 = vmul.f32 %v3610, %v3545
        %v3627 = vmul.f32 %v3611, %v3547
        %v3628 = vadd.f32 %v3612, -0.28449672
        %v3629 = vadd.f32 %v3613, -0.28449672
        %v3630 = vadd.f32 %v3614, -0.28449672
        %v3631 = vadd.f32 %v3615, -0.28449672
        %v3632 = vadd.f32 %v3616, -0.28449672
        %v3633 = vadd.f32 %v3617, -0.28449672
        %v3634 = vadd.f32 %v3618, -0.28449672
        %v3635 = vadd.f32 %v3619, -0.28449672
        %v3636 = vadd.f32 %v3620, -0.28449672
        %v3637 = vadd.f32 %v3621, -0.28449672
        %v3638 = vadd.f32 %v3622, -0.28449672
        %v3639 = vadd.f32 %v3623, -0.28449672
        %v3640 = vadd.f32 %v3624, -0.28449672
        %v3641 = vadd.f32 %v3625, -0.28449672
        %v3642 = vadd.f32 %v3626, -0.28449672
        %v3643 = vadd.f32 %v3627, -0.28449672
        %v3644 = vmul.f32 %v3628, %v3517
        %v3645 = vmul.f32 %v3629, %v3519
        %v3646 = vmul.f32 %v3630, %v3521
        %v3647 = vmul.f32 %v3631, %v3523
        %v3648 = vmul.f32 %v3632, %v3525
        %v3649 = vmul.f32 %v3633, %v3527
        %v3650 = vmul.f32 %v3634, %v3529
        %v3651 = vmul.f32 %v3635, %v3531
        %v3652 = vmul.f32 %v3636, %v3533
        %v3653 = vmul.f32 %v3637, %v3535
        %v3654 = vmul.f32 %v3638, %v3537
        %v3655 = vmul.f32 %v3639, %v3539
        %v3656 = vmul.f32 %v3640, %v3541
        %v3657 = vmul.f32 %v3641, %v3543
        %v3658 = vmul.f32 %v3642, %v3545
        %v3659 = vmul.f32 %v3643, %v3547
        %v3660 = vadd.f32 %v3644, 0.2548296
        %v3661 = vadd.f32 %v3645, 0.2548296
        %v3662 = vadd.f32 %v3646, 0.2548296
        %v3663 = vadd.f32 %v3647, 0.2548296
        %v3664 = vadd.f32 %v3648, 0.2548296
        %v3665 = vadd.f32 %v3649, 0.2548296
        %v3666 = vadd.f32 %v3650, 0.2548296
        %v3667 = vadd.f32 %v3651, 0.2548296
        %v3668 = vadd.f32 %v3652, 0.2548296
        %v3669 = vadd.f32 %v3653, 0.2548296
        %v3670 = vadd.f32 %v3654, 0.2548296
        %v3671 = vadd.f32 %v3655, 0.2548296
        %v3672 = vadd.f32 %v3656, 0.2548296
        %v3673 = vadd.f32 %v3657, 0.2548296
        %v3674 = vadd.f32 %v3658, 0.2548296
        %v3675 = vadd.f32 %v3659, 0.2548296
        %v3676 = vmul.f32 %v3660, %v3517
        %v3677 = vmul.f32 %v3661, %v3519
        %v3678 = vmul.f32 %v3662, %v3521
        %v3679 = vmul.f32 %v3663, %v3523
        %v3680 = vmul.f32 %v3664, %v3525
        %v3681 = vmul.f32 %v3665, %v3527
        %v3682 = vmul.f32 %v3666, %v3529
        %v3683 = vmul.f32 %v3667, %v3531
        %v3684 = vmul.f32 %v3668, %v3533
        %v3685 = vmul.f32 %v3669, %v3535
        %v3686 = vmul.f32 %v3670, %v3537
        %v3687 = vmul.f32 %v3671, %v3539
        %v3688 = vmul.f32 %v3672, %v3541
        %v3689 = vmul.f32 %v3673, %v3543
        %v3690 = vmul.f32 %v3674, %v3545
        %v3691 = vmul.f32 %v3675, %v3547
        %v3692 = vsub.f32 0.0, %v3468
        %v3693 = vsub.f32 0.0, %v3469
        %v3694 = vsub.f32 0.0, %v3470
        %v3695 = vsub.f32 0.0, %v3471
        %v3696 = vsub.f32 0.0, %v3472
        %v3697 = vsub.f32 0.0, %v3473
        %v3698 = vsub.f32 0.0, %v3474
        %v3699 = vsub.f32 0.0, %v3475
        %v3700 = vsub.f32 0.0, %v3476
        %v3701 = vsub.f32 0.0, %v3477
        %v3702 = vsub.f32 0.0, %v3478
        %v3703 = vsub.f32 0.0, %v3479
        %v3704 = vsub.f32 0.0, %v3480
        %v3705 = vsub.f32 0.0, %v3481
        %v3706 = vsub.f32 0.0, %v3482
        %v3707 = vsub.f32 0.0, %v3483
        %v3708 = vmul.f32 %v3692, %v3468
        %v3709 = vmul.f32 %v3693, %v3469
        %v3710 = vmul.f32 %v3694, %v3470
        %v3711 = vmul.f32 %v3695, %v3471
        %v3712 = vmul.f32 %v3696, %v3472
        %v3713 = vmul.f32 %v3697, %v3473
        %v3714 = vmul.f32 %v3698, %v3474
        %v3715 = vmul.f32 %v3699, %v3475
        %v3716 = vmul.f32 %v3700, %v3476
        %v3717 = vmul.f32 %v3701, %v3477
        %v3718 = vmul.f32 %v3702, %v3478
        %v3719 = vmul.f32 %v3703, %v3479
        %v3720 = vmul.f32 %v3704, %v3480
        %v3721 = vmul.f32 %v3705, %v3481
        %v3722 = vmul.f32 %v3706, %v3482
        %v3723 = vmul.f32 %v3707, %v3483
        %v3724 = vmul.f32 %v3708, 1.442695
        %v3725 = vpow.pop %v3724
        %v3726 = vmul.f32 %v3709, 1.442695
        %v3727 = vpow.pop %v3726
        %v3728 = vmul.f32 %v3710, 1.442695
        %v3729 = vpow.pop %v3728
        %v3730 = vmul.f32 %v3711, 1.442695
        %v3731 = vpow.pop %v3730
        %v3732 = vmul.f32 %v3712, 1.442695
        %v3733 = vpow.pop %v3732
        %v3734 = vmul.f32 %v3713, 1.442695
        %v3735 = vpow.pop %v3734
        %v3736 = vmul.f32 %v3714, 1.442695
        %v3737 = vpow.pop %v3736
        %v3738 = vmul.f32 %v3715, 1.442695
        %v3739 = vpow.pop %v3738
        %v3740 = vmul.f32 %v3716, 1.442695
        %v3741 = vpow.pop %v3740
        %v3742 = vmul.f32 %v3717, 1.442695
        %v3743 = vpow.pop %v3742
        %v3744 = vmul.f32 %v3718, 1.442695
        %v3745 = vpow.pop %v3744
        %v3746 = vmul.f32 %v3719, 1.442695
        %v3747 = vpow.pop %v3746
        %v3748 = vmul.f32 %v3720, 1.442695
        %v3749 = vpow.pop %v3748
        %v3750 = vmul.f32 %v3721, 1.442695
        %v3751 = vpow.pop %v3750
        %v3752 = vmul.f32 %v3722, 1.442695
        %v3753 = vpow.pop %v3752
        %v3754 = vmul.f32 %v3723, 1.442695
        %v3755 = vpow.pop %v3754
        %v3756 = vmul.f32 %v3676, %v3725
        %v3757 = vmul.f32 %v3677, %v3727
        %v3758 = vmul.f32 %v3678, %v3729
        %v3759 = vmul.f32 %v3679, %v3731
        %v3760 = vmul.f32 %v3680, %v3733
        %v3761 = vmul.f32 %v3681, %v3735
        %v3762 = vmul.f32 %v3682, %v3737
        %v3763 = vmul.f32 %v3683, %v3739
        %v3764 = vmul.f32 %v3684, %v3741
        %v3765 = vmul.f32 %v3685, %v3743
        %v3766 = vmul.f32 %v3686, %v3745
        %v3767 = vmul.f32 %v3687, %v3747
        %v3768 = vmul.f32 %v3688, %v3749
        %v3769 = vmul.f32 %v3689, %v3751
        %v3770 = vmul.f32 %v3690, %v3753
        %v3771 = vmul.f32 %v3691, %v3755
        %v3772 = vsub.f32 1.0, %v3756
        %v3773 = vsub.f32 1.0, %v3757
        %v3774 = vsub.f32 1.0, %v3758
        %v3775 = vsub.f32 1.0, %v3759
        %v3776 = vsub.f32 1.0, %v3760
        %v3777 = vsub.f32 1.0, %v3761
        %v3778 = vsub.f32 1.0, %v3762
        %v3779 = vsub.f32 1.0, %v3763
        %v3780 = vsub.f32 1.0, %v3764
        %v3781 = vsub.f32 1.0, %v3765
        %v3782 = vsub.f32 1.0, %v3766
        %v3783 = vsub.f32 1.0, %v3767
        %v3784 = vsub.f32 1.0, %v3768
        %v3785 = vsub.f32 1.0, %v3769
        %v3786 = vsub.f32 1.0, %v3770
        %v3787 = vsub.f32 1.0, %v3771
        %vm3788 = vcmp.ge.f32.partialorder %v3452, 0.0
        %vm3789 = vcmp.ge.f32.partialorder %v3453, 0.0
        %vm3790 = vcmp.ge.f32.partialorder %v3454, 0.0
        %vm3791 = vcmp.ge.f32.partialorder %v3455, 0.0
        %vm3792 = vcmp.ge.f32.partialorder %v3456, 0.0
        %vm3793 = vcmp.ge.f32.partialorder %v3457, 0.0
        %vm3794 = vcmp.ge.f32.partialorder %v3458, 0.0
        %vm3795 = vcmp.ge.f32.partialorder %v3459, 0.0
        %vm3796 = vcmp.ge.f32.partialorder %v3460, 0.0
        %vm3797 = vcmp.ge.f32.partialorder %v3461, 0.0
        %vm3798 = vcmp.ge.f32.partialorder %v3462, 0.0
        %vm3799 = vcmp.ge.f32.partialorder %v3463, 0.0
        %vm3800 = vcmp.ge.f32.partialorder %v3464, 0.0
        %vm3801 = vcmp.ge.f32.partialorder %v3465, 0.0
        %vm3802 = vcmp.ge.f32.partialorder %v3466, 0.0
        %vm3803 = vcmp.ge.f32.partialorder %v3467, 0.0
        %v3804 = vsub.f32 0.0, %v3772
        %v3805 = vsub.f32 0.0, %v3773
        %v3806 = vsub.f32 0.0, %v3774
        %v3807 = vsub.f32 0.0, %v3775
        %v3808 = vsub.f32 0.0, %v3776
        %v3809 = vsub.f32 0.0, %v3777
        %v3810 = vsub.f32 0.0, %v3778
        %v3811 = vsub.f32 0.0, %v3779
        %v3812 = vsub.f32 0.0, %v3780
        %v3813 = vsub.f32 0.0, %v3781
        %v3814 = vsub.f32 0.0, %v3782
        %v3815 = vsub.f32 0.0, %v3783
        %v3816 = vsub.f32 0.0, %v3784
        %v3817 = vsub.f32 0.0, %v3785
        %v3818 = vsub.f32 0.0, %v3786
        %v3819 = vsub.f32 0.0, %v3787
        %v3820 = vsel %vm3788, %v3772, %v3804
        %v3821 = vsel %vm3789, %v3773, %v3805
        %v3822 = vsel %vm3790, %v3774, %v3806
        %v3823 = vsel %vm3791, %v3775, %v3807
        %v3824 = vsel %vm3792, %v3776, %v3808
        %v3825 = vsel %vm3793, %v3777, %v3809
        %v3826 = vsel %vm3794, %v3778, %v3810
        %v3827 = vsel %vm3795, %v3779, %v3811
        %v3828 = vsel %vm3796, %v3780, %v3812
        %v3829 = vsel %vm3797, %v3781, %v3813
        %v3830 = vsel %vm3798, %v3782, %v3814
        %v3831 = vsel %vm3799, %v3783, %v3815
        %v3832 = vsel %vm3800, %v3784, %v3816
        %v3833 = vsel %vm3801, %v3785, %v3817
        %v3834 = vsel %vm3802, %v3786, %v3818
        %v3835 = vsel %vm3803, %v3787, %v3819
        %v3836 = vmul.f32 %v3315, 0.5
        %v3837 = vmul.f32 %v3317, 0.5
        %v3838 = vmul.f32 %v3358, 0.5
        %v3839 = vmul.f32 %v3360, 0.5
        %v3840 = vmul.f32 %v3401, 0.5
        %v3841 = vmul.f32 %v3403, 0.5
        %v3842 = vmul.f32 %v3444, 0.5
        %v3843 = vmul.f32 %v3446, 0.5
        %v3844 = vmul.f32 %v3319, 0.5
        %v3845 = vmul.f32 %v3321, 0.5
        %v3846 = vmul.f32 %v3362, 0.5
        %v3847 = vmul.f32 %v3364, 0.5
        %v3848 = vmul.f32 %v3405, 0.5
        %v3849 = vmul.f32 %v3407, 0.5
        %v3850 = vmul.f32 %v3448, 0.5
        %v3851 = vmul.f32 %v3450, 0.5
        %v3852 = vadd.f32 %v3820, 1.0
        %v3853 = vadd.f32 %v3821, 1.0
        %v3854 = vadd.f32 %v3822, 1.0
        %v3855 = vadd.f32 %v3823, 1.0
        %v3856 = vadd.f32 %v3824, 1.0
        %v3857 = vadd.f32 %v3825, 1.0
        %v3858 = vadd.f32 %v3826, 1.0
        %v3859 = vadd.f32 %v3827, 1.0
        %v3860 = vadd.f32 %v3828, 1.0
        %v3861 = vadd.f32 %v3829, 1.0
        %v3862 = vadd.f32 %v3830, 1.0
        %v3863 = vadd.f32 %v3831, 1.0
        %v3864 = vadd.f32 %v3832, 1.0
        %v3865 = vadd.f32 %v3833, 1.0
        %v3866 = vadd.f32 %v3834, 1.0
        %v3867 = vadd.f32 %v3835, 1.0
        %v3868 = vmul.f32 %v3836, %v3852
        %v3869 = vmul.f32 %v3837, %v3853
        %v3870 = vmul.f32 %v3838, %v3854
        %v3871 = vmul.f32 %v3839, %v3855
        %v3872 = vmul.f32 %v3840, %v3856
        %v3873 = vmul.f32 %v3841, %v3857
        %v3874 = vmul.f32 %v3842, %v3858
        %v3875 = vmul.f32 %v3843, %v3859
        %v3876 = vmul.f32 %v3844, %v3860
        %v3877 = vmul.f32 %v3845, %v3861
        %v3878 = vmul.f32 %v3846, %v3862
        %v3879 = vmul.f32 %v3847, %v3863
        %v3880 = vmul.f32 %v3848, %v3864
        %v3881 = vmul.f32 %v3849, %v3865
        %v3882 = vmul.f32 %v3850, %v3866
        %v3883 = vmul.f32 %v3851, %v3867
        %v3884 = vpack.c.bf16 %v3876, %v3868
        %v3885 = vpack.c.bf16 %v3877, %v3869
        %v3886 = vpack.c.bf16 %v3878, %v3870
        %v3887 = vpack.c.bf16 %v3879, %v3871
        %v3888 = vpack.c.bf16 %v3880, %v3872
        %v3889 = vpack.c.bf16 %v3881, %v3873
        %v3890 = vpack.c.bf16 %v3882, %v3874
        %v3891 = vpack.c.bf16 %v3883, %v3875
        %v3892 = vld [vmem:[%s19] sm:$0xff]
        %v3893 = vld [vmem:[%s19 + $0x8] sm:$0xff]
        %v3894 = vld [vmem:[%s19 + $0x10] sm:$0xff]
        %v3895 = vld [vmem:[%s19 + $0x18] sm:$0xff]
        %v3896 = vld [vmem:[%s19 + $0x20] sm:$0xff]
        %v3897 = vld [vmem:[%s19 + $0x28] sm:$0xff]
        %v3898 = vld [vmem:[%s19 + $0x30] sm:$0xff]
        %v3899 = vld [vmem:[%s19 + $0x38] sm:$0xff]
        %v3900 = vld [vmem:[%s19 + $0x40] sm:$0xff]
        %v3901 = vld [vmem:[%s19 + $0x48] sm:$0xff]
        %v3902 = vld [vmem:[%s19 + $0x50] sm:$0xff]
        %v3903 = vld [vmem:[%s19 + $0x58] sm:$0xff]
        %v3904 = vld [vmem:[%s19 + $0x60] sm:$0xff]
        %v3905 = vld [vmem:[%s19 + $0x68] sm:$0xff]
        %v3906 = vld [vmem:[%s19 + $0x70] sm:$0xff]
        %v3907 = vld [vmem:[%s19 + $0x78] sm:$0xff]
        %v3908 = vld [vmem:[%s19 + $0x80] sm:$0xff]
        %v3909 = vld [vmem:[%s19 + $0x88] sm:$0xff]
        %v3910 = vld [vmem:[%s19 + $0x90] sm:$0xff]
        %v3911 = vld [vmem:[%s19 + $0x98] sm:$0xff]
        %v3912 = vld [vmem:[%s19 + $0xa0] sm:$0xff]
        %v3913 = vld [vmem:[%s19 + $0xa8] sm:$0xff]
        %v3914 = vld [vmem:[%s19 + $0xb0] sm:$0xff]
        %v3915 = vld [vmem:[%s19 + $0xb8] sm:$0xff]
        %v3916 = vld [vmem:[%s19 + $0xc0] sm:$0xff]
        %v3917 = vld [vmem:[%s19 + $0xc8] sm:$0xff]
        %v3918 = vld [vmem:[%s19 + $0xd0] sm:$0xff]
        %v3919 = vld [vmem:[%s19 + $0xd8] sm:$0xff]
        %v3920 = vld [vmem:[%s19 + $0xe0] sm:$0xff]
        %v3921 = vld [vmem:[%s19 + $0xe8] sm:$0xff]
        %v3922 = vld [vmem:[%s19 + $0xf0] sm:$0xff]
        %v3923 = vld [vmem:[%s19 + $0xf8] sm:$0xff]
        %v3924 = vld [vmem:[%s19 + $0x100] sm:$0xff]
        %v3925 = vld [vmem:[%s19 + $0x108] sm:$0xff]
        %v3926 = vld [vmem:[%s19 + $0x110] sm:$0xff]
        %v3927 = vld [vmem:[%s19 + $0x118] sm:$0xff]
        %v3928 = vld [vmem:[%s19 + $0x120] sm:$0xff]
        %v3929 = vld [vmem:[%s19 + $0x128] sm:$0xff]
        %v3930 = vld [vmem:[%s19 + $0x130] sm:$0xff]
        %v3931 = vld [vmem:[%s19 + $0x138] sm:$0xff]
        %v3932 = vld [vmem:[%s19 + $0x140] sm:$0xff]
        %v3933 = vld [vmem:[%s19 + $0x148] sm:$0xff]
        %v3934 = vld [vmem:[%s19 + $0x150] sm:$0xff]
        %v3935 = vld [vmem:[%s19 + $0x158] sm:$0xff]
        %v3936 = vld [vmem:[%s19 + $0x160] sm:$0xff]
        %v3937 = vld [vmem:[%s19 + $0x168] sm:$0xff]
        %v3938 = vld [vmem:[%s19 + $0x170] sm:$0xff]
        %v3939 = vld [vmem:[%s19 + $0x178] sm:$0xff]
        %v3940 = vld [vmem:[%s19 + $0x180] sm:$0xff]
        %v3941 = vld [vmem:[%s19 + $0x188] sm:$0xff]
        %v3942 = vld [vmem:[%s19 + $0x190] sm:$0xff]
        %v3943 = vld [vmem:[%s19 + $0x198] sm:$0xff]
        %v3944 = vld [vmem:[%s19 + $0x1a0] sm:$0xff]
        %v3945 = vld [vmem:[%s19 + $0x1a8] sm:$0xff]
        %v3946 = vld [vmem:[%s19 + $0x1b0] sm:$0xff]
        %v3947 = vld [vmem:[%s19 + $0x1b8] sm:$0xff]
        %v3948 = vld [vmem:[%s19 + $0x1c0] sm:$0xff]
        %v3949 = vld [vmem:[%s19 + $0x1c8] sm:$0xff]
        %v3950 = vld [vmem:[%s19 + $0x1d0] sm:$0xff]
        %v3951 = vld [vmem:[%s19 + $0x1d8] sm:$0xff]
        %v3952 = vld [vmem:[%s19 + $0x1e0] sm:$0xff]
        %v3953 = vld [vmem:[%s19 + $0x1e8] sm:$0xff]
        %v3954 = vld [vmem:[%s19 + $0x1f0] sm:$0xff]
        %v3955 = vld [vmem:[%s19 + $0x1f8] sm:$0xff]
        %v3956 = vld [vmem:[%s19 + $0x200] sm:$0xff]
        %v3957 = vld [vmem:[%s19 + $0x208] sm:$0xff]
        %v3958 = vld [vmem:[%s19 + $0x210] sm:$0xff]
        %v3959 = vld [vmem:[%s19 + $0x218] sm:$0xff]
        %v3960 = vld [vmem:[%s19 + $0x220] sm:$0xff]
        %v3961 = vld [vmem:[%s19 + $0x228] sm:$0xff]
        %v3962 = vld [vmem:[%s19 + $0x230] sm:$0xff]
        %v3963 = vld [vmem:[%s19 + $0x238] sm:$0xff]
        %v3964 = vld [vmem:[%s19 + $0x240] sm:$0xff]
        %v3965 = vld [vmem:[%s19 + $0x248] sm:$0xff]
        %v3966 = vld [vmem:[%s19 + $0x250] sm:$0xff]
        %v3967 = vld [vmem:[%s19 + $0x258] sm:$0xff]
        %v3968 = vld [vmem:[%s19 + $0x260] sm:$0xff]
        %v3969 = vld [vmem:[%s19 + $0x268] sm:$0xff]
        %v3970 = vld [vmem:[%s19 + $0x270] sm:$0xff]
        %v3971 = vld [vmem:[%s19 + $0x278] sm:$0xff]
        %v3972 = vld [vmem:[%s19 + $0x280] sm:$0xff]
        %v3973 = vld [vmem:[%s19 + $0x288] sm:$0xff]
        %v3974 = vld [vmem:[%s19 + $0x290] sm:$0xff]
        %v3975 = vld [vmem:[%s19 + $0x298] sm:$0xff]
        %v3976 = vld [vmem:[%s19 + $0x2a0] sm:$0xff]
        %v3977 = vld [vmem:[%s19 + $0x2a8] sm:$0xff]
        %v3978 = vld [vmem:[%s19 + $0x2b0] sm:$0xff]
        %v3979 = vld [vmem:[%s19 + $0x2b8] sm:$0xff]
        %v3980 = vld [vmem:[%s19 + $0x2c0] sm:$0xff]
        %v3981 = vld [vmem:[%s19 + $0x2c8] sm:$0xff]
        %v3982 = vld [vmem:[%s19 + $0x2d0] sm:$0xff]
        %v3983 = vld [vmem:[%s19 + $0x2d8] sm:$0xff]
        %v3984 = vld [vmem:[%s19 + $0x2e0] sm:$0xff]
        %v3985 = vld [vmem:[%s19 + $0x2e8] sm:$0xff]
        %v3986 = vld [vmem:[%s19 + $0x2f0] sm:$0xff]
        %v3987 = vld [vmem:[%s19 + $0x2f8] sm:$0xff]
        %v3988 = vld [vmem:[%s19 + $0x300] sm:$0xff]
        %v3989 = vld [vmem:[%s19 + $0x308] sm:$0xff]
        %v3990 = vld [vmem:[%s19 + $0x310] sm:$0xff]
        %v3991 = vld [vmem:[%s19 + $0x318] sm:$0xff]
        %v3992 = vld [vmem:[%s19 + $0x320] sm:$0xff]
        %v3993 = vld [vmem:[%s19 + $0x328] sm:$0xff]
        %v3994 = vld [vmem:[%s19 + $0x330] sm:$0xff]
        %v3995 = vld [vmem:[%s19 + $0x338] sm:$0xff]
        %v3996 = vld [vmem:[%s19 + $0x340] sm:$0xff]
        %v3997 = vld [vmem:[%s19 + $0x348] sm:$0xff]
        %v3998 = vld [vmem:[%s19 + $0x350] sm:$0xff]
        %v3999 = vld [vmem:[%s19 + $0x358] sm:$0xff]
        %v4000 = vld [vmem:[%s19 + $0x360] sm:$0xff]
        %v4001 = vld [vmem:[%s19 + $0x368] sm:$0xff]
        %v4002 = vld [vmem:[%s19 + $0x370] sm:$0xff]
        %v4003 = vld [vmem:[%s19 + $0x378] sm:$0xff]
        %v4004 = vld [vmem:[%s19 + $0x380] sm:$0xff]
        %v4005 = vld [vmem:[%s19 + $0x388] sm:$0xff]
        %v4006 = vld [vmem:[%s19 + $0x390] sm:$0xff]
        %v4007 = vld [vmem:[%s19 + $0x398] sm:$0xff]
        %v4008 = vld [vmem:[%s19 + $0x3a0] sm:$0xff]
        %v4009 = vld [vmem:[%s19 + $0x3a8] sm:$0xff]
        %v4010 = vld [vmem:[%s19 + $0x3b0] sm:$0xff]
        %v4011 = vld [vmem:[%s19 + $0x3b8] sm:$0xff]
        %v4012 = vld [vmem:[%s19 + $0x3c0] sm:$0xff]
        %v4013 = vld [vmem:[%s19 + $0x3c8] sm:$0xff]
        %v4014 = vld [vmem:[%s19 + $0x3d0] sm:$0xff]
        %v4015 = vld [vmem:[%s19 + $0x3d8] sm:$0xff]
        %v4016 = vld [vmem:[%s19 + $0x3e0] sm:$0xff]
        %v4017 = vld [vmem:[%s19 + $0x3e8] sm:$0xff]
        %v4018 = vld [vmem:[%s19 + $0x3f0] sm:$0xff]
        %v4019 = vld [vmem:[%s19 + $0x3f8] sm:$0xff]
        %v4148 = vunpack.c.l.b16 %v3892
        %v4149 = vunpack.c.h.b16 %v3892
        %v4150 = vunpack.c.l.b16 %v3893
        %v4151 = vunpack.c.h.b16 %v3893
        %v4152 = vunpack.c.l.b16 %v3894
        %v4153 = vunpack.c.h.b16 %v3894
        %v4154 = vunpack.c.l.b16 %v3895
        %v4155 = vunpack.c.h.b16 %v3895
        %v4156 = vunpack.c.l.b16 %v3896
        %v4157 = vunpack.c.h.b16 %v3896
        %v4158 = vunpack.c.l.b16 %v3897
        %v4159 = vunpack.c.h.b16 %v3897
        %v4160 = vunpack.c.l.b16 %v3898
        %v4161 = vunpack.c.h.b16 %v3898
        %v4162 = vunpack.c.l.b16 %v3899
        %v4163 = vunpack.c.h.b16 %v3899
        %v4164 = vunpack.c.l.b16 %v3900
        %v4165 = vunpack.c.h.b16 %v3900
        %v4166 = vunpack.c.l.b16 %v3901
        %v4167 = vunpack.c.h.b16 %v3901
        %v4168 = vunpack.c.l.b16 %v3902
        %v4169 = vunpack.c.h.b16 %v3902
        %v4170 = vunpack.c.l.b16 %v3903
        %v4171 = vunpack.c.h.b16 %v3903
        %v4172 = vunpack.c.l.b16 %v3904
        %v4173 = vunpack.c.h.b16 %v3904
        %v4174 = vunpack.c.l.b16 %v3905
        %v4175 = vunpack.c.h.b16 %v3905
        %v4176 = vunpack.c.l.b16 %v3906
        %v4177 = vunpack.c.h.b16 %v3906
        %v4178 = vunpack.c.l.b16 %v3907
        %v4179 = vunpack.c.h.b16 %v3907
        %v4180 = vunpack.c.l.b16 %v3908
        %v4181 = vunpack.c.h.b16 %v3908
        %v4182 = vunpack.c.l.b16 %v3909
        %v4183 = vunpack.c.h.b16 %v3909
        %v4184 = vunpack.c.l.b16 %v3910
        %v4185 = vunpack.c.h.b16 %v3910
        %v4186 = vunpack.c.l.b16 %v3911
        %v4187 = vunpack.c.h.b16 %v3911
        %v4188 = vunpack.c.l.b16 %v3912
        %v4189 = vunpack.c.h.b16 %v3912
        %v4190 = vunpack.c.l.b16 %v3913
        %v4191 = vunpack.c.h.b16 %v3913
        %v4192 = vunpack.c.l.b16 %v3914
        %v4193 = vunpack.c.h.b16 %v3914
        %v4194 = vunpack.c.l.b16 %v3915
        %v4195 = vunpack.c.h.b16 %v3915
        %v4196 = vunpack.c.l.b16 %v3916
        %v4197 = vunpack.c.h.b16 %v3916
        %v4198 = vunpack.c.l.b16 %v3917
        %v4199 = vunpack.c.h.b16 %v3917
        %v4200 = vunpack.c.l.b16 %v3918
        %v4201 = vunpack.c.h.b16 %v3918
        %v4202 = vunpack.c.l.b16 %v3919
        %v4203 = vunpack.c.h.b16 %v3919
        %v4204 = vunpack.c.l.b16 %v3920
        %v4205 = vunpack.c.h.b16 %v3920
        %v4206 = vunpack.c.l.b16 %v3921
        %v4207 = vunpack.c.h.b16 %v3921
        %v4208 = vunpack.c.l.b16 %v3922
        %v4209 = vunpack.c.h.b16 %v3922
        %v4210 = vunpack.c.l.b16 %v3923
        %v4211 = vunpack.c.h.b16 %v3923
        %v4212 = vunpack.c.l.b16 %v3924
        %v4213 = vunpack.c.h.b16 %v3924
        %v4214 = vunpack.c.l.b16 %v3925
        %v4215 = vunpack.c.h.b16 %v3925
        %v4216 = vunpack.c.l.b16 %v3926
        %v4217 = vunpack.c.h.b16 %v3926
        %v4218 = vunpack.c.l.b16 %v3927
        %v4219 = vunpack.c.h.b16 %v3927
        %v4220 = vunpack.c.l.b16 %v3928
        %v4221 = vunpack.c.h.b16 %v3928
        %v4222 = vunpack.c.l.b16 %v3929
        %v4223 = vunpack.c.h.b16 %v3929
        %v4224 = vunpack.c.l.b16 %v3930
        %v4225 = vunpack.c.h.b16 %v3930
        %v4226 = vunpack.c.l.b16 %v3931
        %v4227 = vunpack.c.h.b16 %v3931
        %v4228 = vunpack.c.l.b16 %v3932
        %v4229 = vunpack.c.h.b16 %v3932
        %v4230 = vunpack.c.l.b16 %v3933
        %v4231 = vunpack.c.h.b16 %v3933
        %v4232 = vunpack.c.l.b16 %v3934
        %v4233 = vunpack.c.h.b16 %v3934
        %v4234 = vunpack.c.l.b16 %v3935
        %v4235 = vunpack.c.h.b16 %v3935
        %v4236 = vunpack.c.l.b16 %v3936
        %v4237 = vunpack.c.h.b16 %v3936
        %v4238 = vunpack.c.l.b16 %v3937
        %v4239 = vunpack.c.h.b16 %v3937
        %v4240 = vunpack.c.l.b16 %v3938
        %v4241 = vunpack.c.h.b16 %v3938
        %v4242 = vunpack.c.l.b16 %v3939
        %v4243 = vunpack.c.h.b16 %v3939
        %v4244 = vunpack.c.l.b16 %v3940
        %v4245 = vunpack.c.h.b16 %v3940
        %v4246 = vunpack.c.l.b16 %v3941
        %v4247 = vunpack.c.h.b16 %v3941
        %v4248 = vunpack.c.l.b16 %v3942
        %v4249 = vunpack.c.h.b16 %v3942
        %v4250 = vunpack.c.l.b16 %v3943
        %v4251 = vunpack.c.h.b16 %v3943
        %v4252 = vunpack.c.l.b16 %v3944
        %v4253 = vunpack.c.h.b16 %v3944
        %v4254 = vunpack.c.l.b16 %v3945
        %v4255 = vunpack.c.h.b16 %v3945
        %v4256 = vunpack.c.l.b16 %v3946
        %v4257 = vunpack.c.h.b16 %v3946
        %v4258 = vunpack.c.l.b16 %v3947
        %v4259 = vunpack.c.h.b16 %v3947
        %v4260 = vunpack.c.l.b16 %v3948
        %v4261 = vunpack.c.h.b16 %v3948
        %v4262 = vunpack.c.l.b16 %v3949
        %v4263 = vunpack.c.h.b16 %v3949
        %v4264 = vunpack.c.l.b16 %v3950
        %v4265 = vunpack.c.h.b16 %v3950
        %v4266 = vunpack.c.l.b16 %v3951
        %v4267 = vunpack.c.h.b16 %v3951
        %v4268 = vunpack.c.l.b16 %v3952
        %v4269 = vunpack.c.h.b16 %v3952
        %v4270 = vunpack.c.l.b16 %v3953
        %v4271 = vunpack.c.h.b16 %v3953
        %v4272 = vunpack.c.l.b16 %v3954
        %v4273 = vunpack.c.h.b16 %v3954
        %v4274 = vunpack.c.l.b16 %v3955
        %v4275 = vunpack.c.h.b16 %v3955
        %v4276 = vunpack.c.l.b16 %v3956
        %v4277 = vunpack.c.h.b16 %v3956
        %v4278 = vunpack.c.l.b16 %v3957
        %v4279 = vunpack.c.h.b16 %v3957
        %v4280 = vunpack.c.l.b16 %v3958
        %v4281 = vunpack.c.h.b16 %v3958
        %v4282 = vunpack.c.l.b16 %v3959
        %v4283 = vunpack.c.h.b16 %v3959
        %v4284 = vunpack.c.l.b16 %v3960
        %v4285 = vunpack.c.h.b16 %v3960
        %v4286 = vunpack.c.l.b16 %v3961
        %v4287 = vunpack.c.h.b16 %v3961
        %v4288 = vunpack.c.l.b16 %v3962
        %v4289 = vunpack.c.h.b16 %v3962
        %v4290 = vunpack.c.l.b16 %v3963
        %v4291 = vunpack.c.h.b16 %v3963
        %v4292 = vunpack.c.l.b16 %v3964
        %v4293 = vunpack.c.h.b16 %v3964
        %v4294 = vunpack.c.l.b16 %v3965
        %v4295 = vunpack.c.h.b16 %v3965
        %v4296 = vunpack.c.l.b16 %v3966
        %v4297 = vunpack.c.h.b16 %v3966
        %v4298 = vunpack.c.l.b16 %v3967
        %v4299 = vunpack.c.h.b16 %v3967
        %v4300 = vunpack.c.l.b16 %v3968
        %v4301 = vunpack.c.h.b16 %v3968
        %v4302 = vunpack.c.l.b16 %v3969
        %v4303 = vunpack.c.h.b16 %v3969
        %v4304 = vunpack.c.l.b16 %v3970
        %v4305 = vunpack.c.h.b16 %v3970
        %v4306 = vunpack.c.l.b16 %v3971
        %v4307 = vunpack.c.h.b16 %v3971
        %v4308 = vunpack.c.l.b16 %v3972
        %v4309 = vunpack.c.h.b16 %v3972
        %v4310 = vunpack.c.l.b16 %v3973
        %v4311 = vunpack.c.h.b16 %v3973
        %v4312 = vunpack.c.l.b16 %v3974
        %v4313 = vunpack.c.h.b16 %v3974
        %v4314 = vunpack.c.l.b16 %v3975
        %v4315 = vunpack.c.h.b16 %v3975
        %v4316 = vunpack.c.l.b16 %v3976
        %v4317 = vunpack.c.h.b16 %v3976
        %v4318 = vunpack.c.l.b16 %v3977
        %v4319 = vunpack.c.h.b16 %v3977
        %v4320 = vunpack.c.l.b16 %v3978
        %v4321 = vunpack.c.h.b16 %v3978
        %v4322 = vunpack.c.l.b16 %v3979
        %v4323 = vunpack.c.h.b16 %v3979
        %v4324 = vunpack.c.l.b16 %v3980
        %v4325 = vunpack.c.h.b16 %v3980
        %v4326 = vunpack.c.l.b16 %v3981
        %v4327 = vunpack.c.h.b16 %v3981
        %v4328 = vunpack.c.l.b16 %v3982
        %v4329 = vunpack.c.h.b16 %v3982
        %v4330 = vunpack.c.l.b16 %v3983
        %v4331 = vunpack.c.h.b16 %v3983
        %v4332 = vunpack.c.l.b16 %v3984
        %v4333 = vunpack.c.h.b16 %v3984
        %v4334 = vunpack.c.l.b16 %v3985
        %v4335 = vunpack.c.h.b16 %v3985
        %v4336 = vunpack.c.l.b16 %v3986
        %v4337 = vunpack.c.h.b16 %v3986
        %v4338 = vunpack.c.l.b16 %v3987
        %v4339 = vunpack.c.h.b16 %v3987
        %v4340 = vunpack.c.l.b16 %v3988
        %v4341 = vunpack.c.h.b16 %v3988
        %v4342 = vunpack.c.l.b16 %v3989
        %v4343 = vunpack.c.h.b16 %v3989
        %v4344 = vunpack.c.l.b16 %v3990
        %v4345 = vunpack.c.h.b16 %v3990
        %v4346 = vunpack.c.l.b16 %v3991
        %v4347 = vunpack.c.h.b16 %v3991
        %v4348 = vunpack.c.l.b16 %v3992
        %v4349 = vunpack.c.h.b16 %v3992
        %v4350 = vunpack.c.l.b16 %v3993
        %v4351 = vunpack.c.h.b16 %v3993
        %v4352 = vunpack.c.l.b16 %v3994
        %v4353 = vunpack.c.h.b16 %v3994
        %v4354 = vunpack.c.l.b16 %v3995
        %v4355 = vunpack.c.h.b16 %v3995
        %v4356 = vunpack.c.l.b16 %v3996
        %v4357 = vunpack.c.h.b16 %v3996
        %v4358 = vunpack.c.l.b16 %v3997
        %v4359 = vunpack.c.h.b16 %v3997
        %v4360 = vunpack.c.l.b16 %v3998
        %v4361 = vunpack.c.h.b16 %v3998
        %v4362 = vunpack.c.l.b16 %v3999
        %v4363 = vunpack.c.h.b16 %v3999
        %v4364 = vunpack.c.l.b16 %v4000
        %v4365 = vunpack.c.h.b16 %v4000
        %v4366 = vunpack.c.l.b16 %v4001
        %v4367 = vunpack.c.h.b16 %v4001
        %v4368 = vunpack.c.l.b16 %v4002
        %v4369 = vunpack.c.h.b16 %v4002
        %v4370 = vunpack.c.l.b16 %v4003
        %v4371 = vunpack.c.h.b16 %v4003
        %v4372 = vunpack.c.l.b16 %v4004
        %v4373 = vunpack.c.h.b16 %v4004
        %v4374 = vunpack.c.l.b16 %v4005
        %v4375 = vunpack.c.h.b16 %v4005
        %v4376 = vunpack.c.l.b16 %v4006
        %v4377 = vunpack.c.h.b16 %v4006
        %v4378 = vunpack.c.l.b16 %v4007
        %v4379 = vunpack.c.h.b16 %v4007
        %v4380 = vunpack.c.l.b16 %v4008
        %v4381 = vunpack.c.h.b16 %v4008
        %v4382 = vunpack.c.l.b16 %v4009
        %v4383 = vunpack.c.h.b16 %v4009
        %v4384 = vunpack.c.l.b16 %v4010
        %v4385 = vunpack.c.h.b16 %v4010
        %v4386 = vunpack.c.l.b16 %v4011
        %v4387 = vunpack.c.h.b16 %v4011
        %v4388 = vunpack.c.l.b16 %v4012
        %v4389 = vunpack.c.h.b16 %v4012
        %v4390 = vunpack.c.l.b16 %v4013
        %v4391 = vunpack.c.h.b16 %v4013
        %v4392 = vunpack.c.l.b16 %v4014
        %v4393 = vunpack.c.h.b16 %v4014
        %v4394 = vunpack.c.l.b16 %v4015
        %v4395 = vunpack.c.h.b16 %v4015
        %v4396 = vunpack.c.l.b16 %v4016
        %v4397 = vunpack.c.h.b16 %v4016
        %v4398 = vunpack.c.l.b16 %v4017
        %v4399 = vunpack.c.h.b16 %v4017
        %v4400 = vunpack.c.l.b16 %v4018
        %v4401 = vunpack.c.h.b16 %v4018
        %v4402 = vunpack.c.l.b16 %v4019
        %v4403 = vunpack.c.h.b16 %v4019
        %v4404 = vpack.c.b16 %v4150, %v4148
        %v4405 = vpack.c.b16 %v4151, %v4149
        %v4406 = vpack.c.b16 %v4154, %v4152
        %v4407 = vpack.c.b16 %v4155, %v4153
        %v4408 = vpack.c.b16 %v4158, %v4156
        %v4409 = vpack.c.b16 %v4159, %v4157
        %v4410 = vpack.c.b16 %v4162, %v4160
        %v4411 = vpack.c.b16 %v4163, %v4161
        %v4412 = vpack.c.b16 %v4166, %v4164
        %v4413 = vpack.c.b16 %v4167, %v4165
        %v4414 = vpack.c.b16 %v4170, %v4168
        %v4415 = vpack.c.b16 %v4171, %v4169
        %v4416 = vpack.c.b16 %v4174, %v4172
        %v4417 = vpack.c.b16 %v4175, %v4173
        %v4418 = vpack.c.b16 %v4178, %v4176
        %v4419 = vpack.c.b16 %v4179, %v4177
        %v4420 = vpack.c.b16 %v4182, %v4180
        %v4421 = vpack.c.b16 %v4183, %v4181
        %v4422 = vpack.c.b16 %v4186, %v4184
        %v4423 = vpack.c.b16 %v4187, %v4185
        %v4424 = vpack.c.b16 %v4190, %v4188
        %v4425 = vpack.c.b16 %v4191, %v4189
        %v4426 = vpack.c.b16 %v4194, %v4192
        %v4427 = vpack.c.b16 %v4195, %v4193
        %v4428 = vpack.c.b16 %v4198, %v4196
        %v4429 = vpack.c.b16 %v4199, %v4197
        %v4430 = vpack.c.b16 %v4202, %v4200
        %v4431 = vpack.c.b16 %v4203, %v4201
        %v4432 = vpack.c.b16 %v4206, %v4204
        %v4433 = vpack.c.b16 %v4207, %v4205
        %v4434 = vpack.c.b16 %v4210, %v4208
        %v4435 = vpack.c.b16 %v4211, %v4209
        %v4436 = vpack.c.b16 %v4214, %v4212
        %v4437 = vpack.c.b16 %v4215, %v4213
        %v4438 = vpack.c.b16 %v4218, %v4216
        %v4439 = vpack.c.b16 %v4219, %v4217
        %v4440 = vpack.c.b16 %v4222, %v4220
        %v4441 = vpack.c.b16 %v4223, %v4221
        %v4442 = vpack.c.b16 %v4226, %v4224
        %v4443 = vpack.c.b16 %v4227, %v4225
        %v4444 = vpack.c.b16 %v4230, %v4228
        %v4445 = vpack.c.b16 %v4231, %v4229
        %v4446 = vpack.c.b16 %v4234, %v4232
        %v4447 = vpack.c.b16 %v4235, %v4233
        %v4448 = vpack.c.b16 %v4238, %v4236
        %v4449 = vpack.c.b16 %v4239, %v4237
        %v4450 = vpack.c.b16 %v4242, %v4240
        %v4451 = vpack.c.b16 %v4243, %v4241
        %v4452 = vpack.c.b16 %v4246, %v4244
        %v4453 = vpack.c.b16 %v4247, %v4245
        %v4454 = vpack.c.b16 %v4250, %v4248
        %v4455 = vpack.c.b16 %v4251, %v4249
        %v4456 = vpack.c.b16 %v4254, %v4252
        %v4457 = vpack.c.b16 %v4255, %v4253
        %v4458 = vpack.c.b16 %v4258, %v4256
        %v4459 = vpack.c.b16 %v4259, %v4257
        %v4460 = vpack.c.b16 %v4262, %v4260
        %v4461 = vpack.c.b16 %v4263, %v4261
        %v4462 = vpack.c.b16 %v4266, %v4264
        %v4463 = vpack.c.b16 %v4267, %v4265
        %v4464 = vpack.c.b16 %v4270, %v4268
        %v4465 = vpack.c.b16 %v4271, %v4269
        %v4466 = vpack.c.b16 %v4274, %v4272
        %v4467 = vpack.c.b16 %v4275, %v4273
        %v4468 = vpack.c.b16 %v4278, %v4276
        %v4469 = vpack.c.b16 %v4279, %v4277
        %v4470 = vpack.c.b16 %v4282, %v4280
        %v4471 = vpack.c.b16 %v4283, %v4281
        %v4472 = vpack.c.b16 %v4286, %v4284
        %v4473 = vpack.c.b16 %v4287, %v4285
        %v4474 = vpack.c.b16 %v4290, %v4288
        %v4475 = vpack.c.b16 %v4291, %v4289
        %v4476 = vpack.c.b16 %v4294, %v4292
        %v4477 = vpack.c.b16 %v4295, %v4293
        %v4478 = vpack.c.b16 %v4298, %v4296
        %v4479 = vpack.c.b16 %v4299, %v4297
        %v4480 = vpack.c.b16 %v4302, %v4300
        %v4481 = vpack.c.b16 %v4303, %v4301
        %v4482 = vpack.c.b16 %v4306, %v4304
        %v4483 = vpack.c.b16 %v4307, %v4305
        %v4484 = vpack.c.b16 %v4310, %v4308
        %v4485 = vpack.c.b16 %v4311, %v4309
        %v4486 = vpack.c.b16 %v4314, %v4312
        %v4487 = vpack.c.b16 %v4315, %v4313
        %v4488 = vpack.c.b16 %v4318, %v4316
        %v4489 = vpack.c.b16 %v4319, %v4317
        %v4490 = vpack.c.b16 %v4322, %v4320
        %v4491 = vpack.c.b16 %v4323, %v4321
        %v4492 = vpack.c.b16 %v4326, %v4324
        %v4493 = vpack.c.b16 %v4327, %v4325
        %v4494 = vpack.c.b16 %v4330, %v4328
        %v4495 = vpack.c.b16 %v4331, %v4329
        %v4496 = vpack.c.b16 %v4334, %v4332
        %v4497 = vpack.c.b16 %v4335, %v4333
        %v4498 = vpack.c.b16 %v4338, %v4336
        %v4499 = vpack.c.b16 %v4339, %v4337
        %v4500 = vpack.c.b16 %v4342, %v4340
        %v4501 = vpack.c.b16 %v4343, %v4341
        %v4502 = vpack.c.b16 %v4346, %v4344
        %v4503 = vpack.c.b16 %v4347, %v4345
        %v4504 = vpack.c.b16 %v4350, %v4348
        %v4505 = vpack.c.b16 %v4351, %v4349
        %v4506 = vpack.c.b16 %v4354, %v4352
        %v4507 = vpack.c.b16 %v4355, %v4353
        %v4508 = vpack.c.b16 %v4358, %v4356
        %v4509 = vpack.c.b16 %v4359, %v4357
        %v4510 = vpack.c.b16 %v4362, %v4360
        %v4511 = vpack.c.b16 %v4363, %v4361
        %v4512 = vpack.c.b16 %v4366, %v4364
        %v4513 = vpack.c.b16 %v4367, %v4365
        %v4514 = vpack.c.b16 %v4370, %v4368
        %v4515 = vpack.c.b16 %v4371, %v4369
        %v4516 = vpack.c.b16 %v4374, %v4372
        %v4517 = vpack.c.b16 %v4375, %v4373
        %v4518 = vpack.c.b16 %v4378, %v4376
        %v4519 = vpack.c.b16 %v4379, %v4377
        %v4520 = vpack.c.b16 %v4382, %v4380
        %v4521 = vpack.c.b16 %v4383, %v4381
        %v4522 = vpack.c.b16 %v4386, %v4384
        %v4523 = vpack.c.b16 %v4387, %v4385
        %v4524 = vpack.c.b16 %v4390, %v4388
        %v4525 = vpack.c.b16 %v4391, %v4389
        %v4526 = vpack.c.b16 %v4394, %v4392
        %v4527 = vpack.c.b16 %v4395, %v4393
        %v4528 = vpack.c.b16 %v4398, %v4396
        %v4529 = vpack.c.b16 %v4399, %v4397
        %v4530 = vpack.c.b16 %v4402, %v4400
        %v4531 = vpack.c.b16 %v4403, %v4401
        %4660 = vmatprep.subr.bf16.mxu0 %v4405
        %4661 = vmatpush1.bf16.msra.mxu0 %v4404
        %4662 = vmatprep.subr.bf16.mxu0 %v4407
        %4663 = vmatpush1.bf16.msra.mxu0 %v4406
        %4664 = vmatprep.subr.bf16.mxu0 %v4409
        %4665 = vmatpush1.bf16.msra.mxu0 %v4408
        %4666 = vmatprep.subr.bf16.mxu0 %v4411
        %4667 = vmatpush1.bf16.msra.mxu0 %v4410
        %4668 = vmatprep.subr.bf16.mxu0 %v4413
        %4669 = vmatpush1.bf16.msra.mxu0 %v4412
        %4670 = vmatprep.subr.bf16.mxu0 %v4415
        %4671 = vmatpush1.bf16.msra.mxu0 %v4414
        %4672 = vmatprep.subr.bf16.mxu0 %v4417
        %4673 = vmatpush1.bf16.msra.mxu0 %v4416
        %4674 = vmatprep.subr.bf16.mxu0 %v4419
        %4675 = vmatpush1.bf16.msra.mxu0 %v4418
        %4676 = vmatprep.subr.bf16.mxu0 %v4421
        %4677 = vmatpush1.bf16.msra.mxu0 %v4420
        %4678 = vmatprep.subr.bf16.mxu0 %v4423
        %4679 = vmatpush1.bf16.msra.mxu0 %v4422
        %4680 = vmatprep.subr.bf16.mxu0 %v4425
        %4681 = vmatpush1.bf16.msra.mxu0 %v4424
        %4682 = vmatprep.subr.bf16.mxu0 %v4427
        %4683 = vmatpush1.bf16.msra.mxu0 %v4426
        %4684 = vmatprep.subr.bf16.mxu0 %v4429
        %4685 = vmatpush1.bf16.msra.mxu0 %v4428
        %4686 = vmatprep.subr.bf16.mxu0 %v4431
        %4687 = vmatpush1.bf16.msra.mxu0 %v4430
        %4688 = vmatprep.subr.bf16.mxu0 %v4433
        %4689 = vmatpush1.bf16.msra.mxu0 %v4432
        %4690 = vmatprep.subr.bf16.mxu0 %v4435
        %4691 = vmatpush1.bf16.msra.mxu0 %v4434
        %4692 = vmatprep.mubr.bf16.mxu0 %v3885
        %4693 = vmatmul.mubr.bf16.gmra.mrb[0].mxu0 %v3884
        %v4694 = vpop.f32.mrb[0].mxu0
        %v4695 = vadd.f32 0.0, %v4694
        %v4696 = vpop.f32.mrb[0].mxu0
        %v4697 = vadd.f32 0.0, %v4696
        %v4698 = vpop.f32.mrb[0].mxu0
        %v4699 = vadd.f32 0.0, %v4698
        %v4700 = vpop.f32.mrb[0].mxu0
        %v4701 = vadd.f32 0.0, %v4700
        %4702 = vdwg.mxu0
        %4703 = vmatprep.subr.bf16.mxu0 %v4437
        %4704 = vmatpush1.bf16.msra.mxu0 %v4436
        %4705 = vmatprep.subr.bf16.mxu0 %v4439
        %4706 = vmatpush1.bf16.msra.mxu0 %v4438
        %4707 = vmatprep.subr.bf16.mxu0 %v4441
        %4708 = vmatpush1.bf16.msra.mxu0 %v4440
        %4709 = vmatprep.subr.bf16.mxu0 %v4443
        %4710 = vmatpush1.bf16.msra.mxu0 %v4442
        %4711 = vmatprep.subr.bf16.mxu0 %v4445
        %4712 = vmatpush1.bf16.msra.mxu0 %v4444
        %4713 = vmatprep.subr.bf16.mxu0 %v4447
        %4714 = vmatpush1.bf16.msra.mxu0 %v4446
        %4715 = vmatprep.subr.bf16.mxu0 %v4449
        %4716 = vmatpush1.bf16.msra.mxu0 %v4448
        %4717 = vmatprep.subr.bf16.mxu0 %v4451
        %4718 = vmatpush1.bf16.msra.mxu0 %v4450
        %4719 = vmatprep.subr.bf16.mxu0 %v4453
        %4720 = vmatpush1.bf16.msra.mxu0 %v4452
        %4721 = vmatprep.subr.bf16.mxu0 %v4455
        %4722 = vmatpush1.bf16.msra.mxu0 %v4454
        %4723 = vmatprep.subr.bf16.mxu0 %v4457
        %4724 = vmatpush1.bf16.msra.mxu0 %v4456
        %4725 = vmatprep.subr.bf16.mxu0 %v4459
        %4726 = vmatpush1.bf16.msra.mxu0 %v4458
        %4727 = vmatprep.subr.bf16.mxu0 %v4461
        %4728 = vmatpush1.bf16.msra.mxu0 %v4460
        %4729 = vmatprep.subr.bf16.mxu0 %v4463
        %4730 = vmatpush1.bf16.msra.mxu0 %v4462
        %4731 = vmatprep.subr.bf16.mxu0 %v4465
        %4732 = vmatpush1.bf16.msra.mxu0 %v4464
        %4733 = vmatprep.subr.bf16.mxu0 %v4467
        %4734 = vmatpush1.bf16.msra.mxu0 %v4466
        %4735 = vmatprep.mubr.bf16.mxu0 %v3887
        %4736 = vmatmul.mubr.bf16.gmra.mrb[0].mxu0 %v3886
        %v4737 = vpop.f32.mrb[0].mxu0
        %v4738 = vadd.f32 %v4695, %v4737
        %v4739 = vpop.f32.mrb[0].mxu0
        %v4740 = vadd.f32 %v4697, %v4739
        %v4741 = vpop.f32.mrb[0].mxu0
        %v4742 = vadd.f32 %v4699, %v4741
        %v4743 = vpop.f32.mrb[0].mxu0
        %v4744 = vadd.f32 %v4701, %v4743
        %4745 = vdwg.mxu0
        %4746 = vmatprep.subr.bf16.mxu0 %v4469
        %4747 = vmatpush1.bf16.msra.mxu0 %v4468
        %4748 = vmatprep.subr.bf16.mxu0 %v4471
        %4749 = vmatpush1.bf16.msra.mxu0 %v4470
        %4750 = vmatprep.subr.bf16.mxu0 %v4473
        %4751 = vmatpush1.bf16.msra.mxu0 %v4472
        %4752 = vmatprep.subr.bf16.mxu0 %v4475
        %4753 = vmatpush1.bf16.msra.mxu0 %v4474
        %4754 = vmatprep.subr.bf16.mxu0 %v4477
        %4755 = vmatpush1.bf16.msra.mxu0 %v4476
        %4756 = vmatprep.subr.bf16.mxu0 %v4479
        %4757 = vmatpush1.bf16.msra.mxu0 %v4478
        %4758 = vmatprep.subr.bf16.mxu0 %v4481
        %4759 = vmatpush1.bf16.msra.mxu0 %v4480
        %4760 = vmatprep.subr.bf16.mxu0 %v4483
        %4761 = vmatpush1.bf16.msra.mxu0 %v4482
        %4762 = vmatprep.subr.bf16.mxu0 %v4485
        %4763 = vmatpush1.bf16.msra.mxu0 %v4484
        %4764 = vmatprep.subr.bf16.mxu0 %v4487
        %4765 = vmatpush1.bf16.msra.mxu0 %v4486
        %4766 = vmatprep.subr.bf16.mxu0 %v4489
        %4767 = vmatpush1.bf16.msra.mxu0 %v4488
        %4768 = vmatprep.subr.bf16.mxu0 %v4491
        %4769 = vmatpush1.bf16.msra.mxu0 %v4490
        %4770 = vmatprep.subr.bf16.mxu0 %v4493
        %4771 = vmatpush1.bf16.msra.mxu0 %v4492
        %4772 = vmatprep.subr.bf16.mxu0 %v4495
        %4773 = vmatpush1.bf16.msra.mxu0 %v4494
        %4774 = vmatprep.subr.bf16.mxu0 %v4497
        %4775 = vmatpush1.bf16.msra.mxu0 %v4496
        %4776 = vmatprep.subr.bf16.mxu0 %v4499
        %4777 = vmatpush1.bf16.msra.mxu0 %v4498
        %4778 = vmatprep.mubr.bf16.mxu0 %v3889
        %4779 = vmatmul.mubr.bf16.gmra.mrb[0].mxu0 %v3888
        %v4780 = vpop.f32.mrb[0].mxu0
        %v4781 = vadd.f32 %v4738, %v4780
        %v4782 = vpop.f32.mrb[0].mxu0
        %v4783 = vadd.f32 %v4740, %v4782
        %v4784 = vpop.f32.mrb[0].mxu0
        %v4785 = vadd.f32 %v4742, %v4784
        %v4786 = vpop.f32.mrb[0].mxu0
        %v4787 = vadd.f32 %v4744, %v4786
        %4788 = vdwg.mxu0
        %4789 = vmatprep.subr.bf16.mxu0 %v4501
        %4790 = vmatpush1.bf16.msra.mxu0 %v4500
        %4791 = vmatprep.subr.bf16.mxu0 %v4503
        %4792 = vmatpush1.bf16.msra.mxu0 %v4502
        %4793 = vmatprep.subr.bf16.mxu0 %v4505
        %4794 = vmatpush1.bf16.msra.mxu0 %v4504
        %4795 = vmatprep.subr.bf16.mxu0 %v4507
        %4796 = vmatpush1.bf16.msra.mxu0 %v4506
        %4797 = vmatprep.subr.bf16.mxu0 %v4509
        %4798 = vmatpush1.bf16.msra.mxu0 %v4508
        %4799 = vmatprep.subr.bf16.mxu0 %v4511
        %4800 = vmatpush1.bf16.msra.mxu0 %v4510
        %4801 = vmatprep.subr.bf16.mxu0 %v4513
        %4802 = vmatpush1.bf16.msra.mxu0 %v4512
        %4803 = vmatprep.subr.bf16.mxu0 %v4515
        %4804 = vmatpush1.bf16.msra.mxu0 %v4514
        %4805 = vmatprep.subr.bf16.mxu0 %v4517
        %4806 = vmatpush1.bf16.msra.mxu0 %v4516
        %4807 = vmatprep.subr.bf16.mxu0 %v4519
        %4808 = vmatpush1.bf16.msra.mxu0 %v4518
        %4809 = vmatprep.subr.bf16.mxu0 %v4521
        %4810 = vmatpush1.bf16.msra.mxu0 %v4520
        %4811 = vmatprep.subr.bf16.mxu0 %v4523
        %4812 = vmatpush1.bf16.msra.mxu0 %v4522
        %4813 = vmatprep.subr.bf16.mxu0 %v4525
        %4814 = vmatpush1.bf16.msra.mxu0 %v4524
        %4815 = vmatprep.subr.bf16.mxu0 %v4527
        %4816 = vmatpush1.bf16.msra.mxu0 %v4526
        %4817 = vmatprep.subr.bf16.mxu0 %v4529
        %4818 = vmatpush1.bf16.msra.mxu0 %v4528
        %4819 = vmatprep.subr.bf16.mxu0 %v4531
        %4820 = vmatpush1.bf16.msra.mxu0 %v4530
        %4821 = vmatprep.mubr.bf16.mxu0 %v3891
        %4822 = vmatmul.mubr.bf16.gmra.mrb[0].mxu0 %v3890
        %v4823 = vpop.f32.mrb[0].mxu0
        %v4824 = vadd.f32 %v4781, %v4823
        %v4825 = vpop.f32.mrb[0].mxu0
        %v4826 = vadd.f32 %v4783, %v4825
        %v4827 = vpop.f32.mrb[0].mxu0
        %v4828 = vadd.f32 %v4785, %v4827
        %v4829 = vpop.f32.mrb[0].mxu0
        %v4830 = vadd.f32 %v4787, %v4829
        %4831 = vdwg.mxu0
        %v4832 = vadd.f32 %v2400, %v4824
        %v4833 = vadd.f32 %v2401, %v4826
        %v4834 = vadd.f32 %v2402, %v4828
        %v4835 = vadd.f32 %v2403, %v4830
        %v4836 = vld [vmem:[%s20] sm:$0x3]
        %v4838 = vlaneseq
        %v4839 = vshrl.u32 %v4838, 7
        %v4840 = vsub.s32 0, %v4839
        %v4841 = vrot.slane %v4836, %v4840
        %v4842 = vlaneseq
        %v4843 = vshrl.u32 %v4842, 7
        %v4844 = vsub.s32 1, %v4843
        %v4845 = vrot.slane %v4836, %v4844
        %v4848 = vadd.f32 %v4832, %v4841
        %v4849 = vadd.f32 %v4833, %v4845
        %v4850 = vadd.f32 %v4834, %v4841
        %v4851 = vadd.f32 %v4835, %v4845
        %4852 = vst [vmem:[%s706] sm:$0xff] %v4848
        %4853 = vst [vmem:[%s706 + $0x8] sm:$0xff] %v4849
        %4854 = vst [vmem:[%s706 + $0x10] sm:$0xff] %v4850
        %4855 = vst [vmem:[%s706 + $0x18] sm:$0xff] %v4851
        %s4856 = sand.u32 %s515, 1
        %s4857 = scalar_lea.sflag [#allocation4], %s4856
        %s4858 = sand.u32 %s515, 1
        %s4859 = smul.addr %s4858, 32
        %s4860 = scalar_lea.vmem [#allocation3], %s4859
        // Predicated region
        $region105: #{_decoder_block_impl.1} parent=103 // pred_check
          %p4861 = pneg %p525
        $region106: #{_decoder_block_impl.1} parent=103 // pred_check_branch
          %4863 = sbr.rel (%p4861) target = $region108
        $region107: #{_decoder_block_impl.1} parent=103 // pred_region
          %s4864 = smul.u32 2, %s40
          %s4866 = ssub.s32 512, 512
          %4867 = vsyncadd %s4857, %s4866
          %s4868 = smul.addr %s4864, 2
          %s4869 = smul.addr %s39, 4
          %s4870 = sadd.s32 %s4868, %s4869
          %s4871 = smul.addr %s4870, 128
          %s4872 = scalar_lea.hbm %s21, %s4871
          %s4873 = sshll.u32 %s4860, 4
          %s4874 = int_to_ptr.vmem [resolvable:$true] %s4873
          %4879 = dma.vmem_to_hbm [thread:$0]  %s4874, 512, %s4872, %s4857, 256, 256, 16
        $region108: #{_decoder_block_impl.1} parent=103 // pred_fallthru
          _
      $region104: #{_decoder_block_impl.1} parent=5 // pred_fallthru
        _
      %p4880 = scmp.le.s32.totalorder 2, %s30
      // Predicated region
      $region109: #{_decoder_block_impl.1} parent=5 // pred_check
        %p4881 = pneg %p4880
      $region110: #{_decoder_block_impl.1} parent=5 // pred_check_branch
        %4883 = sbr.rel (%p4881) target = $region112
      $region111: #{_decoder_block_impl.1} parent=5 // pred_region
        %s4884 = ssub.s32 %s30, 2
        // Predicated region
        $region113: #{_decoder_block_impl.1} parent=111 // pred_check
          %p4885 = pneg %p531
        $region114: #{_decoder_block_impl.1} parent=111 // pred_check_branch
          %4887 = sbr.rel (%p4885) target = $region116
        $region115: #{_decoder_block_impl.1} parent=111 // pred_region
          %s4888 = sand.u32 %s516, 1
          %s4889 = scalar_lea.sflag [#allocation4], %s4888
          %s4890 = sand.u32 %s516, 1
          %s4891 = smul.addr %s4890, 32
          %s4892 = scalar_lea.vmem [#allocation3], %s4891
          %4893 = dma.done %s4889, 512
        $region116: #{_decoder_block_impl.1} parent=111 // pred_fallthru
          _
      $region112: #{_decoder_block_impl.1} parent=5 // pred_fallthru
        _
    $region6: #{_decoder_block_impl.1} parent=1 // loop_footer
      %s34 = sadd.s32 1, %s30
    $region7: #{_decoder_block_impl.1} parent=1 // loop_footer_branch
      %29 = sbr.rel target = $region3
    $region8: #{_decoder_block_impl.1} parent=1 // loop_exit
      _
    %4894 = vsyncpa [#allocation4], 1
    %s4895 = scalar_lea.sflag [#allocation4], 1
    %4896 = vsyncpa %s4895, 1

</llo_original>
